<compile_context>
chip_gen: v7x
topology: tpu7x:2x2x1
jax: 0.10.0
libtpu: 0.0.40
codegen_flags: <defaults>
</compile_context>

<pallas_src>
import functools

import jax
import jax.numpy as jnp
from jax.experimental import pallas as pl
from jax.experimental.pallas import tpu as pltpu

PATCH = 32          # encoder output stride / upsample factor of the FOMO head
ENC_CH = 512        # encoder output channels (head expects in_channels=512)
CP = 128            # classes padded up to one lane-width for dense stores


def _round_up(x, m):
    return ((x + m - 1) // m) * m


def fomo_kernel(patch_ref, enc_w_ref, enc_b_ref, head_w_ref, head_b_ref, out_ref):
    # stand-in encoder: linear stride-32 patch embedding  [TM, P] @ [P, 512]  (f32 accumulate)
    feat = jnp.dot(patch_ref[...], enc_w_ref[...],
                   preferred_element_type=jnp.float32) + enc_b_ref[...]       # (TM, 512) f32
    # FOMO head: 1x1 conv == per-pixel channel matmul (+ bias)
    y = jnp.dot(feat.astype(head_w_ref.dtype), head_w_ref[...],
                preferred_element_type=jnp.float32) + head_b_ref[...]         # (TM, CP) f32
    out_ref[...] = y.astype(out_ref.dtype)                                    # bf16 writeback


@functools.partial(jax.jit, static_argnames=("classes", "tm"))
def fomo_forward(x_nchw, enc_w, enc_b, head_w_pad, head_b_pad, *, classes, tm=512):
    B, C_in, H, W = x_nchw.shape
    h, w = H // PATCH, W // PATCH
    M = B * h * w
    P = C_in * PATCH * PATCH

    # ---- tile sizing: clamp to problem, keep 16-multiple, keep >=2 grid steps for v7x megacore
    tm = max(16, (min(tm, _round_up(M, 16)) // 16) * 16)
    if M >= 4 * 256:
        tm = min(tm, max(256, _round_up(pl.cdiv(M, 4), 16)))   # prefer >=4 steps
    elif M >= 2 * 128:
        tm = min(tm, max(128, _round_up(pl.cdiv(M, 2), 16)))   # at least 2 steps
    M_pad = pl.cdiv(M, tm) * tm
    n_steps = M_pad // tm
    patch_depth = 3 if n_steps >= 3 else 2                     # deeper patch pipeline when useful

    # ---- glue: NCHW image -> flattened stride-32 patches [M_pad, P] (bf16) ----
    x_nhwc = jnp.transpose(x_nchw, (0, 2, 3, 1))                              # [B,H,W,C]
    patches = (x_nhwc.reshape(B, h, PATCH, w, PATCH, C_in)
                     .transpose(0, 1, 3, 2, 4, 5)
                     .reshape(M, P)).astype(jnp.bfloat16)
    if M_pad != M:
        patches = jnp.pad(patches, ((0, M_pad - M), (0, 0)))                  # zero tail rows

    enc_w_bf = enc_w.astype(jnp.bfloat16)
    head_w_bf = head_w_pad.astype(jnp.bfloat16)

    cost = pl.CostEstimate(
        flops=2 * M_pad * (P * ENC_CH + ENC_CH * CP),
        transcendentals=0,
        bytes_accessed=(M_pad * P * 2                       # patches (bf16)
                        + P * ENC_CH * 2 + ENC_CH * CP * 2  # weights (bf16)
                        + (ENC_CH + CP) * 4                 # biases (f32)
                        + M_pad * CP * 2),                  # output (bf16)
    )

    out_pad = pl.pallas_call(
        fomo_kernel,
        out_shape=jax.ShapeDtypeStruct((M_pad, CP), jnp.bfloat16),
        grid_spec=pltpu.PrefetchScalarGridSpec(
            num_scalar_prefetch=0,
            grid=(n_steps,),
            in_specs=[
                # streamed patch rows: deeper pipelining to hide the per-step DMA
                pl.BlockSpec((tm, P), lambda m: (m, 0),
                             pipeline_mode=pl.Buffered(patch_depth)),
                # resident operands: block never changes -> single buffer (reclaims VMEM)
                pl.BlockSpec((P, ENC_CH), lambda m: (0, 0),
                             pipeline_mode=pl.Buffered(1)),
                pl.BlockSpec((1, ENC_CH), lambda m: (0, 0),
                             pipeline_mode=pl.Buffered(1)),
                pl.BlockSpec((ENC_CH, CP), lambda m: (0, 0),
                             pipeline_mode=pl.Buffered(1)),
                pl.BlockSpec((1, CP), lambda m: (0, 0),
                             pipeline_mode=pl.Buffered(1)),
            ],
            out_specs=pl.BlockSpec((tm, CP), lambda m: (m, 0)),  # only unique logits, bf16
        ),
        compiler_params=pltpu.CompilerParams(
            dimension_semantics=("parallel",),
            vmem_limit_bytes=32 * 1024 * 1024,
        ),
        cost_estimate=cost,
    )(patches, enc_w_bf, enc_b, head_w_bf, head_b_pad)

    # ---- glue: [M_pad, CP] bf16 -> slice real rows/classes -> NCHW -> nearest-upsample x32 (bf16)
    y = out_pad[:M, :classes]                                                 # [M, classes] bf16
    y = y.reshape(B, h, w, classes).transpose(0, 3, 1, 2)                     # [B, classes, h, w]
    y = jnp.broadcast_to(y[:, :, :, None, :, None],
                         (B, classes, h, PATCH, w, PATCH)).reshape(B, classes, H, W)
    return y


def ref_forward(x_nchw, enc_w, enc_b, head_w_pad, head_b_pad, classes):
    # Pure-JAX reference using the SAME bf16-cast operands / bf16 logits the kernel produces.
    B, C_in, H, W = x_nchw.shape
    h, w = H // PATCH, W // PATCH
    x_nhwc = jnp.transpose(x_nchw, (0, 2, 3, 1))
    patches = (x_nhwc.reshape(B, h, PATCH, w, PATCH, C_in)
                     .transpose(0, 1, 3, 2, 4, 5)
                     .reshape(B * h * w, C_in * PATCH * PATCH))
    patches = patches.astype(jnp.bfloat16).astype(jnp.float32)
    ew = enc_w.astype(jnp.bfloat16).astype(jnp.float32)
    hw = head_w_pad.astype(jnp.bfloat16).astype(jnp.float32)
    feat = patches @ ew + enc_b                                               # [M, 512]
    feat = feat.astype(jnp.bfloat16).astype(jnp.float32)
    y = feat @ hw[:, :classes] + head_b_pad[:, :classes]                      # [M, classes]
    y = y.astype(jnp.bfloat16)                                                # kernel emits bf16
    y = y.reshape(B, h, w, classes)
    up = jnp.repeat(jnp.repeat(y, PATCH, axis=1), PATCH, axis=2)              # nearest x32
    return jnp.transpose(up, (0, 3, 1, 2))


if __name__ == "__main__":
    # B=5 -> M = 5*2*2 = 20 feature pixels; tm=16 gives a 2-step grid with a padded tail,
    # exercising the blocked matmul path while keeping shapes small.
    B, C_in, H, W = 5, 3, 64, 64
    classes = 4
    P = C_in * PATCH * PATCH

    key = jax.random.PRNGKey(0)
    k_x, k_ew, k_eb, k_hw, k_hb = jax.random.split(key, 5)

    x = jax.random.normal(k_x, (B, C_in, H, W), dtype=jnp.float32)

    # deterministic parameter init (shapes implied by the module __init__)
    enc_w = jax.random.normal(k_ew, (P, ENC_CH), dtype=jnp.float32) * 0.02
    enc_b = jax.random.normal(k_eb, (1, ENC_CH), dtype=jnp.float32) * 0.02
    head_w = jax.random.normal(k_hw, (ENC_CH, classes), dtype=jnp.float32) * 0.05
    head_b = jax.random.normal(k_hb, (classes,), dtype=jnp.float32) * 0.05

    # pad class dim to one lane (128) for dense stores; extra columns are zero and sliced off
    head_w_pad = jnp.zeros((ENC_CH, CP), jnp.float32).at[:, :classes].set(head_w)
    head_b_pad = jnp.zeros((1, CP), jnp.float32).at[0, :classes].set(head_b)

    out = fomo_forward(x, enc_w, enc_b, head_w_pad, head_b_pad, classes=classes, tm=16)
    out = jax.block_until_ready(out)

    ref = ref_forward(x, enc_w, enc_b, head_w_pad, head_b_pad, classes)
    assert out.shape == (B, classes, H, W), out.shape
    assert out.dtype == jnp.bfloat16, out.dtype

    o32 = out.astype(jnp.float32)
    r32 = ref.astype(jnp.float32)
    max_err = float(jnp.max(jnp.abs(o32 - r32)))
    assert jnp.allclose(o32, r32, atol=2e-2, rtol=2e-2), max_err

    print("KERNEL_OK")
</pallas_src>

<mosaic_0001>
module attributes {stable_mosaic.version = 11 : i64} {
  func.func @fomo_kernel(%arg0: i32, %arg1: memref<16x3072xbf16, #tpu.memory_space<vmem>>, %arg2: memref<3072x512xbf16, #tpu.memory_space<vmem>>, %arg3: memref<1x512xf32, #tpu.memory_space<vmem>>, %arg4: memref<512x128xbf16, #tpu.memory_space<vmem>>, %arg5: memref<1x128xf32, #tpu.memory_space<vmem>>, %arg6: memref<16x128xbf16, #tpu.memory_space<vmem>>) attributes {dimension_semantics = [#tpu.dimension_semantics<parallel>], iteration_bounds = array<i64: 2>, scalar_prefetch = 0 : i64, scratch_operands = 0 : i64, tpu.core_type = #tpu.core_type<tc>, window_params = [{pipeline_mode = #tpu.pipeline_mode<double_buffered>, transform_indices = @transform_0, window_bounds = array<i64: 16, 3072>}, {pipeline_mode = #tpu.pipeline_mode<synchronous>, transform_indices = @transform_1, window_bounds = array<i64: 3072, 512>}, {pipeline_mode = #tpu.pipeline_mode<synchronous>, transform_indices = @transform_2, window_bounds = array<i64: 1, 512>}, {pipeline_mode = #tpu.pipeline_mode<synchronous>, transform_indices = @transform_3, window_bounds = array<i64: 512, 128>}, {pipeline_mode = #tpu.pipeline_mode<synchronous>, transform_indices = @transform_4, window_bounds = array<i64: 1, 128>}, {transform_indices = @transform_5, window_bounds = array<i64: 16, 128>}]} {
    %c0 = arith.constant 0 : index
    %c0_0 = arith.constant 0 : index
    %0 = vector.load %arg1[%c0, %c0_0] : memref<16x3072xbf16, #tpu.memory_space<vmem>>, vector<16x3072xbf16>
    %c0_1 = arith.constant 0 : index
    %c0_2 = arith.constant 0 : index
    %1 = vector.load %arg2[%c0_1, %c0_2] : memref<3072x512xbf16, #tpu.memory_space<vmem>>, vector<3072x512xbf16>
    %cst = arith.constant dense<0.000000e+00> : vector<16x512xf32>
    %2 = tpu.matmul %0, %1, %cst {dimension_numbers = #tpu.dot_dimension_numbers<[1], [0], [0], [1], [0, 0, 1, 1], [], []>} : vector<16x3072xbf16>, vector<3072x512xbf16>, vector<16x512xf32> -> vector<16x512xf32>
    %c0_3 = arith.constant 0 : index
    %c0_4 = arith.constant 0 : index
    %3 = vector.load %arg3[%c0_3, %c0_4] : memref<1x512xf32, #tpu.memory_space<vmem>>, vector<1x512xf32>
    %4 = vector.broadcast %3 : vector<1x512xf32> to vector<16x512xf32>
    %5 = arith.addf %2, %4 : vector<16x512xf32>
    %6 = arith.truncf %5 : vector<16x512xf32> to vector<16x512xbf16>
    %c0_5 = arith.constant 0 : index
    %c0_6 = arith.constant 0 : index
    %7 = vector.load %arg4[%c0_5, %c0_6] : memref<512x128xbf16, #tpu.memory_space<vmem>>, vector<512x128xbf16>
    %cst_7 = arith.constant dense<0.000000e+00> : vector<16x128xf32>
    %8 = tpu.matmul %6, %7, %cst_7 {dimension_numbers = #tpu.dot_dimension_numbers<[1], [0], [0], [1], [0, 0, 1, 1], [], []>} : vector<16x512xbf16>, vector<512x128xbf16>, vector<16x128xf32> -> vector<16x128xf32>
    %c0_8 = arith.constant 0 : index
    %c0_9 = arith.constant 0 : index
    %9 = vector.load %arg5[%c0_8, %c0_9] : memref<1x128xf32, #tpu.memory_space<vmem>>, vector<1x128xf32>
    %10 = vector.broadcast %9 : vector<1x128xf32> to vector<16x128xf32>
    %11 = arith.addf %8, %10 : vector<16x128xf32>
    %12 = arith.truncf %11 : vector<16x128xf32> to vector<16x128xbf16>
    %c0_10 = arith.constant 0 : index
    %c0_11 = arith.constant 0 : index
    %13 = vector.load %arg6[%c0_10, %c0_11] : memref<16x128xbf16, #tpu.memory_space<vmem>>, vector<16x128xbf16>
    tpu.vector_store %arg6[%c0_10, %c0_11], %12 {strides = array<i32>} : memref<16x128xbf16, #tpu.memory_space<vmem>>, vector<16x128xbf16>,
    return
  }
  func.func @transform_0(%arg0: i32) -> (i32, i32) {
    %c0_i32 = arith.constant 0 : i32
    %c0_i32_0 = arith.constant 0 : i32
    return %arg0, %c0_i32 : i32, i32
  }
  func.func @transform_1(%arg0: i32) -> (i32, i32) {
    %c0_i32 = arith.constant 0 : i32
    %c0_i32_0 = arith.constant 0 : i32
    %c0_i32_1 = arith.constant 0 : i32
    return %c0_i32, %c0_i32_0 : i32, i32
  }
  func.func @transform_2(%arg0: i32) -> (i32, i32) {
    %c0_i32 = arith.constant 0 : i32
    %c0_i32_0 = arith.constant 0 : i32
    %c0_i32_1 = arith.constant 0 : i32
    return %c0_i32, %c0_i32_0 : i32, i32
  }
  func.func @transform_3(%arg0: i32) -> (i32, i32) {
    %c0_i32 = arith.constant 0 : i32
    %c0_i32_0 = arith.constant 0 : i32
    %c0_i32_1 = arith.constant 0 : i32
    return %c0_i32, %c0_i32_0 : i32, i32
  }
  func.func @transform_4(%arg0: i32) -> (i32, i32) {
    %c0_i32 = arith.constant 0 : i32
    %c0_i32_0 = arith.constant 0 : i32
    %c0_i32_1 = arith.constant 0 : i32
    return %c0_i32, %c0_i32_0 : i32, i32
  }
  func.func @transform_5(%arg0: i32) -> (i32, i32) {
    %c0_i32 = arith.constant 0 : i32
    %c0_i32_0 = arith.constant 0 : i32
    return %arg0, %c0_i32 : i32, i32
  }
}

</mosaic_0001>

<llo_original>
// kernel: fomo_forward.1
$region0: #{fomo_forward.1}
  #allocation0 [shape = 'u32[]', space=smem, size = 0x4, offset = 0x4, fixed_abs, tag = 'smem constant byte address 0x4 - core index']
  #allocation1 [shape = 'u32[144,128]{1,0:T(1,128)}', space=vmem, size = 0x12000, scoped, tag = 'internal scratch']
  %s0 = inlined_call_operand.vmem [shape: bf16[32,3072], index: 0, kind: input, shape index: {}]
  %s1 = inlined_call_operand.vmem [shape: bf16[3072,512], index: 1, kind: input, shape index: {}]
  %s2 = inlined_call_operand.vmem [shape: f32[1,512], index: 2, kind: input, shape index: {}]
  %s3 = inlined_call_operand.vmem [shape: bf16[512,128], index: 3, kind: input, shape index: {}]
  %s4 = inlined_call_operand.vmem [shape: f32[1,128], index: 4, kind: input, shape index: {}]
  %s5 = inlined_call_operand.vmem [shape: bf16[32,128], index: 5, kind: output, shape index: {}]
  %s6 = sld [smem:[#allocation0]]
  $region53: #{fomo_forward.1} parent=0
    _
  %s8 = ssub.s32 1, %s6
  %s9 = scalar_select 0, %s8, %s6
  loop: start=0, step=1, limit=4
  $region2: #{fomo_forward.1} parent=0 // loop_pre_header
    _
  $region3: #{fomo_forward.1} parent=0 // loop_header
    %s11 = sphi 0, %s15
    %p12 = scmp.ge.s32.totalorder %s11, 4
    %s21 = sphi 0, %s23
    %s24 = sphi 0, %s21
    %s25 = sphi 0, %s24
    %s41 = sphi 0, %s25
    %s45 = sphi 0, %s45
    %s47 = sphi 0, %s45
    %s48 = sphi 0, %s47
    %s62 = sphi 0, %s48
    %s66 = sphi 0, %s66
    %s68 = sphi 0, %s66
    %s69 = sphi 0, %s68
    %s83 = sphi 0, %s69
    %s87 = sphi 0, %s87
    %s89 = sphi 0, %s87
    %s90 = sphi 0, %s89
    %s104 = sphi 0, %s90
    %s108 = sphi 0, %s108
    %s110 = sphi 0, %s108
    %s111 = sphi 0, %s110
    %s125 = sphi 0, %s111
    %s131 = sphi 0, %s133
    %s134 = sphi 0, %s131
    %s135 = sphi 0, %s134
    %s151 = sphi 0, %s135
  $region4: #{fomo_forward.1} parent=0 // loop_header_branch
    %14 = sbr.rel (%p12) target = $region8
  $region5: #{fomo_forward.1} parent=0 // loop_body
    %s16 = ssub.s32 %s11, 1
    %s17 = ssub.s32 %s11, 2
    %s18 = sadd.s32 %s11, 1
    %s19 = ssub.s32 %s11, %s18
    %p20 = scmp.eq.s32.totalorder %s19, 0
    %s22 = sadd.s32 %s21, 1
    %s23 = scalar_select %p20, %s21, %s22
    %p26 = pneg %p20
    %p27 = scmp.eq.s32.totalorder %s11, 1
    %p28 = por %p26, %p27
    %p29 = scmp.ne.s32.totalorder %s21, %s24
    %p30 = scmp.eq.s32.totalorder %s11, 0
    %p31 = por %p29, %p30
    %p32 = scmp.ne.s32.totalorder %s21, %s24
    %p33 = scmp.eq.s32.totalorder %s16, 1
    %p34 = por %p32, %p33
    %p35 = scmp.ne.s32.totalorder %s24, %s25
    %p36 = scmp.eq.s32.totalorder %s16, 0
    %p37 = por %p35, %p36
    %p38 = scmp.ne.s32.totalorder %s24, %s25
    %p39 = scmp.eq.s32.totalorder %s17, 1
    %p40 = por %p38, %p39
    %p42 = scmp.ne.s32.totalorder %s25, %s41
    %p43 = scmp.eq.s32.totalorder %s17, 0
    %p44 = por %p42, %p43
    %s46 = sadd.s32 %s45, 1
    %p49 = scmp.eq.s32.totalorder %s11, 1
    %p50 = scmp.ne.s32.totalorder %s45, %s47
    %p51 = scmp.eq.s32.totalorder %s11, 0
    %p52 = por %p50, %p51
    %p53 = scmp.ne.s32.totalorder %s45, %s47
    %p54 = scmp.eq.s32.totalorder %s16, 1
    %p55 = por %p53, %p54
    %p56 = scmp.ne.s32.totalorder %s47, %s48
    %p57 = scmp.eq.s32.totalorder %s16, 0
    %p58 = por %p56, %p57
    %p59 = scmp.ne.s32.totalorder %s47, %s48
    %p60 = scmp.eq.s32.totalorder %s17, 1
    %p61 = por %p59, %p60
    %p63 = scmp.ne.s32.totalorder %s48, %s62
    %p64 = scmp.eq.s32.totalorder %s17, 0
    %p65 = por %p63, %p64
    %s67 = sadd.s32 %s66, 1
    %p70 = scmp.eq.s32.totalorder %s11, 1
    %p71 = scmp.ne.s32.totalorder %s66, %s68
    %p72 = scmp.eq.s32.totalorder %s11, 0
    %p73 = por %p71, %p72
    %p74 = scmp.ne.s32.totalorder %s66, %s68
    %p75 = scmp.eq.s32.totalorder %s16, 1
    %p76 = por %p74, %p75
    %p77 = scmp.ne.s32.totalorder %s68, %s69
    %p78 = scmp.eq.s32.totalorder %s16, 0
    %p79 = por %p77, %p78
    %p80 = scmp.ne.s32.totalorder %s68, %s69
    %p81 = scmp.eq.s32.totalorder %s17, 1
    %p82 = por %p80, %p81
    %p84 = scmp.ne.s32.totalorder %s69, %s83
    %p85 = scmp.eq.s32.totalorder %s17, 0
    %p86 = por %p84, %p85
    %s88 = sadd.s32 %s87, 1
    %p91 = scmp.eq.s32.totalorder %s11, 1
    %p92 = scmp.ne.s32.totalorder %s87, %s89
    %p93 = scmp.eq.s32.totalorder %s11, 0
    %p94 = por %p92, %p93
    %p95 = scmp.ne.s32.totalorder %s87, %s89
    %p96 = scmp.eq.s32.totalorder %s16, 1
    %p97 = por %p95, %p96
    %p98 = scmp.ne.s32.totalorder %s89, %s90
    %p99 = scmp.eq.s32.totalorder %s16, 0
    %p100 = por %p98, %p99
    %p101 = scmp.ne.s32.totalorder %s89, %s90
    %p102 = scmp.eq.s32.totalorder %s17, 1
    %p103 = por %p101, %p102
    %p105 = scmp.ne.s32.totalorder %s90, %s104
    %p106 = scmp.eq.s32.totalorder %s17, 0
    %p107 = por %p105, %p106
    %s109 = sadd.s32 %s108, 1
    %p112 = scmp.eq.s32.totalorder %s11, 1
    %p113 = scmp.ne.s32.totalorder %s108, %s110
    %p114 = scmp.eq.s32.totalorder %s11, 0
    %p115 = por %p113, %p114
    %p116 = scmp.ne.s32.totalorder %s108, %s110
    %p117 = scmp.eq.s32.totalorder %s16, 1
    %p118 = por %p116, %p117
    %p119 = scmp.ne.s32.totalorder %s110, %s111
    %p120 = scmp.eq.s32.totalorder %s16, 0
    %p121 = por %p119, %p120
    %p122 = scmp.ne.s32.totalorder %s110, %s111
    %p123 = scmp.eq.s32.totalorder %s17, 1
    %p124 = por %p122, %p123
    %p126 = scmp.ne.s32.totalorder %s111, %s125
    %p127 = scmp.eq.s32.totalorder %s17, 0
    %p128 = por %p126, %p127
    %s129 = ssub.s32 %s11, %s18
    %p130 = scmp.eq.s32.totalorder %s129, 0
    %s132 = sadd.s32 %s131, 1
    %s133 = scalar_select %p130, %s131, %s132
    %p136 = pneg %p130
    %p137 = scmp.eq.s32.totalorder %s11, 1
    %p138 = por %p136, %p137
    %p139 = scmp.ne.s32.totalorder %s131, %s134
    %p140 = scmp.eq.s32.totalorder %s11, 0
    %p141 = por %p139, %p140
    %p142 = scmp.ne.s32.totalorder %s131, %s134
    %p143 = scmp.eq.s32.totalorder %s16, 1
    %p144 = por %p142, %p143
    %p145 = scmp.ne.s32.totalorder %s134, %s135
    %p146 = scmp.eq.s32.totalorder %s16, 0
    %p147 = por %p145, %p146
    %p148 = scmp.ne.s32.totalorder %s134, %s135
    %p149 = scmp.eq.s32.totalorder %s17, 1
    %p150 = por %p148, %p149
    %p152 = scmp.ne.s32.totalorder %s135, %s151
    %p153 = scmp.eq.s32.totalorder %s17, 0
    %p154 = por %p152, %p153
    %p155 = scmp.le.s32.totalorder 1, %s11
    %p156 = scmp.lt.s32.totalorder %s11, 3
    %p157 = pnand %p155, %p156
    %p158 = pneg %p157
    // Predicated region
    $region9: #{fomo_forward.1} parent=5 // pred_check
      _
    $region10: #{fomo_forward.1} parent=5 // pred_check_branch
      %160 = sbr.rel (%p157) target = $region12
    $region11: #{fomo_forward.1} parent=5 // pred_region
      %s161 = ssub.s32 %s11, 1
      // Predicated region
      $region13: #{fomo_forward.1} parent=11 // pred_check
        %p162 = pneg %p58
      $region14: #{fomo_forward.1} parent=11 // pred_check_branch
        %164 = sbr.rel (%p162) target = $region16
      $region15: #{fomo_forward.1} parent=11 // pred_region
        _
      $region16: #{fomo_forward.1} parent=11 // pred_fallthru
        _
      // Predicated region
      $region17: #{fomo_forward.1} parent=11 // pred_check
        %p165 = pneg %p79
      $region18: #{fomo_forward.1} parent=11 // pred_check_branch
        %167 = sbr.rel (%p165) target = $region20
      $region19: #{fomo_forward.1} parent=11 // pred_region
        _
      $region20: #{fomo_forward.1} parent=11 // pred_fallthru
        _
      // Predicated region
      $region21: #{fomo_forward.1} parent=11 // pred_check
        %p168 = pneg %p100
      $region22: #{fomo_forward.1} parent=11 // pred_check_branch
        %170 = sbr.rel (%p168) target = $region24
      $region23: #{fomo_forward.1} parent=11 // pred_region
        _
      $region24: #{fomo_forward.1} parent=11 // pred_fallthru
        _
      // Predicated region
      $region25: #{fomo_forward.1} parent=11 // pred_check
        %p171 = pneg %p121
      $region26: #{fomo_forward.1} parent=11 // pred_check_branch
        %173 = sbr.rel (%p171) target = $region28
      $region27: #{fomo_forward.1} parent=11 // pred_region
        _
      $region28: #{fomo_forward.1} parent=11 // pred_fallthru
        _
    $region12: #{fomo_forward.1} parent=5 // pred_fallthru
      _
    %p174 = scmp.lt.s32.totalorder %s11, 2
    // Predicated region
    $region29: #{fomo_forward.1} parent=5 // pred_check
      %p175 = pneg %p174
    $region30: #{fomo_forward.1} parent=5 // pred_check_branch
      %177 = sbr.rel (%p175) target = $region32
    $region31: #{fomo_forward.1} parent=5 // pred_region
      // Predicated region
      $region33: #{fomo_forward.1} parent=31 // pred_check
        %p178 = pneg %p31
      $region34: #{fomo_forward.1} parent=31 // pred_check_branch
        %180 = sbr.rel (%p178) target = $region36
      $region35: #{fomo_forward.1} parent=31 // pred_region
        %s181 = smul.u32 2, %s11
        %p182 = scmp.lt.s32.totalorder %s181, 3
        %s183 = scalar_select %p182, %s181, 3
        %s184 = smul.addr %s183, 24
        %s185 = smul.addr %s184, 4
        %s186 = scalar_lea.vmem %s0, %s185
        %s187 = smul.u32 2, %s11
      $region36: #{fomo_forward.1} parent=31 // pred_fallthru
        _
    $region32: #{fomo_forward.1} parent=5 // pred_fallthru
      _
    %p188 = scmp.le.s32.totalorder 1, %s11
    %p189 = scmp.lt.s32.totalorder %s11, 3
    %p190 = pnand %p188, %p189
    %p191 = pneg %p190
    // Predicated region
    $region37: #{fomo_forward.1} parent=5 // pred_check
      _
    $region38: #{fomo_forward.1} parent=5 // pred_check_branch
      %193 = sbr.rel (%p190) target = $region40
    $region39: #{fomo_forward.1} parent=5 // pred_region
      %s194 = ssub.s32 %s11, 1
      %s195 = smul.u32 2, %s16
      %p196 = scmp.lt.s32.totalorder %s195, 3
      %s197 = scalar_select %p196, %s195, 3
      %s198 = smul.addr %s197, 24
      %s199 = smul.addr %s198, 4
      %s200 = scalar_lea.vmem %s0, %s199
      %p201 = pneg %p37
      %p202 = pneg %p34
      %p203 = pneg %p58
      %p204 = pneg %p55
      %p205 = pneg %p79
      %p206 = pneg %p76
      %p207 = pneg %p100
      %p208 = pneg %p97
      %p209 = pneg %p121
      %p210 = pneg %p118
      %p211 = pneg %p147
      %p212 = pneg %p144
      %s213 = smul.u32 2, %s16
      %p214 = scmp.lt.s32.totalorder %s213, 3
      %s215 = scalar_select %p214, %s213, 3
      %s216 = smul.addr %s215, 4
      %s217 = scalar_lea.vmem %s5, %s216
      %s218 = smul.u32 2, %s16
      %p219 = scmp.lt.s32.totalorder %s218, 3
      %s220 = scalar_select %p219, %s218, 3
      %s221 = smul.addr %s220, 24
      %s222 = smul.addr %s221, 4
      %s223 = scalar_lea.vmem %s0, %s222
      %s224 = smul.u32 2, %s16
      %s225 = smul.u32 2, %s16
      %p226 = scmp.lt.s32.totalorder %s225, 3
      %s227 = scalar_select %p226, %s225, 3
      %s228 = smul.addr %s227, 4
      %s229 = scalar_lea.vmem %s5, %s228
      %s230 = smul.u32 2, %s16
      %v232 = vld [vmem:[%s223] sm:$0xff]
      %v233 = vld [vmem:[%s223 + $0x8] sm:$0xff]
      %v234 = vld [vmem:[%s223 + $0x10] sm:$0xff]
      %v235 = vld [vmem:[%s223 + $0x18] sm:$0xff]
      %v236 = vld [vmem:[%s223 + $0x20] sm:$0xff]
      %v237 = vld [vmem:[%s223 + $0x28] sm:$0xff]
      %v238 = vld [vmem:[%s223 + $0x30] sm:$0xff]
      %v239 = vld [vmem:[%s223 + $0x38] sm:$0xff]
      %v240 = vld [vmem:[%s223 + $0x40] sm:$0xff]
      %v241 = vld [vmem:[%s223 + $0x48] sm:$0xff]
      %v242 = vld [vmem:[%s223 + $0x50] sm:$0xff]
      %v243 = vld [vmem:[%s223 + $0x58] sm:$0xff]
      %v244 = vld [vmem:[%s223 + $0x60] sm:$0xff]
      %v245 = vld [vmem:[%s223 + $0x68] sm:$0xff]
      %v246 = vld [vmem:[%s223 + $0x70] sm:$0xff]
      %v247 = vld [vmem:[%s223 + $0x78] sm:$0xff]
      %v248 = vld [vmem:[%s223 + $0x80] sm:$0xff]
      %v249 = vld [vmem:[%s223 + $0x88] sm:$0xff]
      %v250 = vld [vmem:[%s223 + $0x90] sm:$0xff]
      %v251 = vld [vmem:[%s223 + $0x98] sm:$0xff]
      %v252 = vld [vmem:[%s223 + $0xa0] sm:$0xff]
      %v253 = vld [vmem:[%s223 + $0xa8] sm:$0xff]
      %v254 = vld [vmem:[%s223 + $0xb0] sm:$0xff]
      %v255 = vld [vmem:[%s223 + $0xb8] sm:$0xff]
      %v256 = vld [vmem:[%s1] sm:$0xff]
      %v257 = vld [vmem:[%s1 + $0x8] sm:$0xff]
      %v258 = vld [vmem:[%s1 + $0x10] sm:$0xff]
      %v259 = vld [vmem:[%s1 + $0x18] sm:$0xff]
      %v260 = vld [vmem:[%s1 + $0x20] sm:$0xff]
      %v261 = vld [vmem:[%s1 + $0x28] sm:$0xff]
      %v262 = vld [vmem:[%s1 + $0x30] sm:$0xff]
      %v263 = vld [vmem:[%s1 + $0x38] sm:$0xff]
      %v264 = vld [vmem:[%s1 + $0x40] sm:$0xff]
      %v265 = vld [vmem:[%s1 + $0x48] sm:$0xff]
      %v266 = vld [vmem:[%s1 + $0x50] sm:$0xff]
      %v267 = vld [vmem:[%s1 + $0x58] sm:$0xff]
      %v268 = vld [vmem:[%s1 + $0x60] sm:$0xff]
      %v269 = vld [vmem:[%s1 + $0x68] sm:$0xff]
      %v270 = vld [vmem:[%s1 + $0x70] sm:$0xff]
      %v271 = vld [vmem:[%s1 + $0x78] sm:$0xff]
      %v272 = vld [vmem:[%s1 + $0x80] sm:$0xff]
      %v273 = vld [vmem:[%s1 + $0x88] sm:$0xff]
      %v274 = vld [vmem:[%s1 + $0x90] sm:$0xff]
      %v275 = vld [vmem:[%s1 + $0x98] sm:$0xff]
      %v276 = vld [vmem:[%s1 + $0xa0] sm:$0xff]
      %v277 = vld [vmem:[%s1 + $0xa8] sm:$0xff]
      %v278 = vld [vmem:[%s1 + $0xb0] sm:$0xff]
      %v279 = vld [vmem:[%s1 + $0xb8] sm:$0xff]
      %v280 = vld [vmem:[%s1 + $0xc0] sm:$0xff]
      %v281 = vld [vmem:[%s1 + $0xc8] sm:$0xff]
      %v282 = vld [vmem:[%s1 + $0xd0] sm:$0xff]
      %v283 = vld [vmem:[%s1 + $0xd8] sm:$0xff]
      %v284 = vld [vmem:[%s1 + $0xe0] sm:$0xff]
      %v285 = vld [vmem:[%s1 + $0xe8] sm:$0xff]
      %v286 = vld [vmem:[%s1 + $0xf0] sm:$0xff]
      %v287 = vld [vmem:[%s1 + $0xf8] sm:$0xff]
      %v288 = vld [vmem:[%s1 + $0x100] sm:$0xff]
      %v289 = vld [vmem:[%s1 + $0x108] sm:$0xff]
      %v290 = vld [vmem:[%s1 + $0x110] sm:$0xff]
      %v291 = vld [vmem:[%s1 + $0x118] sm:$0xff]
      %v292 = vld [vmem:[%s1 + $0x120] sm:$0xff]
      %v293 = vld [vmem:[%s1 + $0x128] sm:$0xff]
      %v294 = vld [vmem:[%s1 + $0x130] sm:$0xff]
      %v295 = vld [vmem:[%s1 + $0x138] sm:$0xff]
      %v296 = vld [vmem:[%s1 + $0x140] sm:$0xff]
      %v297 = vld [vmem:[%s1 + $0x148] sm:$0xff]
      %v298 = vld [vmem:[%s1 + $0x150] sm:$0xff]
      %v299 = vld [vmem:[%s1 + $0x158] sm:$0xff]
      %v300 = vld [vmem:[%s1 + $0x160] sm:$0xff]
      %v301 = vld [vmem:[%s1 + $0x168] sm:$0xff]
      %v302 = vld [vmem:[%s1 + $0x170] sm:$0xff]
      %v303 = vld [vmem:[%s1 + $0x178] sm:$0xff]
      %v304 = vld [vmem:[%s1 + $0x180] sm:$0xff]
      %v305 = vld [vmem:[%s1 + $0x188] sm:$0xff]
      %v306 = vld [vmem:[%s1 + $0x190] sm:$0xff]
      %v307 = vld [vmem:[%s1 + $0x198] sm:$0xff]
      %v308 = vld [vmem:[%s1 + $0x1a0] sm:$0xff]
      %v309 = vld [vmem:[%s1 + $0x1a8] sm:$0xff]
      %v310 = vld [vmem:[%s1 + $0x1b0] sm:$0xff]
      %v311 = vld [vmem:[%s1 + $0x1b8] sm:$0xff]
      %v312 = vld [vmem:[%s1 + $0x1c0] sm:$0xff]
      %v313 = vld [vmem:[%s1 + $0x1c8] sm:$0xff]
      %v314 = vld [vmem:[%s1 + $0x1d0] sm:$0xff]
      %v315 = vld [vmem:[%s1 + $0x1d8] sm:$0xff]
      %v316 = vld [vmem:[%s1 + $0x1e0] sm:$0xff]
      %v317 = vld [vmem:[%s1 + $0x1e8] sm:$0xff]
      %v318 = vld [vmem:[%s1 + $0x1f0] sm:$0xff]
      %v319 = vld [vmem:[%s1 + $0x1f8] sm:$0xff]
      %v320 = vld [vmem:[%s1 + $0x200] sm:$0xff]
      %v321 = vld [vmem:[%s1 + $0x208] sm:$0xff]
      %v322 = vld [vmem:[%s1 + $0x210] sm:$0xff]
      %v323 = vld [vmem:[%s1 + $0x218] sm:$0xff]
      %v324 = vld [vmem:[%s1 + $0x220] sm:$0xff]
      %v325 = vld [vmem:[%s1 + $0x228] sm:$0xff]
      %v326 = vld [vmem:[%s1 + $0x230] sm:$0xff]
      %v327 = vld [vmem:[%s1 + $0x238] sm:$0xff]
      %v328 = vld [vmem:[%s1 + $0x240] sm:$0xff]
      %v329 = vld [vmem:[%s1 + $0x248] sm:$0xff]
      %v330 = vld [vmem:[%s1 + $0x250] sm:$0xff]
      %v331 = vld [vmem:[%s1 + $0x258] sm:$0xff]
      %v332 = vld [vmem:[%s1 + $0x260] sm:$0xff]
      %v333 = vld [vmem:[%s1 + $0x268] sm:$0xff]
      %v334 = vld [vmem:[%s1 + $0x270] sm:$0xff]
      %v335 = vld [vmem:[%s1 + $0x278] sm:$0xff]
      %v336 = vld [vmem:[%s1 + $0x280] sm:$0xff]
      %v337 = vld [vmem:[%s1 + $0x288] sm:$0xff]
      %v338 = vld [vmem:[%s1 + $0x290] sm:$0xff]
      %v339 = vld [vmem:[%s1 + $0x298] sm:$0xff]
      %v340 = vld [vmem:[%s1 + $0x2a0] sm:$0xff]
      %v341 = vld [vmem:[%s1 + $0x2a8] sm:$0xff]
      %v342 = vld [vmem:[%s1 + $0x2b0] sm:$0xff]
      %v343 = vld [vmem:[%s1 + $0x2b8] sm:$0xff]
      %v344 = vld [vmem:[%s1 + $0x2c0] sm:$0xff]
      %v345 = vld [vmem:[%s1 + $0x2c8] sm:$0xff]
      %v346 = vld [vmem:[%s1 + $0x2d0] sm:$0xff]
      %v347 = vld [vmem:[%s1 + $0x2d8] sm:$0xff]
      %v348 = vld [vmem:[%s1 + $0x2e0] sm:$0xff]
      %v349 = vld [vmem:[%s1 + $0x2e8] sm:$0xff]
      %v350 = vld [vmem:[%s1 + $0x2f0] sm:$0xff]
      %v351 = vld [vmem:[%s1 + $0x2f8] sm:$0xff]
      %v352 = vld [vmem:[%s1 + $0x300] sm:$0xff]
      %v353 = vld [vmem:[%s1 + $0x308] sm:$0xff]
      %v354 = vld [vmem:[%s1 + $0x310] sm:$0xff]
      %v355 = vld [vmem:[%s1 + $0x318] sm:$0xff]
      %v356 = vld [vmem:[%s1 + $0x320] sm:$0xff]
      %v357 = vld [vmem:[%s1 + $0x328] sm:$0xff]
      %v358 = vld [vmem:[%s1 + $0x330] sm:$0xff]
      %v359 = vld [vmem:[%s1 + $0x338] sm:$0xff]
      %v360 = vld [vmem:[%s1 + $0x340] sm:$0xff]
      %v361 = vld [vmem:[%s1 + $0x348] sm:$0xff]
      %v362 = vld [vmem:[%s1 + $0x350] sm:$0xff]
      %v363 = vld [vmem:[%s1 + $0x358] sm:$0xff]
      %v364 = vld [vmem:[%s1 + $0x360] sm:$0xff]
      %v365 = vld [vmem:[%s1 + $0x368] sm:$0xff]
      %v366 = vld [vmem:[%s1 + $0x370] sm:$0xff]
      %v367 = vld [vmem:[%s1 + $0x378] sm:$0xff]
      %v368 = vld [vmem:[%s1 + $0x380] sm:$0xff]
      %v369 = vld [vmem:[%s1 + $0x388] sm:$0xff]
      %v370 = vld [vmem:[%s1 + $0x390] sm:$0xff]
      %v371 = vld [vmem:[%s1 + $0x398] sm:$0xff]
      %v372 = vld [vmem:[%s1 + $0x3a0] sm:$0xff]
      %v373 = vld [vmem:[%s1 + $0x3a8] sm:$0xff]
      %v374 = vld [vmem:[%s1 + $0x3b0] sm:$0xff]
      %v375 = vld [vmem:[%s1 + $0x3b8] sm:$0xff]
      %v376 = vld [vmem:[%s1 + $0x3c0] sm:$0xff]
      %v377 = vld [vmem:[%s1 + $0x3c8] sm:$0xff]
      %v378 = vld [vmem:[%s1 + $0x3d0] sm:$0xff]
      %v379 = vld [vmem:[%s1 + $0x3d8] sm:$0xff]
      %v380 = vld [vmem:[%s1 + $0x3e0] sm:$0xff]
      %v381 = vld [vmem:[%s1 + $0x3e8] sm:$0xff]
      %v382 = vld [vmem:[%s1 + $0x3f0] sm:$0xff]
      %v383 = vld [vmem:[%s1 + $0x3f8] sm:$0xff]
      %v384 = vld [vmem:[%s1 + $0x400] sm:$0xff]
      %v385 = vld [vmem:[%s1 + $0x408] sm:$0xff]
      %v386 = vld [vmem:[%s1 + $0x410] sm:$0xff]
      %v387 = vld [vmem:[%s1 + $0x418] sm:$0xff]
      %v388 = vld [vmem:[%s1 + $0x420] sm:$0xff]
      %v389 = vld [vmem:[%s1 + $0x428] sm:$0xff]
      %v390 = vld [vmem:[%s1 + $0x430] sm:$0xff]
      %v391 = vld [vmem:[%s1 + $0x438] sm:$0xff]
      %v392 = vld [vmem:[%s1 + $0x440] sm:$0xff]
      %v393 = vld [vmem:[%s1 + $0x448] sm:$0xff]
      %v394 = vld [vmem:[%s1 + $0x450] sm:$0xff]
      %v395 = vld [vmem:[%s1 + $0x458] sm:$0xff]
      %v396 = vld [vmem:[%s1 + $0x460] sm:$0xff]
      %v397 = vld [vmem:[%s1 + $0x468] sm:$0xff]
      %v398 = vld [vmem:[%s1 + $0x470] sm:$0xff]
      %v399 = vld [vmem:[%s1 + $0x478] sm:$0xff]
      %v400 = vld [vmem:[%s1 + $0x480] sm:$0xff]
      %v401 = vld [vmem:[%s1 + $0x488] sm:$0xff]
      %v402 = vld [vmem:[%s1 + $0x490] sm:$0xff]
      %v403 = vld [vmem:[%s1 + $0x498] sm:$0xff]
      %v404 = vld [vmem:[%s1 + $0x4a0] sm:$0xff]
      %v405 = vld [vmem:[%s1 + $0x4a8] sm:$0xff]
      %v406 = vld [vmem:[%s1 + $0x4b0] sm:$0xff]
      %v407 = vld [vmem:[%s1 + $0x4b8] sm:$0xff]
      %v408 = vld [vmem:[%s1 + $0x4c0] sm:$0xff]
      %v409 = vld [vmem:[%s1 + $0x4c8] sm:$0xff]
      %v410 = vld [vmem:[%s1 + $0x4d0] sm:$0xff]
      %v411 = vld [vmem:[%s1 + $0x4d8] sm:$0xff]
      %v412 = vld [vmem:[%s1 + $0x4e0] sm:$0xff]
      %v413 = vld [vmem:[%s1 + $0x4e8] sm:$0xff]
      %v414 = vld [vmem:[%s1 + $0x4f0] sm:$0xff]
      %v415 = vld [vmem:[%s1 + $0x4f8] sm:$0xff]
      %v416 = vld [vmem:[%s1 + $0x500] sm:$0xff]
      %v417 = vld [vmem:[%s1 + $0x508] sm:$0xff]
      %v418 = vld [vmem:[%s1 + $0x510] sm:$0xff]
      %v419 = vld [vmem:[%s1 + $0x518] sm:$0xff]
      %v420 = vld [vmem:[%s1 + $0x520] sm:$0xff]
      %v421 = vld [vmem:[%s1 + $0x528] sm:$0xff]
      %v422 = vld [vmem:[%s1 + $0x530] sm:$0xff]
      %v423 = vld [vmem:[%s1 + $0x538] sm:$0xff]
      %v424 = vld [vmem:[%s1 + $0x540] sm:$0xff]
      %v425 = vld [vmem:[%s1 + $0x548] sm:$0xff]
      %v426 = vld [vmem:[%s1 + $0x550] sm:$0xff]
      %v427 = vld [vmem:[%s1 + $0x558] sm:$0xff]
      %v428 = vld [vmem:[%s1 + $0x560] sm:$0xff]
      %v429 = vld [vmem:[%s1 + $0x568] sm:$0xff]
      %v430 = vld [vmem:[%s1 + $0x570] sm:$0xff]
      %v431 = vld [vmem:[%s1 + $0x578] sm:$0xff]
      %v432 = vld [vmem:[%s1 + $0x580] sm:$0xff]
      %v433 = vld [vmem:[%s1 + $0x588] sm:$0xff]
      %v434 = vld [vmem:[%s1 + $0x590] sm:$0xff]
      %v435 = vld [vmem:[%s1 + $0x598] sm:$0xff]
      %v436 = vld [vmem:[%s1 + $0x5a0] sm:$0xff]
      %v437 = vld [vmem:[%s1 + $0x5a8] sm:$0xff]
      %v438 = vld [vmem:[%s1 + $0x5b0] sm:$0xff]
      %v439 = vld [vmem:[%s1 + $0x5b8] sm:$0xff]
      %v440 = vld [vmem:[%s1 + $0x5c0] sm:$0xff]
      %v441 = vld [vmem:[%s1 + $0x5c8] sm:$0xff]
      %v442 = vld [vmem:[%s1 + $0x5d0] sm:$0xff]
      %v443 = vld [vmem:[%s1 + $0x5d8] sm:$0xff]
      %v444 = vld [vmem:[%s1 + $0x5e0] sm:$0xff]
      %v445 = vld [vmem:[%s1 + $0x5e8] sm:$0xff]
      %v446 = vld [vmem:[%s1 + $0x5f0] sm:$0xff]
      %v447 = vld [vmem:[%s1 + $0x5f8] sm:$0xff]
      %v448 = vld [vmem:[%s1 + $0x600] sm:$0xff]
      %v449 = vld [vmem:[%s1 + $0x608] sm:$0xff]
      %v450 = vld [vmem:[%s1 + $0x610] sm:$0xff]
      %v451 = vld [vmem:[%s1 + $0x618] sm:$0xff]
      %v452 = vld [vmem:[%s1 + $0x620] sm:$0xff]
      %v453 = vld [vmem:[%s1 + $0x628] sm:$0xff]
      %v454 = vld [vmem:[%s1 + $0x630] sm:$0xff]
      %v455 = vld [vmem:[%s1 + $0x638] sm:$0xff]
      %v456 = vld [vmem:[%s1 + $0x640] sm:$0xff]
      %v457 = vld [vmem:[%s1 + $0x648] sm:$0xff]
      %v458 = vld [vmem:[%s1 + $0x650] sm:$0xff]
      %v459 = vld [vmem:[%s1 + $0x658] sm:$0xff]
      %v460 = vld [vmem:[%s1 + $0x660] sm:$0xff]
      %v461 = vld [vmem:[%s1 + $0x668] sm:$0xff]
      %v462 = vld [vmem:[%s1 + $0x670] sm:$0xff]
      %v463 = vld [vmem:[%s1 + $0x678] sm:$0xff]
      %v464 = vld [vmem:[%s1 + $0x680] sm:$0xff]
      %v465 = vld [vmem:[%s1 + $0x688] sm:$0xff]
      %v466 = vld [vmem:[%s1 + $0x690] sm:$0xff]
      %v467 = vld [vmem:[%s1 + $0x698] sm:$0xff]
      %v468 = vld [vmem:[%s1 + $0x6a0] sm:$0xff]
      %v469 = vld [vmem:[%s1 + $0x6a8] sm:$0xff]
      %v470 = vld [vmem:[%s1 + $0x6b0] sm:$0xff]
      %v471 = vld [vmem:[%s1 + $0x6b8] sm:$0xff]
      %v472 = vld [vmem:[%s1 + $0x6c0] sm:$0xff]
      %v473 = vld [vmem:[%s1 + $0x6c8] sm:$0xff]
      %v474 = vld [vmem:[%s1 + $0x6d0] sm:$0xff]
      %v475 = vld [vmem:[%s1 + $0x6d8] sm:$0xff]
      %v476 = vld [vmem:[%s1 + $0x6e0] sm:$0xff]
      %v477 = vld [vmem:[%s1 + $0x6e8] sm:$0xff]
      %v478 = vld [vmem:[%s1 + $0x6f0] sm:$0xff]
      %v479 = vld [vmem:[%s1 + $0x6f8] sm:$0xff]
      %v480 = vld [vmem:[%s1 + $0x700] sm:$0xff]
      %v481 = vld [vmem:[%s1 + $0x708] sm:$0xff]
      %v482 = vld [vmem:[%s1 + $0x710] sm:$0xff]
      %v483 = vld [vmem:[%s1 + $0x718] sm:$0xff]
      %v484 = vld [vmem:[%s1 + $0x720] sm:$0xff]
      %v485 = vld [vmem:[%s1 + $0x728] sm:$0xff]
      %v486 = vld [vmem:[%s1 + $0x730] sm:$0xff]
      %v487 = vld [vmem:[%s1 + $0x738] sm:$0xff]
      %v488 = vld [vmem:[%s1 + $0x740] sm:$0xff]
      %v489 = vld [vmem:[%s1 + $0x748] sm:$0xff]
      %v490 = vld [vmem:[%s1 + $0x750] sm:$0xff]
      %v491 = vld [vmem:[%s1 + $0x758] sm:$0xff]
      %v492 = vld [vmem:[%s1 + $0x760] sm:$0xff]
      %v493 = vld [vmem:[%s1 + $0x768] sm:$0xff]
      %v494 = vld [vmem:[%s1 + $0x770] sm:$0xff]
      %v495 = vld [vmem:[%s1 + $0x778] sm:$0xff]
      %v496 = vld [vmem:[%s1 + $0x780] sm:$0xff]
      %v497 = vld [vmem:[%s1 + $0x788] sm:$0xff]
      %v498 = vld [vmem:[%s1 + $0x790] sm:$0xff]
      %v499 = vld [vmem:[%s1 + $0x798] sm:$0xff]
      %v500 = vld [vmem:[%s1 + $0x7a0] sm:$0xff]
      %v501 = vld [vmem:[%s1 + $0x7a8] sm:$0xff]
      %v502 = vld [vmem:[%s1 + $0x7b0] sm:$0xff]
      %v503 = vld [vmem:[%s1 + $0x7b8] sm:$0xff]
      %v504 = vld [vmem:[%s1 + $0x7c0] sm:$0xff]
      %v505 = vld [vmem:[%s1 + $0x7c8] sm:$0xff]
      %v506 = vld [vmem:[%s1 + $0x7d0] sm:$0xff]
      %v507 = vld [vmem:[%s1 + $0x7d8] sm:$0xff]
      %v508 = vld [vmem:[%s1 + $0x7e0] sm:$0xff]
      %v509 = vld [vmem:[%s1 + $0x7e8] sm:$0xff]
      %v510 = vld [vmem:[%s1 + $0x7f0] sm:$0xff]
      %v511 = vld [vmem:[%s1 + $0x7f8] sm:$0xff]
      %v512 = vld [vmem:[%s1 + $0x800] sm:$0xff]
      %v513 = vld [vmem:[%s1 + $0x808] sm:$0xff]
      %v514 = vld [vmem:[%s1 + $0x810] sm:$0xff]
      %v515 = vld [vmem:[%s1 + $0x818] sm:$0xff]
      %v516 = vld [vmem:[%s1 + $0x820] sm:$0xff]
      %v517 = vld [vmem:[%s1 + $0x828] sm:$0xff]
      %v518 = vld [vmem:[%s1 + $0x830] sm:$0xff]
      %v519 = vld [vmem:[%s1 + $0x838] sm:$0xff]
      %v520 = vld [vmem:[%s1 + $0x840] sm:$0xff]
      %v521 = vld [vmem:[%s1 + $0x848] sm:$0xff]
      %v522 = vld [vmem:[%s1 + $0x850] sm:$0xff]
      %v523 = vld [vmem:[%s1 + $0x858] sm:$0xff]
      %v524 = vld [vmem:[%s1 + $0x860] sm:$0xff]
      %v525 = vld [vmem:[%s1 + $0x868] sm:$0xff]
      %v526 = vld [vmem:[%s1 + $0x870] sm:$0xff]
      %v527 = vld [vmem:[%s1 + $0x878] sm:$0xff]
      %v528 = vld [vmem:[%s1 + $0x880] sm:$0xff]
      %v529 = vld [vmem:[%s1 + $0x888] sm:$0xff]
      %v530 = vld [vmem:[%s1 + $0x890] sm:$0xff]
      %v531 = vld [vmem:[%s1 + $0x898] sm:$0xff]
      %v532 = vld [vmem:[%s1 + $0x8a0] sm:$0xff]
      %v533 = vld [vmem:[%s1 + $0x8a8] sm:$0xff]
      %v534 = vld [vmem:[%s1 + $0x8b0] sm:$0xff]
      %v535 = vld [vmem:[%s1 + $0x8b8] sm:$0xff]
      %v536 = vld [vmem:[%s1 + $0x8c0] sm:$0xff]
      %v537 = vld [vmem:[%s1 + $0x8c8] sm:$0xff]
      %v538 = vld [vmem:[%s1 + $0x8d0] sm:$0xff]
      %v539 = vld [vmem:[%s1 + $0x8d8] sm:$0xff]
      %v540 = vld [vmem:[%s1 + $0x8e0] sm:$0xff]
      %v541 = vld [vmem:[%s1 + $0x8e8] sm:$0xff]
      %v542 = vld [vmem:[%s1 + $0x8f0] sm:$0xff]
      %v543 = vld [vmem:[%s1 + $0x8f8] sm:$0xff]
      %v544 = vld [vmem:[%s1 + $0x900] sm:$0xff]
      %v545 = vld [vmem:[%s1 + $0x908] sm:$0xff]
      %v546 = vld [vmem:[%s1 + $0x910] sm:$0xff]
      %v547 = vld [vmem:[%s1 + $0x918] sm:$0xff]
      %v548 = vld [vmem:[%s1 + $0x920] sm:$0xff]
      %v549 = vld [vmem:[%s1 + $0x928] sm:$0xff]
      %v550 = vld [vmem:[%s1 + $0x930] sm:$0xff]
      %v551 = vld [vmem:[%s1 + $0x938] sm:$0xff]
      %v552 = vld [vmem:[%s1 + $0x940] sm:$0xff]
      %v553 = vld [vmem:[%s1 + $0x948] sm:$0xff]
      %v554 = vld [vmem:[%s1 + $0x950] sm:$0xff]
      %v555 = vld [vmem:[%s1 + $0x958] sm:$0xff]
      %v556 = vld [vmem:[%s1 + $0x960] sm:$0xff]
      %v557 = vld [vmem:[%s1 + $0x968] sm:$0xff]
      %v558 = vld [vmem:[%s1 + $0x970] sm:$0xff]
      %v559 = vld [vmem:[%s1 + $0x978] sm:$0xff]
      %v560 = vld [vmem:[%s1 + $0x980] sm:$0xff]
      %v561 = vld [vmem:[%s1 + $0x988] sm:$0xff]
      %v562 = vld [vmem:[%s1 + $0x990] sm:$0xff]
      %v563 = vld [vmem:[%s1 + $0x998] sm:$0xff]
      %v564 = vld [vmem:[%s1 + $0x9a0] sm:$0xff]
      %v565 = vld [vmem:[%s1 + $0x9a8] sm:$0xff]
      %v566 = vld [vmem:[%s1 + $0x9b0] sm:$0xff]
      %v567 = vld [vmem:[%s1 + $0x9b8] sm:$0xff]
      %v568 = vld [vmem:[%s1 + $0x9c0] sm:$0xff]
      %v569 = vld [vmem:[%s1 + $0x9c8] sm:$0xff]
      %v570 = vld [vmem:[%s1 + $0x9d0] sm:$0xff]
      %v571 = vld [vmem:[%s1 + $0x9d8] sm:$0xff]
      %v572 = vld [vmem:[%s1 + $0x9e0] sm:$0xff]
      %v573 = vld [vmem:[%s1 + $0x9e8] sm:$0xff]
      %v574 = vld [vmem:[%s1 + $0x9f0] sm:$0xff]
      %v575 = vld [vmem:[%s1 + $0x9f8] sm:$0xff]
      %v576 = vld [vmem:[%s1 + $0xa00] sm:$0xff]
      %v577 = vld [vmem:[%s1 + $0xa08] sm:$0xff]
      %v578 = vld [vmem:[%s1 + $0xa10] sm:$0xff]
      %v579 = vld [vmem:[%s1 + $0xa18] sm:$0xff]
      %v580 = vld [vmem:[%s1 + $0xa20] sm:$0xff]
      %v581 = vld [vmem:[%s1 + $0xa28] sm:$0xff]
      %v582 = vld [vmem:[%s1 + $0xa30] sm:$0xff]
      %v583 = vld [vmem:[%s1 + $0xa38] sm:$0xff]
      %v584 = vld [vmem:[%s1 + $0xa40] sm:$0xff]
      %v585 = vld [vmem:[%s1 + $0xa48] sm:$0xff]
      %v586 = vld [vmem:[%s1 + $0xa50] sm:$0xff]
      %v587 = vld [vmem:[%s1 + $0xa58] sm:$0xff]
      %v588 = vld [vmem:[%s1 + $0xa60] sm:$0xff]
      %v589 = vld [vmem:[%s1 + $0xa68] sm:$0xff]
      %v590 = vld [vmem:[%s1 + $0xa70] sm:$0xff]
      %v591 = vld [vmem:[%s1 + $0xa78] sm:$0xff]
      %v592 = vld [vmem:[%s1 + $0xa80] sm:$0xff]
      %v593 = vld [vmem:[%s1 + $0xa88] sm:$0xff]
      %v594 = vld [vmem:[%s1 + $0xa90] sm:$0xff]
      %v595 = vld [vmem:[%s1 + $0xa98] sm:$0xff]
      %v596 = vld [vmem:[%s1 + $0xaa0] sm:$0xff]
      %v597 = vld [vmem:[%s1 + $0xaa8] sm:$0xff]
      %v598 = vld [vmem:[%s1 + $0xab0] sm:$0xff]
      %v599 = vld [vmem:[%s1 + $0xab8] sm:$0xff]
      %v600 = vld [vmem:[%s1 + $0xac0] sm:$0xff]
      %v601 = vld [vmem:[%s1 + $0xac8] sm:$0xff]
      %v602 = vld [vmem:[%s1 + $0xad0] sm:$0xff]
      %v603 = vld [vmem:[%s1 + $0xad8] sm:$0xff]
      %v604 = vld [vmem:[%s1 + $0xae0] sm:$0xff]
      %v605 = vld [vmem:[%s1 + $0xae8] sm:$0xff]
      %v606 = vld [vmem:[%s1 + $0xaf0] sm:$0xff]
      %v607 = vld [vmem:[%s1 + $0xaf8] sm:$0xff]
      %v608 = vld [vmem:[%s1 + $0xb00] sm:$0xff]
      %v609 = vld [vmem:[%s1 + $0xb08] sm:$0xff]
      %v610 = vld [vmem:[%s1 + $0xb10] sm:$0xff]
      %v611 = vld [vmem:[%s1 + $0xb18] sm:$0xff]
      %v612 = vld [vmem:[%s1 + $0xb20] sm:$0xff]
      %v613 = vld [vmem:[%s1 + $0xb28] sm:$0xff]
      %v614 = vld [vmem:[%s1 + $0xb30] sm:$0xff]
      %v615 = vld [vmem:[%s1 + $0xb38] sm:$0xff]
      %v616 = vld [vmem:[%s1 + $0xb40] sm:$0xff]
      %v617 = vld [vmem:[%s1 + $0xb48] sm:$0xff]
      %v618 = vld [vmem:[%s1 + $0xb50] sm:$0xff]
      %v619 = vld [vmem:[%s1 + $0xb58] sm:$0xff]
      %v620 = vld [vmem:[%s1 + $0xb60] sm:$0xff]
      %v621 = vld [vmem:[%s1 + $0xb68] sm:$0xff]
      %v622 = vld [vmem:[%s1 + $0xb70] sm:$0xff]
      %v623 = vld [vmem:[%s1 + $0xb78] sm:$0xff]
      %v624 = vld [vmem:[%s1 + $0xb80] sm:$0xff]
      %v625 = vld [vmem:[%s1 + $0xb88] sm:$0xff]
      %v626 = vld [vmem:[%s1 + $0xb90] sm:$0xff]
      %v627 = vld [vmem:[%s1 + $0xb98] sm:$0xff]
      %v628 = vld [vmem:[%s1 + $0xba0] sm:$0xff]
      %v629 = vld [vmem:[%s1 + $0xba8] sm:$0xff]
      %v630 = vld [vmem:[%s1 + $0xbb0] sm:$0xff]
      %v631 = vld [vmem:[%s1 + $0xbb8] sm:$0xff]
      %v632 = vld [vmem:[%s1 + $0xbc0] sm:$0xff]
      %v633 = vld [vmem:[%s1 + $0xbc8] sm:$0xff]
      %v634 = vld [vmem:[%s1 + $0xbd0] sm:$0xff]
      %v635 = vld [vmem:[%s1 + $0xbd8] sm:$0xff]
      %v636 = vld [vmem:[%s1 + $0xbe0] sm:$0xff]
      %v637 = vld [vmem:[%s1 + $0xbe8] sm:$0xff]
      %v638 = vld [vmem:[%s1 + $0xbf0] sm:$0xff]
      %v639 = vld [vmem:[%s1 + $0xbf8] sm:$0xff]
      %v640 = vld [vmem:[%s1 + $0xc00] sm:$0xff]
      %v641 = vld [vmem:[%s1 + $0xc08] sm:$0xff]
      %v642 = vld [vmem:[%s1 + $0xc10] sm:$0xff]
      %v643 = vld [vmem:[%s1 + $0xc18] sm:$0xff]
      %v644 = vld [vmem:[%s1 + $0xc20] sm:$0xff]
      %v645 = vld [vmem:[%s1 + $0xc28] sm:$0xff]
      %v646 = vld [vmem:[%s1 + $0xc30] sm:$0xff]
      %v647 = vld [vmem:[%s1 + $0xc38] sm:$0xff]
      %v648 = vld [vmem:[%s1 + $0xc40] sm:$0xff]
      %v649 = vld [vmem:[%s1 + $0xc48] sm:$0xff]
      %v650 = vld [vmem:[%s1 + $0xc50] sm:$0xff]
      %v651 = vld [vmem:[%s1 + $0xc58] sm:$0xff]
      %v652 = vld [vmem:[%s1 + $0xc60] sm:$0xff]
      %v653 = vld [vmem:[%s1 + $0xc68] sm:$0xff]
      %v654 = vld [vmem:[%s1 + $0xc70] sm:$0xff]
      %v655 = vld [vmem:[%s1 + $0xc78] sm:$0xff]
      %v656 = vld [vmem:[%s1 + $0xc80] sm:$0xff]
      %v657 = vld [vmem:[%s1 + $0xc88] sm:$0xff]
      %v658 = vld [vmem:[%s1 + $0xc90] sm:$0xff]
      %v659 = vld [vmem:[%s1 + $0xc98] sm:$0xff]
      %v660 = vld [vmem:[%s1 + $0xca0] sm:$0xff]
      %v661 = vld [vmem:[%s1 + $0xca8] sm:$0xff]
      %v662 = vld [vmem:[%s1 + $0xcb0] sm:$0xff]
      %v663 = vld [vmem:[%s1 + $0xcb8] sm:$0xff]
      %v664 = vld [vmem:[%s1 + $0xcc0] sm:$0xff]
      %v665 = vld [vmem:[%s1 + $0xcc8] sm:$0xff]
      %v666 = vld [vmem:[%s1 + $0xcd0] sm:$0xff]
      %v667 = vld [vmem:[%s1 + $0xcd8] sm:$0xff]
      %v668 = vld [vmem:[%s1 + $0xce0] sm:$0xff]
      %v669 = vld [vmem:[%s1 + $0xce8] sm:$0xff]
      %v670 = vld [vmem:[%s1 + $0xcf0] sm:$0xff]
      %v671 = vld [vmem:[%s1 + $0xcf8] sm:$0xff]
      %v672 = vld [vmem:[%s1 + $0xd00] sm:$0xff]
      %v673 = vld [vmem:[%s1 + $0xd08] sm:$0xff]
      %v674 = vld [vmem:[%s1 + $0xd10] sm:$0xff]
      %v675 = vld [vmem:[%s1 + $0xd18] sm:$0xff]
      %v676 = vld [vmem:[%s1 + $0xd20] sm:$0xff]
      %v677 = vld [vmem:[%s1 + $0xd28] sm:$0xff]
      %v678 = vld [vmem:[%s1 + $0xd30] sm:$0xff]
      %v679 = vld [vmem:[%s1 + $0xd38] sm:$0xff]
      %v680 = vld [vmem:[%s1 + $0xd40] sm:$0xff]
      %v681 = vld [vmem:[%s1 + $0xd48] sm:$0xff]
      %v682 = vld [vmem:[%s1 + $0xd50] sm:$0xff]
      %v683 = vld [vmem:[%s1 + $0xd58] sm:$0xff]
      %v684 = vld [vmem:[%s1 + $0xd60] sm:$0xff]
      %v685 = vld [vmem:[%s1 + $0xd68] sm:$0xff]
      %v686 = vld [vmem:[%s1 + $0xd70] sm:$0xff]
      %v687 = vld [vmem:[%s1 + $0xd78] sm:$0xff]
      %v688 = vld [vmem:[%s1 + $0xd80] sm:$0xff]
      %v689 = vld [vmem:[%s1 + $0xd88] sm:$0xff]
      %v690 = vld [vmem:[%s1 + $0xd90] sm:$0xff]
      %v691 = vld [vmem:[%s1 + $0xd98] sm:$0xff]
      %v692 = vld [vmem:[%s1 + $0xda0] sm:$0xff]
      %v693 = vld [vmem:[%s1 + $0xda8] sm:$0xff]
      %v694 = vld [vmem:[%s1 + $0xdb0] sm:$0xff]
      %v695 = vld [vmem:[%s1 + $0xdb8] sm:$0xff]
      %v696 = vld [vmem:[%s1 + $0xdc0] sm:$0xff]
      %v697 = vld [vmem:[%s1 + $0xdc8] sm:$0xff]
      %v698 = vld [vmem:[%s1 + $0xdd0] sm:$0xff]
      %v699 = vld [vmem:[%s1 + $0xdd8] sm:$0xff]
      %v700 = vld [vmem:[%s1 + $0xde0] sm:$0xff]
      %v701 = vld [vmem:[%s1 + $0xde8] sm:$0xff]
      %v702 = vld [vmem:[%s1 + $0xdf0] sm:$0xff]
      %v703 = vld [vmem:[%s1 + $0xdf8] sm:$0xff]
      %v704 = vld [vmem:[%s1 + $0xe00] sm:$0xff]
      %v705 = vld [vmem:[%s1 + $0xe08] sm:$0xff]
      %v706 = vld [vmem:[%s1 + $0xe10] sm:$0xff]
      %v707 = vld [vmem:[%s1 + $0xe18] sm:$0xff]
      %v708 = vld [vmem:[%s1 + $0xe20] sm:$0xff]
      %v709 = vld [vmem:[%s1 + $0xe28] sm:$0xff]
      %v710 = vld [vmem:[%s1 + $0xe30] sm:$0xff]
      %v711 = vld [vmem:[%s1 + $0xe38] sm:$0xff]
      %v712 = vld [vmem:[%s1 + $0xe40] sm:$0xff]
      %v713 = vld [vmem:[%s1 + $0xe48] sm:$0xff]
      %v714 = vld [vmem:[%s1 + $0xe50] sm:$0xff]
      %v715 = vld [vmem:[%s1 + $0xe58] sm:$0xff]
      %v716 = vld [vmem:[%s1 + $0xe60] sm:$0xff]
      %v717 = vld [vmem:[%s1 + $0xe68] sm:$0xff]
      %v718 = vld [vmem:[%s1 + $0xe70] sm:$0xff]
      %v719 = vld [vmem:[%s1 + $0xe78] sm:$0xff]
      %v720 = vld [vmem:[%s1 + $0xe80] sm:$0xff]
      %v721 = vld [vmem:[%s1 + $0xe88] sm:$0xff]
      %v722 = vld [vmem:[%s1 + $0xe90] sm:$0xff]
      %v723 = vld [vmem:[%s1 + $0xe98] sm:$0xff]
      %v724 = vld [vmem:[%s1 + $0xea0] sm:$0xff]
      %v725 = vld [vmem:[%s1 + $0xea8] sm:$0xff]
      %v726 = vld [vmem:[%s1 + $0xeb0] sm:$0xff]
      %v727 = vld [vmem:[%s1 + $0xeb8] sm:$0xff]
      %v728 = vld [vmem:[%s1 + $0xec0] sm:$0xff]
      %v729 = vld [vmem:[%s1 + $0xec8] sm:$0xff]
      %v730 = vld [vmem:[%s1 + $0xed0] sm:$0xff]
      %v731 = vld [vmem:[%s1 + $0xed8] sm:$0xff]
      %v732 = vld [vmem:[%s1 + $0xee0] sm:$0xff]
      %v733 = vld [vmem:[%s1 + $0xee8] sm:$0xff]
      %v734 = vld [vmem:[%s1 + $0xef0] sm:$0xff]
      %v735 = vld [vmem:[%s1 + $0xef8] sm:$0xff]
      %v736 = vld [vmem:[%s1 + $0xf00] sm:$0xff]
      %v737 = vld [vmem:[%s1 + $0xf08] sm:$0xff]
      %v738 = vld [vmem:[%s1 + $0xf10] sm:$0xff]
      %v739 = vld [vmem:[%s1 + $0xf18] sm:$0xff]
      %v740 = vld [vmem:[%s1 + $0xf20] sm:$0xff]
      %v741 = vld [vmem:[%s1 + $0xf28] sm:$0xff]
      %v742 = vld [vmem:[%s1 + $0xf30] sm:$0xff]
      %v743 = vld [vmem:[%s1 + $0xf38] sm:$0xff]
      %v744 = vld [vmem:[%s1 + $0xf40] sm:$0xff]
      %v745 = vld [vmem:[%s1 + $0xf48] sm:$0xff]
      %v746 = vld [vmem:[%s1 + $0xf50] sm:$0xff]
      %v747 = vld [vmem:[%s1 + $0xf58] sm:$0xff]
      %v748 = vld [vmem:[%s1 + $0xf60] sm:$0xff]
      %v749 = vld [vmem:[%s1 + $0xf68] sm:$0xff]
      %v750 = vld [vmem:[%s1 + $0xf70] sm:$0xff]
      %v751 = vld [vmem:[%s1 + $0xf78] sm:$0xff]
      %v752 = vld [vmem:[%s1 + $0xf80] sm:$0xff]
      %v753 = vld [vmem:[%s1 + $0xf88] sm:$0xff]
      %v754 = vld [vmem:[%s1 + $0xf90] sm:$0xff]
      %v755 = vld [vmem:[%s1 + $0xf98] sm:$0xff]
      %v756 = vld [vmem:[%s1 + $0xfa0] sm:$0xff]
      %v757 = vld [vmem:[%s1 + $0xfa8] sm:$0xff]
      %v758 = vld [vmem:[%s1 + $0xfb0] sm:$0xff]
      %v759 = vld [vmem:[%s1 + $0xfb8] sm:$0xff]
      %v760 = vld [vmem:[%s1 + $0xfc0] sm:$0xff]
      %v761 = vld [vmem:[%s1 + $0xfc8] sm:$0xff]
      %v762 = vld [vmem:[%s1 + $0xfd0] sm:$0xff]
      %v763 = vld [vmem:[%s1 + $0xfd8] sm:$0xff]
      %v764 = vld [vmem:[%s1 + $0xfe0] sm:$0xff]
      %v765 = vld [vmem:[%s1 + $0xfe8] sm:$0xff]
      %v766 = vld [vmem:[%s1 + $0xff0] sm:$0xff]
      %v767 = vld [vmem:[%s1 + $0xff8] sm:$0xff]
      %v768 = vld [vmem:[%s1 + $0x1000] sm:$0xff]
      %v769 = vld [vmem:[%s1 + $0x1008] sm:$0xff]
      %v770 = vld [vmem:[%s1 + $0x1010] sm:$0xff]
      %v771 = vld [vmem:[%s1 + $0x1018] sm:$0xff]
      %v772 = vld [vmem:[%s1 + $0x1020] sm:$0xff]
      %v773 = vld [vmem:[%s1 + $0x1028] sm:$0xff]
      %v774 = vld [vmem:[%s1 + $0x1030] sm:$0xff]
      %v775 = vld [vmem:[%s1 + $0x1038] sm:$0xff]
      %v776 = vld [vmem:[%s1 + $0x1040] sm:$0xff]
      %v777 = vld [vmem:[%s1 + $0x1048] sm:$0xff]
      %v778 = vld [vmem:[%s1 + $0x1050] sm:$0xff]
      %v779 = vld [vmem:[%s1 + $0x1058] sm:$0xff]
      %v780 = vld [vmem:[%s1 + $0x1060] sm:$0xff]
      %v781 = vld [vmem:[%s1 + $0x1068] sm:$0xff]
      %v782 = vld [vmem:[%s1 + $0x1070] sm:$0xff]
      %v783 = vld [vmem:[%s1 + $0x1078] sm:$0xff]
      %v784 = vld [vmem:[%s1 + $0x1080] sm:$0xff]
      %v785 = vld [vmem:[%s1 + $0x1088] sm:$0xff]
      %v786 = vld [vmem:[%s1 + $0x1090] sm:$0xff]
      %v787 = vld [vmem:[%s1 + $0x1098] sm:$0xff]
      %v788 = vld [vmem:[%s1 + $0x10a0] sm:$0xff]
      %v789 = vld [vmem:[%s1 + $0x10a8] sm:$0xff]
      %v790 = vld [vmem:[%s1 + $0x10b0] sm:$0xff]
      %v791 = vld [vmem:[%s1 + $0x10b8] sm:$0xff]
      %v792 = vld [vmem:[%s1 + $0x10c0] sm:$0xff]
      %v793 = vld [vmem:[%s1 + $0x10c8] sm:$0xff]
      %v794 = vld [vmem:[%s1 + $0x10d0] sm:$0xff]
      %v795 = vld [vmem:[%s1 + $0x10d8] sm:$0xff]
      %v796 = vld [vmem:[%s1 + $0x10e0] sm:$0xff]
      %v797 = vld [vmem:[%s1 + $0x10e8] sm:$0xff]
      %v798 = vld [vmem:[%s1 + $0x10f0] sm:$0xff]
      %v799 = vld [vmem:[%s1 + $0x10f8] sm:$0xff]
      %v800 = vld [vmem:[%s1 + $0x1100] sm:$0xff]
      %v801 = vld [vmem:[%s1 + $0x1108] sm:$0xff]
      %v802 = vld [vmem:[%s1 + $0x1110] sm:$0xff]
      %v803 = vld [vmem:[%s1 + $0x1118] sm:$0xff]
      %v804 = vld [vmem:[%s1 + $0x1120] sm:$0xff]
      %v805 = vld [vmem:[%s1 + $0x1128] sm:$0xff]
      %v806 = vld [vmem:[%s1 + $0x1130] sm:$0xff]
      %v807 = vld [vmem:[%s1 + $0x1138] sm:$0xff]
      %v808 = vld [vmem:[%s1 + $0x1140] sm:$0xff]
      %v809 = vld [vmem:[%s1 + $0x1148] sm:$0xff]
      %v810 = vld [vmem:[%s1 + $0x1150] sm:$0xff]
      %v811 = vld [vmem:[%s1 + $0x1158] sm:$0xff]
      %v812 = vld [vmem:[%s1 + $0x1160] sm:$0xff]
      %v813 = vld [vmem:[%s1 + $0x1168] sm:$0xff]
      %v814 = vld [vmem:[%s1 + $0x1170] sm:$0xff]
      %v815 = vld [vmem:[%s1 + $0x1178] sm:$0xff]
      %v816 = vld [vmem:[%s1 + $0x1180] sm:$0xff]
      %v817 = vld [vmem:[%s1 + $0x1188] sm:$0xff]
      %v818 = vld [vmem:[%s1 + $0x1190] sm:$0xff]
      %v819 = vld [vmem:[%s1 + $0x1198] sm:$0xff]
      %v820 = vld [vmem:[%s1 + $0x11a0] sm:$0xff]
      %v821 = vld [vmem:[%s1 + $0x11a8] sm:$0xff]
      %v822 = vld [vmem:[%s1 + $0x11b0] sm:$0xff]
      %v823 = vld [vmem:[%s1 + $0x11b8] sm:$0xff]
      %v824 = vld [vmem:[%s1 + $0x11c0] sm:$0xff]
      %v825 = vld [vmem:[%s1 + $0x11c8] sm:$0xff]
      %v826 = vld [vmem:[%s1 + $0x11d0] sm:$0xff]
      %v827 = vld [vmem:[%s1 + $0x11d8] sm:$0xff]
      %v828 = vld [vmem:[%s1 + $0x11e0] sm:$0xff]
      %v829 = vld [vmem:[%s1 + $0x11e8] sm:$0xff]
      %v830 = vld [vmem:[%s1 + $0x11f0] sm:$0xff]
      %v831 = vld [vmem:[%s1 + $0x11f8] sm:$0xff]
      %v832 = vld [vmem:[%s1 + $0x1200] sm:$0xff]
      %v833 = vld [vmem:[%s1 + $0x1208] sm:$0xff]
      %v834 = vld [vmem:[%s1 + $0x1210] sm:$0xff]
      %v835 = vld [vmem:[%s1 + $0x1218] sm:$0xff]
      %v836 = vld [vmem:[%s1 + $0x1220] sm:$0xff]
      %v837 = vld [vmem:[%s1 + $0x1228] sm:$0xff]
      %v838 = vld [vmem:[%s1 + $0x1230] sm:$0xff]
      %v839 = vld [vmem:[%s1 + $0x1238] sm:$0xff]
      %v840 = vld [vmem:[%s1 + $0x1240] sm:$0xff]
      %v841 = vld [vmem:[%s1 + $0x1248] sm:$0xff]
      %v842 = vld [vmem:[%s1 + $0x1250] sm:$0xff]
      %v843 = vld [vmem:[%s1 + $0x1258] sm:$0xff]
      %v844 = vld [vmem:[%s1 + $0x1260] sm:$0xff]
      %v845 = vld [vmem:[%s1 + $0x1268] sm:$0xff]
      %v846 = vld [vmem:[%s1 + $0x1270] sm:$0xff]
      %v847 = vld [vmem:[%s1 + $0x1278] sm:$0xff]
      %v848 = vld [vmem:[%s1 + $0x1280] sm:$0xff]
      %v849 = vld [vmem:[%s1 + $0x1288] sm:$0xff]
      %v850 = vld [vmem:[%s1 + $0x1290] sm:$0xff]
      %v851 = vld [vmem:[%s1 + $0x1298] sm:$0xff]
      %v852 = vld [vmem:[%s1 + $0x12a0] sm:$0xff]
      %v853 = vld [vmem:[%s1 + $0x12a8] sm:$0xff]
      %v854 = vld [vmem:[%s1 + $0x12b0] sm:$0xff]
      %v855 = vld [vmem:[%s1 + $0x12b8] sm:$0xff]
      %v856 = vld [vmem:[%s1 + $0x12c0] sm:$0xff]
      %v857 = vld [vmem:[%s1 + $0x12c8] sm:$0xff]
      %v858 = vld [vmem:[%s1 + $0x12d0] sm:$0xff]
      %v859 = vld [vmem:[%s1 + $0x12d8] sm:$0xff]
      %v860 = vld [vmem:[%s1 + $0x12e0] sm:$0xff]
      %v861 = vld [vmem:[%s1 + $0x12e8] sm:$0xff]
      %v862 = vld [vmem:[%s1 + $0x12f0] sm:$0xff]
      %v863 = vld [vmem:[%s1 + $0x12f8] sm:$0xff]
      %v864 = vld [vmem:[%s1 + $0x1300] sm:$0xff]
      %v865 = vld [vmem:[%s1 + $0x1308] sm:$0xff]
      %v866 = vld [vmem:[%s1 + $0x1310] sm:$0xff]
      %v867 = vld [vmem:[%s1 + $0x1318] sm:$0xff]
      %v868 = vld [vmem:[%s1 + $0x1320] sm:$0xff]
      %v869 = vld [vmem:[%s1 + $0x1328] sm:$0xff]
      %v870 = vld [vmem:[%s1 + $0x1330] sm:$0xff]
      %v871 = vld [vmem:[%s1 + $0x1338] sm:$0xff]
      %v872 = vld [vmem:[%s1 + $0x1340] sm:$0xff]
      %v873 = vld [vmem:[%s1 + $0x1348] sm:$0xff]
      %v874 = vld [vmem:[%s1 + $0x1350] sm:$0xff]
      %v875 = vld [vmem:[%s1 + $0x1358] sm:$0xff]
      %v876 = vld [vmem:[%s1 + $0x1360] sm:$0xff]
      %v877 = vld [vmem:[%s1 + $0x1368] sm:$0xff]
      %v878 = vld [vmem:[%s1 + $0x1370] sm:$0xff]
      %v879 = vld [vmem:[%s1 + $0x1378] sm:$0xff]
      %v880 = vld [vmem:[%s1 + $0x1380] sm:$0xff]
      %v881 = vld [vmem:[%s1 + $0x1388] sm:$0xff]
      %v882 = vld [vmem:[%s1 + $0x1390] sm:$0xff]
      %v883 = vld [vmem:[%s1 + $0x1398] sm:$0xff]
      %v884 = vld [vmem:[%s1 + $0x13a0] sm:$0xff]
      %v885 = vld [vmem:[%s1 + $0x13a8] sm:$0xff]
      %v886 = vld [vmem:[%s1 + $0x13b0] sm:$0xff]
      %v887 = vld [vmem:[%s1 + $0x13b8] sm:$0xff]
      %v888 = vld [vmem:[%s1 + $0x13c0] sm:$0xff]
      %v889 = vld [vmem:[%s1 + $0x13c8] sm:$0xff]
      %v890 = vld [vmem:[%s1 + $0x13d0] sm:$0xff]
      %v891 = vld [vmem:[%s1 + $0x13d8] sm:$0xff]
      %v892 = vld [vmem:[%s1 + $0x13e0] sm:$0xff]
      %v893 = vld [vmem:[%s1 + $0x13e8] sm:$0xff]
      %v894 = vld [vmem:[%s1 + $0x13f0] sm:$0xff]
      %v895 = vld [vmem:[%s1 + $0x13f8] sm:$0xff]
      %v896 = vld [vmem:[%s1 + $0x1400] sm:$0xff]
      %v897 = vld [vmem:[%s1 + $0x1408] sm:$0xff]
      %v898 = vld [vmem:[%s1 + $0x1410] sm:$0xff]
      %v899 = vld [vmem:[%s1 + $0x1418] sm:$0xff]
      %v900 = vld [vmem:[%s1 + $0x1420] sm:$0xff]
      %v901 = vld [vmem:[%s1 + $0x1428] sm:$0xff]
      %v902 = vld [vmem:[%s1 + $0x1430] sm:$0xff]
      %v903 = vld [vmem:[%s1 + $0x1438] sm:$0xff]
      %v904 = vld [vmem:[%s1 + $0x1440] sm:$0xff]
      %v905 = vld [vmem:[%s1 + $0x1448] sm:$0xff]
      %v906 = vld [vmem:[%s1 + $0x1450] sm:$0xff]
      %v907 = vld [vmem:[%s1 + $0x1458] sm:$0xff]
      %v908 = vld [vmem:[%s1 + $0x1460] sm:$0xff]
      %v909 = vld [vmem:[%s1 + $0x1468] sm:$0xff]
      %v910 = vld [vmem:[%s1 + $0x1470] sm:$0xff]
      %v911 = vld [vmem:[%s1 + $0x1478] sm:$0xff]
      %v912 = vld [vmem:[%s1 + $0x1480] sm:$0xff]
      %v913 = vld [vmem:[%s1 + $0x1488] sm:$0xff]
      %v914 = vld [vmem:[%s1 + $0x1490] sm:$0xff]
      %v915 = vld [vmem:[%s1 + $0x1498] sm:$0xff]
      %v916 = vld [vmem:[%s1 + $0x14a0] sm:$0xff]
      %v917 = vld [vmem:[%s1 + $0x14a8] sm:$0xff]
      %v918 = vld [vmem:[%s1 + $0x14b0] sm:$0xff]
      %v919 = vld [vmem:[%s1 + $0x14b8] sm:$0xff]
      %v920 = vld [vmem:[%s1 + $0x14c0] sm:$0xff]
      %v921 = vld [vmem:[%s1 + $0x14c8] sm:$0xff]
      %v922 = vld [vmem:[%s1 + $0x14d0] sm:$0xff]
      %v923 = vld [vmem:[%s1 + $0x14d8] sm:$0xff]
      %v924 = vld [vmem:[%s1 + $0x14e0] sm:$0xff]
      %v925 = vld [vmem:[%s1 + $0x14e8] sm:$0xff]
      %v926 = vld [vmem:[%s1 + $0x14f0] sm:$0xff]
      %v927 = vld [vmem:[%s1 + $0x14f8] sm:$0xff]
      %v928 = vld [vmem:[%s1 + $0x1500] sm:$0xff]
      %v929 = vld [vmem:[%s1 + $0x1508] sm:$0xff]
      %v930 = vld [vmem:[%s1 + $0x1510] sm:$0xff]
      %v931 = vld [vmem:[%s1 + $0x1518] sm:$0xff]
      %v932 = vld [vmem:[%s1 + $0x1520] sm:$0xff]
      %v933 = vld [vmem:[%s1 + $0x1528] sm:$0xff]
      %v934 = vld [vmem:[%s1 + $0x1530] sm:$0xff]
      %v935 = vld [vmem:[%s1 + $0x1538] sm:$0xff]
      %v936 = vld [vmem:[%s1 + $0x1540] sm:$0xff]
      %v937 = vld [vmem:[%s1 + $0x1548] sm:$0xff]
      %v938 = vld [vmem:[%s1 + $0x1550] sm:$0xff]
      %v939 = vld [vmem:[%s1 + $0x1558] sm:$0xff]
      %v940 = vld [vmem:[%s1 + $0x1560] sm:$0xff]
      %v941 = vld [vmem:[%s1 + $0x1568] sm:$0xff]
      %v942 = vld [vmem:[%s1 + $0x1570] sm:$0xff]
      %v943 = vld [vmem:[%s1 + $0x1578] sm:$0xff]
      %v944 = vld [vmem:[%s1 + $0x1580] sm:$0xff]
      %v945 = vld [vmem:[%s1 + $0x1588] sm:$0xff]
      %v946 = vld [vmem:[%s1 + $0x1590] sm:$0xff]
      %v947 = vld [vmem:[%s1 + $0x1598] sm:$0xff]
      %v948 = vld [vmem:[%s1 + $0x15a0] sm:$0xff]
      %v949 = vld [vmem:[%s1 + $0x15a8] sm:$0xff]
      %v950 = vld [vmem:[%s1 + $0x15b0] sm:$0xff]
      %v951 = vld [vmem:[%s1 + $0x15b8] sm:$0xff]
      %v952 = vld [vmem:[%s1 + $0x15c0] sm:$0xff]
      %v953 = vld [vmem:[%s1 + $0x15c8] sm:$0xff]
      %v954 = vld [vmem:[%s1 + $0x15d0] sm:$0xff]
      %v955 = vld [vmem:[%s1 + $0x15d8] sm:$0xff]
      %v956 = vld [vmem:[%s1 + $0x15e0] sm:$0xff]
      %v957 = vld [vmem:[%s1 + $0x15e8] sm:$0xff]
      %v958 = vld [vmem:[%s1 + $0x15f0] sm:$0xff]
      %v959 = vld [vmem:[%s1 + $0x15f8] sm:$0xff]
      %v960 = vld [vmem:[%s1 + $0x1600] sm:$0xff]
      %v961 = vld [vmem:[%s1 + $0x1608] sm:$0xff]
      %v962 = vld [vmem:[%s1 + $0x1610] sm:$0xff]
      %v963 = vld [vmem:[%s1 + $0x1618] sm:$0xff]
      %v964 = vld [vmem:[%s1 + $0x1620] sm:$0xff]
      %v965 = vld [vmem:[%s1 + $0x1628] sm:$0xff]
      %v966 = vld [vmem:[%s1 + $0x1630] sm:$0xff]
      %v967 = vld [vmem:[%s1 + $0x1638] sm:$0xff]
      %v968 = vld [vmem:[%s1 + $0x1640] sm:$0xff]
      %v969 = vld [vmem:[%s1 + $0x1648] sm:$0xff]
      %v970 = vld [vmem:[%s1 + $0x1650] sm:$0xff]
      %v971 = vld [vmem:[%s1 + $0x1658] sm:$0xff]
      %v972 = vld [vmem:[%s1 + $0x1660] sm:$0xff]
      %v973 = vld [vmem:[%s1 + $0x1668] sm:$0xff]
      %v974 = vld [vmem:[%s1 + $0x1670] sm:$0xff]
      %v975 = vld [vmem:[%s1 + $0x1678] sm:$0xff]
      %v976 = vld [vmem:[%s1 + $0x1680] sm:$0xff]
      %v977 = vld [vmem:[%s1 + $0x1688] sm:$0xff]
      %v978 = vld [vmem:[%s1 + $0x1690] sm:$0xff]
      %v979 = vld [vmem:[%s1 + $0x1698] sm:$0xff]
      %v980 = vld [vmem:[%s1 + $0x16a0] sm:$0xff]
      %v981 = vld [vmem:[%s1 + $0x16a8] sm:$0xff]
      %v982 = vld [vmem:[%s1 + $0x16b0] sm:$0xff]
      %v983 = vld [vmem:[%s1 + $0x16b8] sm:$0xff]
      %v984 = vld [vmem:[%s1 + $0x16c0] sm:$0xff]
      %v985 = vld [vmem:[%s1 + $0x16c8] sm:$0xff]
      %v986 = vld [vmem:[%s1 + $0x16d0] sm:$0xff]
      %v987 = vld [vmem:[%s1 + $0x16d8] sm:$0xff]
      %v988 = vld [vmem:[%s1 + $0x16e0] sm:$0xff]
      %v989 = vld [vmem:[%s1 + $0x16e8] sm:$0xff]
      %v990 = vld [vmem:[%s1 + $0x16f0] sm:$0xff]
      %v991 = vld [vmem:[%s1 + $0x16f8] sm:$0xff]
      %v992 = vld [vmem:[%s1 + $0x1700] sm:$0xff]
      %v993 = vld [vmem:[%s1 + $0x1708] sm:$0xff]
      %v994 = vld [vmem:[%s1 + $0x1710] sm:$0xff]
      %v995 = vld [vmem:[%s1 + $0x1718] sm:$0xff]
      %v996 = vld [vmem:[%s1 + $0x1720] sm:$0xff]
      %v997 = vld [vmem:[%s1 + $0x1728] sm:$0xff]
      %v998 = vld [vmem:[%s1 + $0x1730] sm:$0xff]
      %v999 = vld [vmem:[%s1 + $0x1738] sm:$0xff]
      %v1000 = vld [vmem:[%s1 + $0x1740] sm:$0xff]
      %v1001 = vld [vmem:[%s1 + $0x1748] sm:$0xff]
      %v1002 = vld [vmem:[%s1 + $0x1750] sm:$0xff]
      %v1003 = vld [vmem:[%s1 + $0x1758] sm:$0xff]
      %v1004 = vld [vmem:[%s1 + $0x1760] sm:$0xff]
      %v1005 = vld [vmem:[%s1 + $0x1768] sm:$0xff]
      %v1006 = vld [vmem:[%s1 + $0x1770] sm:$0xff]
      %v1007 = vld [vmem:[%s1 + $0x1778] sm:$0xff]
      %v1008 = vld [vmem:[%s1 + $0x1780] sm:$0xff]
      %v1009 = vld [vmem:[%s1 + $0x1788] sm:$0xff]
      %v1010 = vld [vmem:[%s1 + $0x1790] sm:$0xff]
      %v1011 = vld [vmem:[%s1 + $0x1798] sm:$0xff]
      %v1012 = vld [vmem:[%s1 + $0x17a0] sm:$0xff]
      %v1013 = vld [vmem:[%s1 + $0x17a8] sm:$0xff]
      %v1014 = vld [vmem:[%s1 + $0x17b0] sm:$0xff]
      %v1015 = vld [vmem:[%s1 + $0x17b8] sm:$0xff]
      %v1016 = vld [vmem:[%s1 + $0x17c0] sm:$0xff]
      %v1017 = vld [vmem:[%s1 + $0x17c8] sm:$0xff]
      %v1018 = vld [vmem:[%s1 + $0x17d0] sm:$0xff]
      %v1019 = vld [vmem:[%s1 + $0x17d8] sm:$0xff]
      %v1020 = vld [vmem:[%s1 + $0x17e0] sm:$0xff]
      %v1021 = vld [vmem:[%s1 + $0x17e8] sm:$0xff]
      %v1022 = vld [vmem:[%s1 + $0x17f0] sm:$0xff]
      %v1023 = vld [vmem:[%s1 + $0x17f8] sm:$0xff]
      %v1024 = vld [vmem:[%s2] sm:$0xf]
      %v1026 = vlaneseq
      %v1027 = vshrl.u32 %v1026, 7
      %v1028 = vsub.s32 0, %v1027
      %v1029 = vrot.slane %v1024, %v1028
      %v1030 = vlaneseq
      %v1031 = vshrl.u32 %v1030, 7
      %v1032 = vsub.s32 1, %v1031
      %v1033 = vrot.slane %v1024, %v1032
      %v1034 = vlaneseq
      %v1035 = vshrl.u32 %v1034, 7
      %v1036 = vsub.s32 2, %v1035
      %v1037 = vrot.slane %v1024, %v1036
      %v1038 = vlaneseq
      %v1039 = vshrl.u32 %v1038, 7
      %v1040 = vsub.s32 3, %v1039
      %v1041 = vrot.slane %v1024, %v1040
      %v1070 = vunpack.c.l.b16 %v232
      %v1071 = vunpack.c.h.b16 %v232
      %v1072 = vunpack.c.l.b16 %v233
      %v1073 = vunpack.c.h.b16 %v233
      %v1074 = vunpack.c.l.b16 %v234
      %v1075 = vunpack.c.h.b16 %v234
      %v1076 = vunpack.c.l.b16 %v235
      %v1077 = vunpack.c.h.b16 %v235
      %v1078 = vunpack.c.l.b16 %v236
      %v1079 = vunpack.c.h.b16 %v236
      %v1080 = vunpack.c.l.b16 %v237
      %v1081 = vunpack.c.h.b16 %v237
      %v1082 = vunpack.c.l.b16 %v238
      %v1083 = vunpack.c.h.b16 %v238
      %v1084 = vunpack.c.l.b16 %v239
      %v1085 = vunpack.c.h.b16 %v239
      %v1086 = vunpack.c.l.b16 %v240
      %v1087 = vunpack.c.h.b16 %v240
      %v1088 = vunpack.c.l.b16 %v241
      %v1089 = vunpack.c.h.b16 %v241
      %v1090 = vunpack.c.l.b16 %v242
      %v1091 = vunpack.c.h.b16 %v242
      %v1092 = vunpack.c.l.b16 %v243
      %v1093 = vunpack.c.h.b16 %v243
      %v1094 = vunpack.c.l.b16 %v244
      %v1095 = vunpack.c.h.b16 %v244
      %v1096 = vunpack.c.l.b16 %v245
      %v1097 = vunpack.c.h.b16 %v245
      %v1098 = vunpack.c.l.b16 %v246
      %v1099 = vunpack.c.h.b16 %v246
      %v1100 = vunpack.c.l.b16 %v247
      %v1101 = vunpack.c.h.b16 %v247
      %v1102 = vunpack.c.l.b16 %v248
      %v1103 = vunpack.c.h.b16 %v248
      %v1104 = vunpack.c.l.b16 %v249
      %v1105 = vunpack.c.h.b16 %v249
      %v1106 = vunpack.c.l.b16 %v250
      %v1107 = vunpack.c.h.b16 %v250
      %v1108 = vunpack.c.l.b16 %v251
      %v1109 = vunpack.c.h.b16 %v251
      %v1110 = vunpack.c.l.b16 %v252
      %v1111 = vunpack.c.h.b16 %v252
      %v1112 = vunpack.c.l.b16 %v253
      %v1113 = vunpack.c.h.b16 %v253
      %v1114 = vunpack.c.l.b16 %v254
      %v1115 = vunpack.c.h.b16 %v254
      %v1116 = vunpack.c.l.b16 %v255
      %v1117 = vunpack.c.h.b16 %v255
      %v1118 = vpack.c.b16 %v1094, %v1070
      %v1119 = vpack.c.b16 %v1095, %v1071
      %v1120 = vpack.c.b16 %v1096, %v1072
      %v1121 = vpack.c.b16 %v1097, %v1073
      %v1122 = vpack.c.b16 %v1098, %v1074
      %v1123 = vpack.c.b16 %v1099, %v1075
      %v1124 = vpack.c.b16 %v1100, %v1076
      %v1125 = vpack.c.b16 %v1101, %v1077
      %v1126 = vpack.c.b16 %v1102, %v1078
      %v1127 = vpack.c.b16 %v1103, %v1079
      %v1128 = vpack.c.b16 %v1104, %v1080
      %v1129 = vpack.c.b16 %v1105, %v1081
      %v1130 = vpack.c.b16 %v1106, %v1082
      %v1131 = vpack.c.b16 %v1107, %v1083
      %v1132 = vpack.c.b16 %v1108, %v1084
      %v1133 = vpack.c.b16 %v1109, %v1085
      %v1134 = vpack.c.b16 %v1110, %v1086
      %v1135 = vpack.c.b16 %v1111, %v1087
      %v1136 = vpack.c.b16 %v1112, %v1088
      %v1137 = vpack.c.b16 %v1113, %v1089
      %v1138 = vpack.c.b16 %v1114, %v1090
      %v1139 = vpack.c.b16 %v1115, %v1091
      %v1140 = vpack.c.b16 %v1116, %v1092
      %v1141 = vpack.c.b16 %v1117, %v1093
      %v1934 = vunpack.c.l.b16 %v256
      %v1935 = vunpack.c.h.b16 %v256
      %v1936 = vunpack.c.l.b16 %v257
      %v1937 = vunpack.c.h.b16 %v257
      %v1938 = vunpack.c.l.b16 %v258
      %v1939 = vunpack.c.h.b16 %v258
      %v1940 = vunpack.c.l.b16 %v259
      %v1941 = vunpack.c.h.b16 %v259
      %v1942 = vunpack.c.l.b16 %v260
      %v1943 = vunpack.c.h.b16 %v260
      %v1944 = vunpack.c.l.b16 %v261
      %v1945 = vunpack.c.h.b16 %v261
      %v1946 = vunpack.c.l.b16 %v262
      %v1947 = vunpack.c.h.b16 %v262
      %v1948 = vunpack.c.l.b16 %v263
      %v1949 = vunpack.c.h.b16 %v263
      %v1950 = vunpack.c.l.b16 %v264
      %v1951 = vunpack.c.h.b16 %v264
      %v1952 = vunpack.c.l.b16 %v265
      %v1953 = vunpack.c.h.b16 %v265
      %v1954 = vunpack.c.l.b16 %v266
      %v1955 = vunpack.c.h.b16 %v266
      %v1956 = vunpack.c.l.b16 %v267
      %v1957 = vunpack.c.h.b16 %v267
      %v1958 = vunpack.c.l.b16 %v268
      %v1959 = vunpack.c.h.b16 %v268
      %v1960 = vunpack.c.l.b16 %v269
      %v1961 = vunpack.c.h.b16 %v269
      %v1962 = vunpack.c.l.b16 %v270
      %v1963 = vunpack.c.h.b16 %v270
      %v1964 = vunpack.c.l.b16 %v271
      %v1965 = vunpack.c.h.b16 %v271
      %v1966 = vunpack.c.l.b16 %v272
      %v1967 = vunpack.c.h.b16 %v272
      %v1968 = vunpack.c.l.b16 %v273
      %v1969 = vunpack.c.h.b16 %v273
      %v1970 = vunpack.c.l.b16 %v274
      %v1971 = vunpack.c.h.b16 %v274
      %v1972 = vunpack.c.l.b16 %v275
      %v1973 = vunpack.c.h.b16 %v275
      %v1974 = vunpack.c.l.b16 %v276
      %v1975 = vunpack.c.h.b16 %v276
      %v1976 = vunpack.c.l.b16 %v277
      %v1977 = vunpack.c.h.b16 %v277
      %v1978 = vunpack.c.l.b16 %v278
      %v1979 = vunpack.c.h.b16 %v278
      %v1980 = vunpack.c.l.b16 %v279
      %v1981 = vunpack.c.h.b16 %v279
      %v1982 = vunpack.c.l.b16 %v280
      %v1983 = vunpack.c.h.b16 %v280
      %v1984 = vunpack.c.l.b16 %v281
      %v1985 = vunpack.c.h.b16 %v281
      %v1986 = vunpack.c.l.b16 %v282
      %v1987 = vunpack.c.h.b16 %v282
      %v1988 = vunpack.c.l.b16 %v283
      %v1989 = vunpack.c.h.b16 %v283
      %v1990 = vunpack.c.l.b16 %v284
      %v1991 = vunpack.c.h.b16 %v284
      %v1992 = vunpack.c.l.b16 %v285
      %v1993 = vunpack.c.h.b16 %v285
      %v1994 = vunpack.c.l.b16 %v286
      %v1995 = vunpack.c.h.b16 %v286
      %v1996 = vunpack.c.l.b16 %v287
      %v1997 = vunpack.c.h.b16 %v287
      %v1998 = vunpack.c.l.b16 %v288
      %v1999 = vunpack.c.h.b16 %v288
      %v2000 = vunpack.c.l.b16 %v289
      %v2001 = vunpack.c.h.b16 %v289
      %v2002 = vunpack.c.l.b16 %v290
      %v2003 = vunpack.c.h.b16 %v290
      %v2004 = vunpack.c.l.b16 %v291
      %v2005 = vunpack.c.h.b16 %v291
      %v2006 = vunpack.c.l.b16 %v292
      %v2007 = vunpack.c.h.b16 %v292
      %v2008 = vunpack.c.l.b16 %v293
      %v2009 = vunpack.c.h.b16 %v293
      %v2010 = vunpack.c.l.b16 %v294
      %v2011 = vunpack.c.h.b16 %v294
      %v2012 = vunpack.c.l.b16 %v295
      %v2013 = vunpack.c.h.b16 %v295
      %v2014 = vunpack.c.l.b16 %v296
      %v2015 = vunpack.c.h.b16 %v296
      %v2016 = vunpack.c.l.b16 %v297
      %v2017 = vunpack.c.h.b16 %v297
      %v2018 = vunpack.c.l.b16 %v298
      %v2019 = vunpack.c.h.b16 %v298
      %v2020 = vunpack.c.l.b16 %v299
      %v2021 = vunpack.c.h.b16 %v299
      %v2022 = vunpack.c.l.b16 %v300
      %v2023 = vunpack.c.h.b16 %v300
      %v2024 = vunpack.c.l.b16 %v301
      %v2025 = vunpack.c.h.b16 %v301
      %v2026 = vunpack.c.l.b16 %v302
      %v2027 = vunpack.c.h.b16 %v302
      %v2028 = vunpack.c.l.b16 %v303
      %v2029 = vunpack.c.h.b16 %v303
      %v2030 = vunpack.c.l.b16 %v304
      %v2031 = vunpack.c.h.b16 %v304
      %v2032 = vunpack.c.l.b16 %v305
      %v2033 = vunpack.c.h.b16 %v305
      %v2034 = vunpack.c.l.b16 %v306
      %v2035 = vunpack.c.h.b16 %v306
      %v2036 = vunpack.c.l.b16 %v307
      %v2037 = vunpack.c.h.b16 %v307
      %v2038 = vunpack.c.l.b16 %v308
      %v2039 = vunpack.c.h.b16 %v308
      %v2040 = vunpack.c.l.b16 %v309
      %v2041 = vunpack.c.h.b16 %v309
      %v2042 = vunpack.c.l.b16 %v310
      %v2043 = vunpack.c.h.b16 %v310
      %v2044 = vunpack.c.l.b16 %v311
      %v2045 = vunpack.c.h.b16 %v311
      %v2046 = vunpack.c.l.b16 %v312
      %v2047 = vunpack.c.h.b16 %v312
      %v2048 = vunpack.c.l.b16 %v313
      %v2049 = vunpack.c.h.b16 %v313
      %v2050 = vunpack.c.l.b16 %v314
      %v2051 = vunpack.c.h.b16 %v314
      %v2052 = vunpack.c.l.b16 %v315
      %v2053 = vunpack.c.h.b16 %v315
      %v2054 = vunpack.c.l.b16 %v316
      %v2055 = vunpack.c.h.b16 %v316
      %v2056 = vunpack.c.l.b16 %v317
      %v2057 = vunpack.c.h.b16 %v317
      %v2058 = vunpack.c.l.b16 %v318
      %v2059 = vunpack.c.h.b16 %v318
      %v2060 = vunpack.c.l.b16 %v319
      %v2061 = vunpack.c.h.b16 %v319
      %v2062 = vunpack.c.l.b16 %v320
      %v2063 = vunpack.c.h.b16 %v320
      %v2064 = vunpack.c.l.b16 %v321
      %v2065 = vunpack.c.h.b16 %v321
      %v2066 = vunpack.c.l.b16 %v322
      %v2067 = vunpack.c.h.b16 %v322
      %v2068 = vunpack.c.l.b16 %v323
      %v2069 = vunpack.c.h.b16 %v323
      %v2070 = vunpack.c.l.b16 %v324
      %v2071 = vunpack.c.h.b16 %v324
      %v2072 = vunpack.c.l.b16 %v325
      %v2073 = vunpack.c.h.b16 %v325
      %v2074 = vunpack.c.l.b16 %v326
      %v2075 = vunpack.c.h.b16 %v326
      %v2076 = vunpack.c.l.b16 %v327
      %v2077 = vunpack.c.h.b16 %v327
      %v2078 = vunpack.c.l.b16 %v328
      %v2079 = vunpack.c.h.b16 %v328
      %v2080 = vunpack.c.l.b16 %v329
      %v2081 = vunpack.c.h.b16 %v329
      %v2082 = vunpack.c.l.b16 %v330
      %v2083 = vunpack.c.h.b16 %v330
      %v2084 = vunpack.c.l.b16 %v331
      %v2085 = vunpack.c.h.b16 %v331
      %v2086 = vunpack.c.l.b16 %v332
      %v2087 = vunpack.c.h.b16 %v332
      %v2088 = vunpack.c.l.b16 %v333
      %v2089 = vunpack.c.h.b16 %v333
      %v2090 = vunpack.c.l.b16 %v334
      %v2091 = vunpack.c.h.b16 %v334
      %v2092 = vunpack.c.l.b16 %v335
      %v2093 = vunpack.c.h.b16 %v335
      %v2094 = vunpack.c.l.b16 %v336
      %v2095 = vunpack.c.h.b16 %v336
      %v2096 = vunpack.c.l.b16 %v337
      %v2097 = vunpack.c.h.b16 %v337
      %v2098 = vunpack.c.l.b16 %v338
      %v2099 = vunpack.c.h.b16 %v338
      %v2100 = vunpack.c.l.b16 %v339
      %v2101 = vunpack.c.h.b16 %v339
      %v2102 = vunpack.c.l.b16 %v340
      %v2103 = vunpack.c.h.b16 %v340
      %v2104 = vunpack.c.l.b16 %v341
      %v2105 = vunpack.c.h.b16 %v341
      %v2106 = vunpack.c.l.b16 %v342
      %v2107 = vunpack.c.h.b16 %v342
      %v2108 = vunpack.c.l.b16 %v343
      %v2109 = vunpack.c.h.b16 %v343
      %v2110 = vunpack.c.l.b16 %v344
      %v2111 = vunpack.c.h.b16 %v344
      %v2112 = vunpack.c.l.b16 %v345
      %v2113 = vunpack.c.h.b16 %v345
      %v2114 = vunpack.c.l.b16 %v346
      %v2115 = vunpack.c.h.b16 %v346
      %v2116 = vunpack.c.l.b16 %v347
      %v2117 = vunpack.c.h.b16 %v347
      %v2118 = vunpack.c.l.b16 %v348
      %v2119 = vunpack.c.h.b16 %v348
      %v2120 = vunpack.c.l.b16 %v349
      %v2121 = vunpack.c.h.b16 %v349
      %v2122 = vunpack.c.l.b16 %v350
      %v2123 = vunpack.c.h.b16 %v350
      %v2124 = vunpack.c.l.b16 %v351
      %v2125 = vunpack.c.h.b16 %v351
      %v2126 = vunpack.c.l.b16 %v352
      %v2127 = vunpack.c.h.b16 %v352
      %v2128 = vunpack.c.l.b16 %v353
      %v2129 = vunpack.c.h.b16 %v353
      %v2130 = vunpack.c.l.b16 %v354
      %v2131 = vunpack.c.h.b16 %v354
      %v2132 = vunpack.c.l.b16 %v355
      %v2133 = vunpack.c.h.b16 %v355
      %v2134 = vunpack.c.l.b16 %v356
      %v2135 = vunpack.c.h.b16 %v356
      %v2136 = vunpack.c.l.b16 %v357
      %v2137 = vunpack.c.h.b16 %v357
      %v2138 = vunpack.c.l.b16 %v358
      %v2139 = vunpack.c.h.b16 %v358
      %v2140 = vunpack.c.l.b16 %v359
      %v2141 = vunpack.c.h.b16 %v359
      %v2142 = vunpack.c.l.b16 %v360
      %v2143 = vunpack.c.h.b16 %v360
      %v2144 = vunpack.c.l.b16 %v361
      %v2145 = vunpack.c.h.b16 %v361
      %v2146 = vunpack.c.l.b16 %v362
      %v2147 = vunpack.c.h.b16 %v362
      %v2148 = vunpack.c.l.b16 %v363
      %v2149 = vunpack.c.h.b16 %v363
      %v2150 = vunpack.c.l.b16 %v364
      %v2151 = vunpack.c.h.b16 %v364
      %v2152 = vunpack.c.l.b16 %v365
      %v2153 = vunpack.c.h.b16 %v365
      %v2154 = vunpack.c.l.b16 %v366
      %v2155 = vunpack.c.h.b16 %v366
      %v2156 = vunpack.c.l.b16 %v367
      %v2157 = vunpack.c.h.b16 %v367
      %v2158 = vunpack.c.l.b16 %v368
      %v2159 = vunpack.c.h.b16 %v368
      %v2160 = vunpack.c.l.b16 %v369
      %v2161 = vunpack.c.h.b16 %v369
      %v2162 = vunpack.c.l.b16 %v370
      %v2163 = vunpack.c.h.b16 %v370
      %v2164 = vunpack.c.l.b16 %v371
      %v2165 = vunpack.c.h.b16 %v371
      %v2166 = vunpack.c.l.b16 %v372
      %v2167 = vunpack.c.h.b16 %v372
      %v2168 = vunpack.c.l.b16 %v373
      %v2169 = vunpack.c.h.b16 %v373
      %v2170 = vunpack.c.l.b16 %v374
      %v2171 = vunpack.c.h.b16 %v374
      %v2172 = vunpack.c.l.b16 %v375
      %v2173 = vunpack.c.h.b16 %v375
      %v2174 = vunpack.c.l.b16 %v376
      %v2175 = vunpack.c.h.b16 %v376
      %v2176 = vunpack.c.l.b16 %v377
      %v2177 = vunpack.c.h.b16 %v377
      %v2178 = vunpack.c.l.b16 %v378
      %v2179 = vunpack.c.h.b16 %v378
      %v2180 = vunpack.c.l.b16 %v379
      %v2181 = vunpack.c.h.b16 %v379
      %v2182 = vunpack.c.l.b16 %v380
      %v2183 = vunpack.c.h.b16 %v380
      %v2184 = vunpack.c.l.b16 %v381
      %v2185 = vunpack.c.h.b16 %v381
      %v2186 = vunpack.c.l.b16 %v382
      %v2187 = vunpack.c.h.b16 %v382
      %v2188 = vunpack.c.l.b16 %v383
      %v2189 = vunpack.c.h.b16 %v383
      %v2190 = vunpack.c.l.b16 %v384
      %v2191 = vunpack.c.h.b16 %v384
      %v2192 = vunpack.c.l.b16 %v385
      %v2193 = vunpack.c.h.b16 %v385
      %v2194 = vunpack.c.l.b16 %v386
      %v2195 = vunpack.c.h.b16 %v386
      %v2196 = vunpack.c.l.b16 %v387
      %v2197 = vunpack.c.h.b16 %v387
      %v2198 = vunpack.c.l.b16 %v388
      %v2199 = vunpack.c.h.b16 %v388
      %v2200 = vunpack.c.l.b16 %v389
      %v2201 = vunpack.c.h.b16 %v389
      %v2202 = vunpack.c.l.b16 %v390
      %v2203 = vunpack.c.h.b16 %v390
      %v2204 = vunpack.c.l.b16 %v391
      %v2205 = vunpack.c.h.b16 %v391
      %v2206 = vunpack.c.l.b16 %v392
      %v2207 = vunpack.c.h.b16 %v392
      %v2208 = vunpack.c.l.b16 %v393
      %v2209 = vunpack.c.h.b16 %v393
      %v2210 = vunpack.c.l.b16 %v394
      %v2211 = vunpack.c.h.b16 %v394
      %v2212 = vunpack.c.l.b16 %v395
      %v2213 = vunpack.c.h.b16 %v395
      %v2214 = vunpack.c.l.b16 %v396
      %v2215 = vunpack.c.h.b16 %v396
      %v2216 = vunpack.c.l.b16 %v397
      %v2217 = vunpack.c.h.b16 %v397
      %v2218 = vunpack.c.l.b16 %v398
      %v2219 = vunpack.c.h.b16 %v398
      %v2220 = vunpack.c.l.b16 %v399
      %v2221 = vunpack.c.h.b16 %v399
      %v2222 = vunpack.c.l.b16 %v400
      %v2223 = vunpack.c.h.b16 %v400
      %v2224 = vunpack.c.l.b16 %v401
      %v2225 = vunpack.c.h.b16 %v401
      %v2226 = vunpack.c.l.b16 %v402
      %v2227 = vunpack.c.h.b16 %v402
      %v2228 = vunpack.c.l.b16 %v403
      %v2229 = vunpack.c.h.b16 %v403
      %v2230 = vunpack.c.l.b16 %v404
      %v2231 = vunpack.c.h.b16 %v404
      %v2232 = vunpack.c.l.b16 %v405
      %v2233 = vunpack.c.h.b16 %v405
      %v2234 = vunpack.c.l.b16 %v406
      %v2235 = vunpack.c.h.b16 %v406
      %v2236 = vunpack.c.l.b16 %v407
      %v2237 = vunpack.c.h.b16 %v407
      %v2238 = vunpack.c.l.b16 %v408
      %v2239 = vunpack.c.h.b16 %v408
      %v2240 = vunpack.c.l.b16 %v409
      %v2241 = vunpack.c.h.b16 %v409
      %v2242 = vunpack.c.l.b16 %v410
      %v2243 = vunpack.c.h.b16 %v410
      %v2244 = vunpack.c.l.b16 %v411
      %v2245 = vunpack.c.h.b16 %v411
      %v2246 = vunpack.c.l.b16 %v412
      %v2247 = vunpack.c.h.b16 %v412
      %v2248 = vunpack.c.l.b16 %v413
      %v2249 = vunpack.c.h.b16 %v413
      %v2250 = vunpack.c.l.b16 %v414
      %v2251 = vunpack.c.h.b16 %v414
      %v2252 = vunpack.c.l.b16 %v415
      %v2253 = vunpack.c.h.b16 %v415
      %v2254 = vunpack.c.l.b16 %v416
      %v2255 = vunpack.c.h.b16 %v416
      %v2256 = vunpack.c.l.b16 %v417
      %v2257 = vunpack.c.h.b16 %v417
      %v2258 = vunpack.c.l.b16 %v418
      %v2259 = vunpack.c.h.b16 %v418
      %v2260 = vunpack.c.l.b16 %v419
      %v2261 = vunpack.c.h.b16 %v419
      %v2262 = vunpack.c.l.b16 %v420
      %v2263 = vunpack.c.h.b16 %v420
      %v2264 = vunpack.c.l.b16 %v421
      %v2265 = vunpack.c.h.b16 %v421
      %v2266 = vunpack.c.l.b16 %v422
      %v2267 = vunpack.c.h.b16 %v422
      %v2268 = vunpack.c.l.b16 %v423
      %v2269 = vunpack.c.h.b16 %v423
      %v2270 = vunpack.c.l.b16 %v424
      %v2271 = vunpack.c.h.b16 %v424
      %v2272 = vunpack.c.l.b16 %v425
      %v2273 = vunpack.c.h.b16 %v425
      %v2274 = vunpack.c.l.b16 %v426
      %v2275 = vunpack.c.h.b16 %v426
      %v2276 = vunpack.c.l.b16 %v427
      %v2277 = vunpack.c.h.b16 %v427
      %v2278 = vunpack.c.l.b16 %v428
      %v2279 = vunpack.c.h.b16 %v428
      %v2280 = vunpack.c.l.b16 %v429
      %v2281 = vunpack.c.h.b16 %v429
      %v2282 = vunpack.c.l.b16 %v430
      %v2283 = vunpack.c.h.b16 %v430
      %v2284 = vunpack.c.l.b16 %v431
      %v2285 = vunpack.c.h.b16 %v431
      %v2286 = vunpack.c.l.b16 %v432
      %v2287 = vunpack.c.h.b16 %v432
      %v2288 = vunpack.c.l.b16 %v433
      %v2289 = vunpack.c.h.b16 %v433
      %v2290 = vunpack.c.l.b16 %v434
      %v2291 = vunpack.c.h.b16 %v434
      %v2292 = vunpack.c.l.b16 %v435
      %v2293 = vunpack.c.h.b16 %v435
      %v2294 = vunpack.c.l.b16 %v436
      %v2295 = vunpack.c.h.b16 %v436
      %v2296 = vunpack.c.l.b16 %v437
      %v2297 = vunpack.c.h.b16 %v437
      %v2298 = vunpack.c.l.b16 %v438
      %v2299 = vunpack.c.h.b16 %v438
      %v2300 = vunpack.c.l.b16 %v439
      %v2301 = vunpack.c.h.b16 %v439
      %v2302 = vunpack.c.l.b16 %v440
      %v2303 = vunpack.c.h.b16 %v440
      %v2304 = vunpack.c.l.b16 %v441
      %v2305 = vunpack.c.h.b16 %v441
      %v2306 = vunpack.c.l.b16 %v442
      %v2307 = vunpack.c.h.b16 %v442
      %v2308 = vunpack.c.l.b16 %v443
      %v2309 = vunpack.c.h.b16 %v443
      %v2310 = vunpack.c.l.b16 %v444
      %v2311 = vunpack.c.h.b16 %v444
      %v2312 = vunpack.c.l.b16 %v445
      %v2313 = vunpack.c.h.b16 %v445
      %v2314 = vunpack.c.l.b16 %v446
      %v2315 = vunpack.c.h.b16 %v446
      %v2316 = vunpack.c.l.b16 %v447
      %v2317 = vunpack.c.h.b16 %v447
      %v2318 = vunpack.c.l.b16 %v448
      %v2319 = vunpack.c.h.b16 %v448
      %v2320 = vunpack.c.l.b16 %v449
      %v2321 = vunpack.c.h.b16 %v449
      %v2322 = vunpack.c.l.b16 %v450
      %v2323 = vunpack.c.h.b16 %v450
      %v2324 = vunpack.c.l.b16 %v451
      %v2325 = vunpack.c.h.b16 %v451
      %v2326 = vunpack.c.l.b16 %v452
      %v2327 = vunpack.c.h.b16 %v452
      %v2328 = vunpack.c.l.b16 %v453
      %v2329 = vunpack.c.h.b16 %v453
      %v2330 = vunpack.c.l.b16 %v454
      %v2331 = vunpack.c.h.b16 %v454
      %v2332 = vunpack.c.l.b16 %v455
      %v2333 = vunpack.c.h.b16 %v455
      %v2334 = vunpack.c.l.b16 %v456
      %v2335 = vunpack.c.h.b16 %v456
      %v2336 = vunpack.c.l.b16 %v457
      %v2337 = vunpack.c.h.b16 %v457
      %v2338 = vunpack.c.l.b16 %v458
      %v2339 = vunpack.c.h.b16 %v458
      %v2340 = vunpack.c.l.b16 %v459
      %v2341 = vunpack.c.h.b16 %v459
      %v2342 = vunpack.c.l.b16 %v460
      %v2343 = vunpack.c.h.b16 %v460
      %v2344 = vunpack.c.l.b16 %v461
      %v2345 = vunpack.c.h.b16 %v461
      %v2346 = vunpack.c.l.b16 %v462
      %v2347 = vunpack.c.h.b16 %v462
      %v2348 = vunpack.c.l.b16 %v463
      %v2349 = vunpack.c.h.b16 %v463
      %v2350 = vunpack.c.l.b16 %v464
      %v2351 = vunpack.c.h.b16 %v464
      %v2352 = vunpack.c.l.b16 %v465
      %v2353 = vunpack.c.h.b16 %v465
      %v2354 = vunpack.c.l.b16 %v466
      %v2355 = vunpack.c.h.b16 %v466
      %v2356 = vunpack.c.l.b16 %v467
      %v2357 = vunpack.c.h.b16 %v467
      %v2358 = vunpack.c.l.b16 %v468
      %v2359 = vunpack.c.h.b16 %v468
      %v2360 = vunpack.c.l.b16 %v469
      %v2361 = vunpack.c.h.b16 %v469
      %v2362 = vunpack.c.l.b16 %v470
      %v2363 = vunpack.c.h.b16 %v470
      %v2364 = vunpack.c.l.b16 %v471
      %v2365 = vunpack.c.h.b16 %v471
      %v2366 = vunpack.c.l.b16 %v472
      %v2367 = vunpack.c.h.b16 %v472
      %v2368 = vunpack.c.l.b16 %v473
      %v2369 = vunpack.c.h.b16 %v473
      %v2370 = vunpack.c.l.b16 %v474
      %v2371 = vunpack.c.h.b16 %v474
      %v2372 = vunpack.c.l.b16 %v475
      %v2373 = vunpack.c.h.b16 %v475
      %v2374 = vunpack.c.l.b16 %v476
      %v2375 = vunpack.c.h.b16 %v476
      %v2376 = vunpack.c.l.b16 %v477
      %v2377 = vunpack.c.h.b16 %v477
      %v2378 = vunpack.c.l.b16 %v478
      %v2379 = vunpack.c.h.b16 %v478
      %v2380 = vunpack.c.l.b16 %v479
      %v2381 = vunpack.c.h.b16 %v479
      %v2382 = vunpack.c.l.b16 %v480
      %v2383 = vunpack.c.h.b16 %v480
      %v2384 = vunpack.c.l.b16 %v481
      %v2385 = vunpack.c.h.b16 %v481
      %v2386 = vunpack.c.l.b16 %v482
      %v2387 = vunpack.c.h.b16 %v482
      %v2388 = vunpack.c.l.b16 %v483
      %v2389 = vunpack.c.h.b16 %v483
      %v2390 = vunpack.c.l.b16 %v484
      %v2391 = vunpack.c.h.b16 %v484
      %v2392 = vunpack.c.l.b16 %v485
      %v2393 = vunpack.c.h.b16 %v485
      %v2394 = vunpack.c.l.b16 %v486
      %v2395 = vunpack.c.h.b16 %v486
      %v2396 = vunpack.c.l.b16 %v487
      %v2397 = vunpack.c.h.b16 %v487
      %v2398 = vunpack.c.l.b16 %v488
      %v2399 = vunpack.c.h.b16 %v488
      %v2400 = vunpack.c.l.b16 %v489
      %v2401 = vunpack.c.h.b16 %v489
      %v2402 = vunpack.c.l.b16 %v490
      %v2403 = vunpack.c.h.b16 %v490
      %v2404 = vunpack.c.l.b16 %v491
      %v2405 = vunpack.c.h.b16 %v491
      %v2406 = vunpack.c.l.b16 %v492
      %v2407 = vunpack.c.h.b16 %v492
      %v2408 = vunpack.c.l.b16 %v493
      %v2409 = vunpack.c.h.b16 %v493
      %v2410 = vunpack.c.l.b16 %v494
      %v2411 = vunpack.c.h.b16 %v494
      %v2412 = vunpack.c.l.b16 %v495
      %v2413 = vunpack.c.h.b16 %v495
      %v2414 = vunpack.c.l.b16 %v496
      %v2415 = vunpack.c.h.b16 %v496
      %v2416 = vunpack.c.l.b16 %v497
      %v2417 = vunpack.c.h.b16 %v497
      %v2418 = vunpack.c.l.b16 %v498
      %v2419 = vunpack.c.h.b16 %v498
      %v2420 = vunpack.c.l.b16 %v499
      %v2421 = vunpack.c.h.b16 %v499
      %v2422 = vunpack.c.l.b16 %v500
      %v2423 = vunpack.c.h.b16 %v500
      %v2424 = vunpack.c.l.b16 %v501
      %v2425 = vunpack.c.h.b16 %v501
      %v2426 = vunpack.c.l.b16 %v502
      %v2427 = vunpack.c.h.b16 %v502
      %v2428 = vunpack.c.l.b16 %v503
      %v2429 = vunpack.c.h.b16 %v503
      %v2430 = vunpack.c.l.b16 %v504
      %v2431 = vunpack.c.h.b16 %v504
      %v2432 = vunpack.c.l.b16 %v505
      %v2433 = vunpack.c.h.b16 %v505
      %v2434 = vunpack.c.l.b16 %v506
      %v2435 = vunpack.c.h.b16 %v506
      %v2436 = vunpack.c.l.b16 %v507
      %v2437 = vunpack.c.h.b16 %v507
      %v2438 = vunpack.c.l.b16 %v508
      %v2439 = vunpack.c.h.b16 %v508
      %v2440 = vunpack.c.l.b16 %v509
      %v2441 = vunpack.c.h.b16 %v509
      %v2442 = vunpack.c.l.b16 %v510
      %v2443 = vunpack.c.h.b16 %v510
      %v2444 = vunpack.c.l.b16 %v511
      %v2445 = vunpack.c.h.b16 %v511
      %v2446 = vunpack.c.l.b16 %v512
      %v2447 = vunpack.c.h.b16 %v512
      %v2448 = vunpack.c.l.b16 %v513
      %v2449 = vunpack.c.h.b16 %v513
      %v2450 = vunpack.c.l.b16 %v514
      %v2451 = vunpack.c.h.b16 %v514
      %v2452 = vunpack.c.l.b16 %v515
      %v2453 = vunpack.c.h.b16 %v515
      %v2454 = vunpack.c.l.b16 %v516
      %v2455 = vunpack.c.h.b16 %v516
      %v2456 = vunpack.c.l.b16 %v517
      %v2457 = vunpack.c.h.b16 %v517
      %v2458 = vunpack.c.l.b16 %v518
      %v2459 = vunpack.c.h.b16 %v518
      %v2460 = vunpack.c.l.b16 %v519
      %v2461 = vunpack.c.h.b16 %v519
      %v2462 = vunpack.c.l.b16 %v520
      %v2463 = vunpack.c.h.b16 %v520
      %v2464 = vunpack.c.l.b16 %v521
      %v2465 = vunpack.c.h.b16 %v521
      %v2466 = vunpack.c.l.b16 %v522
      %v2467 = vunpack.c.h.b16 %v522
      %v2468 = vunpack.c.l.b16 %v523
      %v2469 = vunpack.c.h.b16 %v523
      %v2470 = vunpack.c.l.b16 %v524
      %v2471 = vunpack.c.h.b16 %v524
      %v2472 = vunpack.c.l.b16 %v525
      %v2473 = vunpack.c.h.b16 %v525
      %v2474 = vunpack.c.l.b16 %v526
      %v2475 = vunpack.c.h.b16 %v526
      %v2476 = vunpack.c.l.b16 %v527
      %v2477 = vunpack.c.h.b16 %v527
      %v2478 = vunpack.c.l.b16 %v528
      %v2479 = vunpack.c.h.b16 %v528
      %v2480 = vunpack.c.l.b16 %v529
      %v2481 = vunpack.c.h.b16 %v529
      %v2482 = vunpack.c.l.b16 %v530
      %v2483 = vunpack.c.h.b16 %v530
      %v2484 = vunpack.c.l.b16 %v531
      %v2485 = vunpack.c.h.b16 %v531
      %v2486 = vunpack.c.l.b16 %v532
      %v2487 = vunpack.c.h.b16 %v532
      %v2488 = vunpack.c.l.b16 %v533
      %v2489 = vunpack.c.h.b16 %v533
      %v2490 = vunpack.c.l.b16 %v534
      %v2491 = vunpack.c.h.b16 %v534
      %v2492 = vunpack.c.l.b16 %v535
      %v2493 = vunpack.c.h.b16 %v535
      %v2494 = vunpack.c.l.b16 %v536
      %v2495 = vunpack.c.h.b16 %v536
      %v2496 = vunpack.c.l.b16 %v537
      %v2497 = vunpack.c.h.b16 %v537
      %v2498 = vunpack.c.l.b16 %v538
      %v2499 = vunpack.c.h.b16 %v538
      %v2500 = vunpack.c.l.b16 %v539
      %v2501 = vunpack.c.h.b16 %v539
      %v2502 = vunpack.c.l.b16 %v540
      %v2503 = vunpack.c.h.b16 %v540
      %v2504 = vunpack.c.l.b16 %v541
      %v2505 = vunpack.c.h.b16 %v541
      %v2506 = vunpack.c.l.b16 %v542
      %v2507 = vunpack.c.h.b16 %v542
      %v2508 = vunpack.c.l.b16 %v543
      %v2509 = vunpack.c.h.b16 %v543
      %v2510 = vunpack.c.l.b16 %v544
      %v2511 = vunpack.c.h.b16 %v544
      %v2512 = vunpack.c.l.b16 %v545
      %v2513 = vunpack.c.h.b16 %v545
      %v2514 = vunpack.c.l.b16 %v546
      %v2515 = vunpack.c.h.b16 %v546
      %v2516 = vunpack.c.l.b16 %v547
      %v2517 = vunpack.c.h.b16 %v547
      %v2518 = vunpack.c.l.b16 %v548
      %v2519 = vunpack.c.h.b16 %v548
      %v2520 = vunpack.c.l.b16 %v549
      %v2521 = vunpack.c.h.b16 %v549
      %v2522 = vunpack.c.l.b16 %v550
      %v2523 = vunpack.c.h.b16 %v550
      %v2524 = vunpack.c.l.b16 %v551
      %v2525 = vunpack.c.h.b16 %v551
      %v2526 = vunpack.c.l.b16 %v552
      %v2527 = vunpack.c.h.b16 %v552
      %v2528 = vunpack.c.l.b16 %v553
      %v2529 = vunpack.c.h.b16 %v553
      %v2530 = vunpack.c.l.b16 %v554
      %v2531 = vunpack.c.h.b16 %v554
      %v2532 = vunpack.c.l.b16 %v555
      %v2533 = vunpack.c.h.b16 %v555
      %v2534 = vunpack.c.l.b16 %v556
      %v2535 = vunpack.c.h.b16 %v556
      %v2536 = vunpack.c.l.b16 %v557
      %v2537 = vunpack.c.h.b16 %v557
      %v2538 = vunpack.c.l.b16 %v558
      %v2539 = vunpack.c.h.b16 %v558
      %v2540 = vunpack.c.l.b16 %v559
      %v2541 = vunpack.c.h.b16 %v559
      %v2542 = vunpack.c.l.b16 %v560
      %v2543 = vunpack.c.h.b16 %v560
      %v2544 = vunpack.c.l.b16 %v561
      %v2545 = vunpack.c.h.b16 %v561
      %v2546 = vunpack.c.l.b16 %v562
      %v2547 = vunpack.c.h.b16 %v562
      %v2548 = vunpack.c.l.b16 %v563
      %v2549 = vunpack.c.h.b16 %v563
      %v2550 = vunpack.c.l.b16 %v564
      %v2551 = vunpack.c.h.b16 %v564
      %v2552 = vunpack.c.l.b16 %v565
      %v2553 = vunpack.c.h.b16 %v565
      %v2554 = vunpack.c.l.b16 %v566
      %v2555 = vunpack.c.h.b16 %v566
      %v2556 = vunpack.c.l.b16 %v567
      %v2557 = vunpack.c.h.b16 %v567
      %v2558 = vunpack.c.l.b16 %v568
      %v2559 = vunpack.c.h.b16 %v568
      %v2560 = vunpack.c.l.b16 %v569
      %v2561 = vunpack.c.h.b16 %v569
      %v2562 = vunpack.c.l.b16 %v570
      %v2563 = vunpack.c.h.b16 %v570
      %v2564 = vunpack.c.l.b16 %v571
      %v2565 = vunpack.c.h.b16 %v571
      %v2566 = vunpack.c.l.b16 %v572
      %v2567 = vunpack.c.h.b16 %v572
      %v2568 = vunpack.c.l.b16 %v573
      %v2569 = vunpack.c.h.b16 %v573
      %v2570 = vunpack.c.l.b16 %v574
      %v2571 = vunpack.c.h.b16 %v574
      %v2572 = vunpack.c.l.b16 %v575
      %v2573 = vunpack.c.h.b16 %v575
      %v2574 = vunpack.c.l.b16 %v576
      %v2575 = vunpack.c.h.b16 %v576
      %v2576 = vunpack.c.l.b16 %v577
      %v2577 = vunpack.c.h.b16 %v577
      %v2578 = vunpack.c.l.b16 %v578
      %v2579 = vunpack.c.h.b16 %v578
      %v2580 = vunpack.c.l.b16 %v579
      %v2581 = vunpack.c.h.b16 %v579
      %v2582 = vunpack.c.l.b16 %v580
      %v2583 = vunpack.c.h.b16 %v580
      %v2584 = vunpack.c.l.b16 %v581
      %v2585 = vunpack.c.h.b16 %v581
      %v2586 = vunpack.c.l.b16 %v582
      %v2587 = vunpack.c.h.b16 %v582
      %v2588 = vunpack.c.l.b16 %v583
      %v2589 = vunpack.c.h.b16 %v583
      %v2590 = vunpack.c.l.b16 %v584
      %v2591 = vunpack.c.h.b16 %v584
      %v2592 = vunpack.c.l.b16 %v585
      %v2593 = vunpack.c.h.b16 %v585
      %v2594 = vunpack.c.l.b16 %v586
      %v2595 = vunpack.c.h.b16 %v586
      %v2596 = vunpack.c.l.b16 %v587
      %v2597 = vunpack.c.h.b16 %v587
      %v2598 = vunpack.c.l.b16 %v588
      %v2599 = vunpack.c.h.b16 %v588
      %v2600 = vunpack.c.l.b16 %v589
      %v2601 = vunpack.c.h.b16 %v589
      %v2602 = vunpack.c.l.b16 %v590
      %v2603 = vunpack.c.h.b16 %v590
      %v2604 = vunpack.c.l.b16 %v591
      %v2605 = vunpack.c.h.b16 %v591
      %v2606 = vunpack.c.l.b16 %v592
      %v2607 = vunpack.c.h.b16 %v592
      %v2608 = vunpack.c.l.b16 %v593
      %v2609 = vunpack.c.h.b16 %v593
      %v2610 = vunpack.c.l.b16 %v594
      %v2611 = vunpack.c.h.b16 %v594
      %v2612 = vunpack.c.l.b16 %v595
      %v2613 = vunpack.c.h.b16 %v595
      %v2614 = vunpack.c.l.b16 %v596
      %v2615 = vunpack.c.h.b16 %v596
      %v2616 = vunpack.c.l.b16 %v597
      %v2617 = vunpack.c.h.b16 %v597
      %v2618 = vunpack.c.l.b16 %v598
      %v2619 = vunpack.c.h.b16 %v598
      %v2620 = vunpack.c.l.b16 %v599
      %v2621 = vunpack.c.h.b16 %v599
      %v2622 = vunpack.c.l.b16 %v600
      %v2623 = vunpack.c.h.b16 %v600
      %v2624 = vunpack.c.l.b16 %v601
      %v2625 = vunpack.c.h.b16 %v601
      %v2626 = vunpack.c.l.b16 %v602
      %v2627 = vunpack.c.h.b16 %v602
      %v2628 = vunpack.c.l.b16 %v603
      %v2629 = vunpack.c.h.b16 %v603
      %v2630 = vunpack.c.l.b16 %v604
      %v2631 = vunpack.c.h.b16 %v604
      %v2632 = vunpack.c.l.b16 %v605
      %v2633 = vunpack.c.h.b16 %v605
      %v2634 = vunpack.c.l.b16 %v606
      %v2635 = vunpack.c.h.b16 %v606
      %v2636 = vunpack.c.l.b16 %v607
      %v2637 = vunpack.c.h.b16 %v607
      %v2638 = vunpack.c.l.b16 %v608
      %v2639 = vunpack.c.h.b16 %v608
      %v2640 = vunpack.c.l.b16 %v609
      %v2641 = vunpack.c.h.b16 %v609
      %v2642 = vunpack.c.l.b16 %v610
      %v2643 = vunpack.c.h.b16 %v610
      %v2644 = vunpack.c.l.b16 %v611
      %v2645 = vunpack.c.h.b16 %v611
      %v2646 = vunpack.c.l.b16 %v612
      %v2647 = vunpack.c.h.b16 %v612
      %v2648 = vunpack.c.l.b16 %v613
      %v2649 = vunpack.c.h.b16 %v613
      %v2650 = vunpack.c.l.b16 %v614
      %v2651 = vunpack.c.h.b16 %v614
      %v2652 = vunpack.c.l.b16 %v615
      %v2653 = vunpack.c.h.b16 %v615
      %v2654 = vunpack.c.l.b16 %v616
      %v2655 = vunpack.c.h.b16 %v616
      %v2656 = vunpack.c.l.b16 %v617
      %v2657 = vunpack.c.h.b16 %v617
      %v2658 = vunpack.c.l.b16 %v618
      %v2659 = vunpack.c.h.b16 %v618
      %v2660 = vunpack.c.l.b16 %v619
      %v2661 = vunpack.c.h.b16 %v619
      %v2662 = vunpack.c.l.b16 %v620
      %v2663 = vunpack.c.h.b16 %v620
      %v2664 = vunpack.c.l.b16 %v621
      %v2665 = vunpack.c.h.b16 %v621
      %v2666 = vunpack.c.l.b16 %v622
      %v2667 = vunpack.c.h.b16 %v622
      %v2668 = vunpack.c.l.b16 %v623
      %v2669 = vunpack.c.h.b16 %v623
      %v2670 = vunpack.c.l.b16 %v624
      %v2671 = vunpack.c.h.b16 %v624
      %v2672 = vunpack.c.l.b16 %v625
      %v2673 = vunpack.c.h.b16 %v625
      %v2674 = vunpack.c.l.b16 %v626
      %v2675 = vunpack.c.h.b16 %v626
      %v2676 = vunpack.c.l.b16 %v627
      %v2677 = vunpack.c.h.b16 %v627
      %v2678 = vunpack.c.l.b16 %v628
      %v2679 = vunpack.c.h.b16 %v628
      %v2680 = vunpack.c.l.b16 %v629
      %v2681 = vunpack.c.h.b16 %v629
      %v2682 = vunpack.c.l.b16 %v630
      %v2683 = vunpack.c.h.b16 %v630
      %v2684 = vunpack.c.l.b16 %v631
      %v2685 = vunpack.c.h.b16 %v631
      %v2686 = vunpack.c.l.b16 %v632
      %v2687 = vunpack.c.h.b16 %v632
      %v2688 = vunpack.c.l.b16 %v633
      %v2689 = vunpack.c.h.b16 %v633
      %v2690 = vunpack.c.l.b16 %v634
      %v2691 = vunpack.c.h.b16 %v634
      %v2692 = vunpack.c.l.b16 %v635
      %v2693 = vunpack.c.h.b16 %v635
      %v2694 = vunpack.c.l.b16 %v636
      %v2695 = vunpack.c.h.b16 %v636
      %v2696 = vunpack.c.l.b16 %v637
      %v2697 = vunpack.c.h.b16 %v637
      %v2698 = vunpack.c.l.b16 %v638
      %v2699 = vunpack.c.h.b16 %v638
      %v2700 = vunpack.c.l.b16 %v639
      %v2701 = vunpack.c.h.b16 %v639
      %v2702 = vunpack.c.l.b16 %v640
      %v2703 = vunpack.c.h.b16 %v640
      %v2704 = vunpack.c.l.b16 %v641
      %v2705 = vunpack.c.h.b16 %v641
      %v2706 = vunpack.c.l.b16 %v642
      %v2707 = vunpack.c.h.b16 %v642
      %v2708 = vunpack.c.l.b16 %v643
      %v2709 = vunpack.c.h.b16 %v643
      %v2710 = vunpack.c.l.b16 %v644
      %v2711 = vunpack.c.h.b16 %v644
      %v2712 = vunpack.c.l.b16 %v645
      %v2713 = vunpack.c.h.b16 %v645
      %v2714 = vunpack.c.l.b16 %v646
      %v2715 = vunpack.c.h.b16 %v646
      %v2716 = vunpack.c.l.b16 %v647
      %v2717 = vunpack.c.h.b16 %v647
      %v2718 = vunpack.c.l.b16 %v648
      %v2719 = vunpack.c.h.b16 %v648
      %v2720 = vunpack.c.l.b16 %v649
      %v2721 = vunpack.c.h.b16 %v649
      %v2722 = vunpack.c.l.b16 %v650
      %v2723 = vunpack.c.h.b16 %v650
      %v2724 = vunpack.c.l.b16 %v651
      %v2725 = vunpack.c.h.b16 %v651
      %v2726 = vunpack.c.l.b16 %v652
      %v2727 = vunpack.c.h.b16 %v652
      %v2728 = vunpack.c.l.b16 %v653
      %v2729 = vunpack.c.h.b16 %v653
      %v2730 = vunpack.c.l.b16 %v654
      %v2731 = vunpack.c.h.b16 %v654
      %v2732 = vunpack.c.l.b16 %v655
      %v2733 = vunpack.c.h.b16 %v655
      %v2734 = vunpack.c.l.b16 %v656
      %v2735 = vunpack.c.h.b16 %v656
      %v2736 = vunpack.c.l.b16 %v657
      %v2737 = vunpack.c.h.b16 %v657
      %v2738 = vunpack.c.l.b16 %v658
      %v2739 = vunpack.c.h.b16 %v658
      %v2740 = vunpack.c.l.b16 %v659
      %v2741 = vunpack.c.h.b16 %v659
      %v2742 = vunpack.c.l.b16 %v660
      %v2743 = vunpack.c.h.b16 %v660
      %v2744 = vunpack.c.l.b16 %v661
      %v2745 = vunpack.c.h.b16 %v661
      %v2746 = vunpack.c.l.b16 %v662
      %v2747 = vunpack.c.h.b16 %v662
      %v2748 = vunpack.c.l.b16 %v663
      %v2749 = vunpack.c.h.b16 %v663
      %v2750 = vunpack.c.l.b16 %v664
      %v2751 = vunpack.c.h.b16 %v664
      %v2752 = vunpack.c.l.b16 %v665
      %v2753 = vunpack.c.h.b16 %v665
      %v2754 = vunpack.c.l.b16 %v666
      %v2755 = vunpack.c.h.b16 %v666
      %v2756 = vunpack.c.l.b16 %v667
      %v2757 = vunpack.c.h.b16 %v667
      %v2758 = vunpack.c.l.b16 %v668
      %v2759 = vunpack.c.h.b16 %v668
      %v2760 = vunpack.c.l.b16 %v669
      %v2761 = vunpack.c.h.b16 %v669
      %v2762 = vunpack.c.l.b16 %v670
      %v2763 = vunpack.c.h.b16 %v670
      %v2764 = vunpack.c.l.b16 %v671
      %v2765 = vunpack.c.h.b16 %v671
      %v2766 = vunpack.c.l.b16 %v672
      %v2767 = vunpack.c.h.b16 %v672
      %v2768 = vunpack.c.l.b16 %v673
      %v2769 = vunpack.c.h.b16 %v673
      %v2770 = vunpack.c.l.b16 %v674
      %v2771 = vunpack.c.h.b16 %v674
      %v2772 = vunpack.c.l.b16 %v675
      %v2773 = vunpack.c.h.b16 %v675
      %v2774 = vunpack.c.l.b16 %v676
      %v2775 = vunpack.c.h.b16 %v676
      %v2776 = vunpack.c.l.b16 %v677
      %v2777 = vunpack.c.h.b16 %v677
      %v2778 = vunpack.c.l.b16 %v678
      %v2779 = vunpack.c.h.b16 %v678
      %v2780 = vunpack.c.l.b16 %v679
      %v2781 = vunpack.c.h.b16 %v679
      %v2782 = vunpack.c.l.b16 %v680
      %v2783 = vunpack.c.h.b16 %v680
      %v2784 = vunpack.c.l.b16 %v681
      %v2785 = vunpack.c.h.b16 %v681
      %v2786 = vunpack.c.l.b16 %v682
      %v2787 = vunpack.c.h.b16 %v682
      %v2788 = vunpack.c.l.b16 %v683
      %v2789 = vunpack.c.h.b16 %v683
      %v2790 = vunpack.c.l.b16 %v684
      %v2791 = vunpack.c.h.b16 %v684
      %v2792 = vunpack.c.l.b16 %v685
      %v2793 = vunpack.c.h.b16 %v685
      %v2794 = vunpack.c.l.b16 %v686
      %v2795 = vunpack.c.h.b16 %v686
      %v2796 = vunpack.c.l.b16 %v687
      %v2797 = vunpack.c.h.b16 %v687
      %v2798 = vunpack.c.l.b16 %v688
      %v2799 = vunpack.c.h.b16 %v688
      %v2800 = vunpack.c.l.b16 %v689
      %v2801 = vunpack.c.h.b16 %v689
      %v2802 = vunpack.c.l.b16 %v690
      %v2803 = vunpack.c.h.b16 %v690
      %v2804 = vunpack.c.l.b16 %v691
      %v2805 = vunpack.c.h.b16 %v691
      %v2806 = vunpack.c.l.b16 %v692
      %v2807 = vunpack.c.h.b16 %v692
      %v2808 = vunpack.c.l.b16 %v693
      %v2809 = vunpack.c.h.b16 %v693
      %v2810 = vunpack.c.l.b16 %v694
      %v2811 = vunpack.c.h.b16 %v694
      %v2812 = vunpack.c.l.b16 %v695
      %v2813 = vunpack.c.h.b16 %v695
      %v2814 = vunpack.c.l.b16 %v696
      %v2815 = vunpack.c.h.b16 %v696
      %v2816 = vunpack.c.l.b16 %v697
      %v2817 = vunpack.c.h.b16 %v697
      %v2818 = vunpack.c.l.b16 %v698
      %v2819 = vunpack.c.h.b16 %v698
      %v2820 = vunpack.c.l.b16 %v699
      %v2821 = vunpack.c.h.b16 %v699
      %v2822 = vunpack.c.l.b16 %v700
      %v2823 = vunpack.c.h.b16 %v700
      %v2824 = vunpack.c.l.b16 %v701
      %v2825 = vunpack.c.h.b16 %v701
      %v2826 = vunpack.c.l.b16 %v702
      %v2827 = vunpack.c.h.b16 %v702
      %v2828 = vunpack.c.l.b16 %v703
      %v2829 = vunpack.c.h.b16 %v703
      %v2830 = vunpack.c.l.b16 %v704
      %v2831 = vunpack.c.h.b16 %v704
      %v2832 = vunpack.c.l.b16 %v705
      %v2833 = vunpack.c.h.b16 %v705
      %v2834 = vunpack.c.l.b16 %v706
      %v2835 = vunpack.c.h.b16 %v706
      %v2836 = vunpack.c.l.b16 %v707
      %v2837 = vunpack.c.h.b16 %v707
      %v2838 = vunpack.c.l.b16 %v708
      %v2839 = vunpack.c.h.b16 %v708
      %v2840 = vunpack.c.l.b16 %v709
      %v2841 = vunpack.c.h.b16 %v709
      %v2842 = vunpack.c.l.b16 %v710
      %v2843 = vunpack.c.h.b16 %v710
      %v2844 = vunpack.c.l.b16 %v711
      %v2845 = vunpack.c.h.b16 %v711
      %v2846 = vunpack.c.l.b16 %v712
      %v2847 = vunpack.c.h.b16 %v712
      %v2848 = vunpack.c.l.b16 %v713
      %v2849 = vunpack.c.h.b16 %v713
      %v2850 = vunpack.c.l.b16 %v714
      %v2851 = vunpack.c.h.b16 %v714
      %v2852 = vunpack.c.l.b16 %v715
      %v2853 = vunpack.c.h.b16 %v715
      %v2854 = vunpack.c.l.b16 %v716
      %v2855 = vunpack.c.h.b16 %v716
      %v2856 = vunpack.c.l.b16 %v717
      %v2857 = vunpack.c.h.b16 %v717
      %v2858 = vunpack.c.l.b16 %v718
      %v2859 = vunpack.c.h.b16 %v718
      %v2860 = vunpack.c.l.b16 %v719
      %v2861 = vunpack.c.h.b16 %v719
      %v2862 = vunpack.c.l.b16 %v720
      %v2863 = vunpack.c.h.b16 %v720
      %v2864 = vunpack.c.l.b16 %v721
      %v2865 = vunpack.c.h.b16 %v721
      %v2866 = vunpack.c.l.b16 %v722
      %v2867 = vunpack.c.h.b16 %v722
      %v2868 = vunpack.c.l.b16 %v723
      %v2869 = vunpack.c.h.b16 %v723
      %v2870 = vunpack.c.l.b16 %v724
      %v2871 = vunpack.c.h.b16 %v724
      %v2872 = vunpack.c.l.b16 %v725
      %v2873 = vunpack.c.h.b16 %v725
      %v2874 = vunpack.c.l.b16 %v726
      %v2875 = vunpack.c.h.b16 %v726
      %v2876 = vunpack.c.l.b16 %v727
      %v2877 = vunpack.c.h.b16 %v727
      %v2878 = vunpack.c.l.b16 %v728
      %v2879 = vunpack.c.h.b16 %v728
      %v2880 = vunpack.c.l.b16 %v729
      %v2881 = vunpack.c.h.b16 %v729
      %v2882 = vunpack.c.l.b16 %v730
      %v2883 = vunpack.c.h.b16 %v730
      %v2884 = vunpack.c.l.b16 %v731
      %v2885 = vunpack.c.h.b16 %v731
      %v2886 = vunpack.c.l.b16 %v732
      %v2887 = vunpack.c.h.b16 %v732
      %v2888 = vunpack.c.l.b16 %v733
      %v2889 = vunpack.c.h.b16 %v733
      %v2890 = vunpack.c.l.b16 %v734
      %v2891 = vunpack.c.h.b16 %v734
      %v2892 = vunpack.c.l.b16 %v735
      %v2893 = vunpack.c.h.b16 %v735
      %v2894 = vunpack.c.l.b16 %v736
      %v2895 = vunpack.c.h.b16 %v736
      %v2896 = vunpack.c.l.b16 %v737
      %v2897 = vunpack.c.h.b16 %v737
      %v2898 = vunpack.c.l.b16 %v738
      %v2899 = vunpack.c.h.b16 %v738
      %v2900 = vunpack.c.l.b16 %v739
      %v2901 = vunpack.c.h.b16 %v739
      %v2902 = vunpack.c.l.b16 %v740
      %v2903 = vunpack.c.h.b16 %v740
      %v2904 = vunpack.c.l.b16 %v741
      %v2905 = vunpack.c.h.b16 %v741
      %v2906 = vunpack.c.l.b16 %v742
      %v2907 = vunpack.c.h.b16 %v742
      %v2908 = vunpack.c.l.b16 %v743
      %v2909 = vunpack.c.h.b16 %v743
      %v2910 = vunpack.c.l.b16 %v744
      %v2911 = vunpack.c.h.b16 %v744
      %v2912 = vunpack.c.l.b16 %v745
      %v2913 = vunpack.c.h.b16 %v745
      %v2914 = vunpack.c.l.b16 %v746
      %v2915 = vunpack.c.h.b16 %v746
      %v2916 = vunpack.c.l.b16 %v747
      %v2917 = vunpack.c.h.b16 %v747
      %v2918 = vunpack.c.l.b16 %v748
      %v2919 = vunpack.c.h.b16 %v748
      %v2920 = vunpack.c.l.b16 %v749
      %v2921 = vunpack.c.h.b16 %v749
      %v2922 = vunpack.c.l.b16 %v750
      %v2923 = vunpack.c.h.b16 %v750
      %v2924 = vunpack.c.l.b16 %v751
      %v2925 = vunpack.c.h.b16 %v751
      %v2926 = vunpack.c.l.b16 %v752
      %v2927 = vunpack.c.h.b16 %v752
      %v2928 = vunpack.c.l.b16 %v753
      %v2929 = vunpack.c.h.b16 %v753
      %v2930 = vunpack.c.l.b16 %v754
      %v2931 = vunpack.c.h.b16 %v754
      %v2932 = vunpack.c.l.b16 %v755
      %v2933 = vunpack.c.h.b16 %v755
      %v2934 = vunpack.c.l.b16 %v756
      %v2935 = vunpack.c.h.b16 %v756
      %v2936 = vunpack.c.l.b16 %v757
      %v2937 = vunpack.c.h.b16 %v757
      %v2938 = vunpack.c.l.b16 %v758
      %v2939 = vunpack.c.h.b16 %v758
      %v2940 = vunpack.c.l.b16 %v759
      %v2941 = vunpack.c.h.b16 %v759
      %v2942 = vunpack.c.l.b16 %v760
      %v2943 = vunpack.c.h.b16 %v760
      %v2944 = vunpack.c.l.b16 %v761
      %v2945 = vunpack.c.h.b16 %v761
      %v2946 = vunpack.c.l.b16 %v762
      %v2947 = vunpack.c.h.b16 %v762
      %v2948 = vunpack.c.l.b16 %v763
      %v2949 = vunpack.c.h.b16 %v763
      %v2950 = vunpack.c.l.b16 %v764
      %v2951 = vunpack.c.h.b16 %v764
      %v2952 = vunpack.c.l.b16 %v765
      %v2953 = vunpack.c.h.b16 %v765
      %v2954 = vunpack.c.l.b16 %v766
      %v2955 = vunpack.c.h.b16 %v766
      %v2956 = vunpack.c.l.b16 %v767
      %v2957 = vunpack.c.h.b16 %v767
      %v2958 = vunpack.c.l.b16 %v768
      %v2959 = vunpack.c.h.b16 %v768
      %v2960 = vunpack.c.l.b16 %v769
      %v2961 = vunpack.c.h.b16 %v769
      %v2962 = vunpack.c.l.b16 %v770
      %v2963 = vunpack.c.h.b16 %v770
      %v2964 = vunpack.c.l.b16 %v771
      %v2965 = vunpack.c.h.b16 %v771
      %v2966 = vunpack.c.l.b16 %v772
      %v2967 = vunpack.c.h.b16 %v772
      %v2968 = vunpack.c.l.b16 %v773
      %v2969 = vunpack.c.h.b16 %v773
      %v2970 = vunpack.c.l.b16 %v774
      %v2971 = vunpack.c.h.b16 %v774
      %v2972 = vunpack.c.l.b16 %v775
      %v2973 = vunpack.c.h.b16 %v775
      %v2974 = vunpack.c.l.b16 %v776
      %v2975 = vunpack.c.h.b16 %v776
      %v2976 = vunpack.c.l.b16 %v777
      %v2977 = vunpack.c.h.b16 %v777
      %v2978 = vunpack.c.l.b16 %v778
      %v2979 = vunpack.c.h.b16 %v778
      %v2980 = vunpack.c.l.b16 %v779
      %v2981 = vunpack.c.h.b16 %v779
      %v2982 = vunpack.c.l.b16 %v780
      %v2983 = vunpack.c.h.b16 %v780
      %v2984 = vunpack.c.l.b16 %v781
      %v2985 = vunpack.c.h.b16 %v781
      %v2986 = vunpack.c.l.b16 %v782
      %v2987 = vunpack.c.h.b16 %v782
      %v2988 = vunpack.c.l.b16 %v783
      %v2989 = vunpack.c.h.b16 %v783
      %v2990 = vunpack.c.l.b16 %v784
      %v2991 = vunpack.c.h.b16 %v784
      %v2992 = vunpack.c.l.b16 %v785
      %v2993 = vunpack.c.h.b16 %v785
      %v2994 = vunpack.c.l.b16 %v786
      %v2995 = vunpack.c.h.b16 %v786
      %v2996 = vunpack.c.l.b16 %v787
      %v2997 = vunpack.c.h.b16 %v787
      %v2998 = vunpack.c.l.b16 %v788
      %v2999 = vunpack.c.h.b16 %v788
      %v3000 = vunpack.c.l.b16 %v789
      %v3001 = vunpack.c.h.b16 %v789
      %v3002 = vunpack.c.l.b16 %v790
      %v3003 = vunpack.c.h.b16 %v790
      %v3004 = vunpack.c.l.b16 %v791
      %v3005 = vunpack.c.h.b16 %v791
      %v3006 = vunpack.c.l.b16 %v792
      %v3007 = vunpack.c.h.b16 %v792
      %v3008 = vunpack.c.l.b16 %v793
      %v3009 = vunpack.c.h.b16 %v793
      %v3010 = vunpack.c.l.b16 %v794
      %v3011 = vunpack.c.h.b16 %v794
      %v3012 = vunpack.c.l.b16 %v795
      %v3013 = vunpack.c.h.b16 %v795
      %v3014 = vunpack.c.l.b16 %v796
      %v3015 = vunpack.c.h.b16 %v796
      %v3016 = vunpack.c.l.b16 %v797
      %v3017 = vunpack.c.h.b16 %v797
      %v3018 = vunpack.c.l.b16 %v798
      %v3019 = vunpack.c.h.b16 %v798
      %v3020 = vunpack.c.l.b16 %v799
      %v3021 = vunpack.c.h.b16 %v799
      %v3022 = vunpack.c.l.b16 %v800
      %v3023 = vunpack.c.h.b16 %v800
      %v3024 = vunpack.c.l.b16 %v801
      %v3025 = vunpack.c.h.b16 %v801
      %v3026 = vunpack.c.l.b16 %v802
      %v3027 = vunpack.c.h.b16 %v802
      %v3028 = vunpack.c.l.b16 %v803
      %v3029 = vunpack.c.h.b16 %v803
      %v3030 = vunpack.c.l.b16 %v804
      %v3031 = vunpack.c.h.b16 %v804
      %v3032 = vunpack.c.l.b16 %v805
      %v3033 = vunpack.c.h.b16 %v805
      %v3034 = vunpack.c.l.b16 %v806
      %v3035 = vunpack.c.h.b16 %v806
      %v3036 = vunpack.c.l.b16 %v807
      %v3037 = vunpack.c.h.b16 %v807
      %v3038 = vunpack.c.l.b16 %v808
      %v3039 = vunpack.c.h.b16 %v808
      %v3040 = vunpack.c.l.b16 %v809
      %v3041 = vunpack.c.h.b16 %v809
      %v3042 = vunpack.c.l.b16 %v810
      %v3043 = vunpack.c.h.b16 %v810
      %v3044 = vunpack.c.l.b16 %v811
      %v3045 = vunpack.c.h.b16 %v811
      %v3046 = vunpack.c.l.b16 %v812
      %v3047 = vunpack.c.h.b16 %v812
      %v3048 = vunpack.c.l.b16 %v813
      %v3049 = vunpack.c.h.b16 %v813
      %v3050 = vunpack.c.l.b16 %v814
      %v3051 = vunpack.c.h.b16 %v814
      %v3052 = vunpack.c.l.b16 %v815
      %v3053 = vunpack.c.h.b16 %v815
      %v3054 = vunpack.c.l.b16 %v816
      %v3055 = vunpack.c.h.b16 %v816
      %v3056 = vunpack.c.l.b16 %v817
      %v3057 = vunpack.c.h.b16 %v817
      %v3058 = vunpack.c.l.b16 %v818
      %v3059 = vunpack.c.h.b16 %v818
      %v3060 = vunpack.c.l.b16 %v819
      %v3061 = vunpack.c.h.b16 %v819
      %v3062 = vunpack.c.l.b16 %v820
      %v3063 = vunpack.c.h.b16 %v820
      %v3064 = vunpack.c.l.b16 %v821
      %v3065 = vunpack.c.h.b16 %v821
      %v3066 = vunpack.c.l.b16 %v822
      %v3067 = vunpack.c.h.b16 %v822
      %v3068 = vunpack.c.l.b16 %v823
      %v3069 = vunpack.c.h.b16 %v823
      %v3070 = vunpack.c.l.b16 %v824
      %v3071 = vunpack.c.h.b16 %v824
      %v3072 = vunpack.c.l.b16 %v825
      %v3073 = vunpack.c.h.b16 %v825
      %v3074 = vunpack.c.l.b16 %v826
      %v3075 = vunpack.c.h.b16 %v826
      %v3076 = vunpack.c.l.b16 %v827
      %v3077 = vunpack.c.h.b16 %v827
      %v3078 = vunpack.c.l.b16 %v828
      %v3079 = vunpack.c.h.b16 %v828
      %v3080 = vunpack.c.l.b16 %v829
      %v3081 = vunpack.c.h.b16 %v829
      %v3082 = vunpack.c.l.b16 %v830
      %v3083 = vunpack.c.h.b16 %v830
      %v3084 = vunpack.c.l.b16 %v831
      %v3085 = vunpack.c.h.b16 %v831
      %v3086 = vunpack.c.l.b16 %v832
      %v3087 = vunpack.c.h.b16 %v832
      %v3088 = vunpack.c.l.b16 %v833
      %v3089 = vunpack.c.h.b16 %v833
      %v3090 = vunpack.c.l.b16 %v834
      %v3091 = vunpack.c.h.b16 %v834
      %v3092 = vunpack.c.l.b16 %v835
      %v3093 = vunpack.c.h.b16 %v835
      %v3094 = vunpack.c.l.b16 %v836
      %v3095 = vunpack.c.h.b16 %v836
      %v3096 = vunpack.c.l.b16 %v837
      %v3097 = vunpack.c.h.b16 %v837
      %v3098 = vunpack.c.l.b16 %v838
      %v3099 = vunpack.c.h.b16 %v838
      %v3100 = vunpack.c.l.b16 %v839
      %v3101 = vunpack.c.h.b16 %v839
      %v3102 = vunpack.c.l.b16 %v840
      %v3103 = vunpack.c.h.b16 %v840
      %v3104 = vunpack.c.l.b16 %v841
      %v3105 = vunpack.c.h.b16 %v841
      %v3106 = vunpack.c.l.b16 %v842
      %v3107 = vunpack.c.h.b16 %v842
      %v3108 = vunpack.c.l.b16 %v843
      %v3109 = vunpack.c.h.b16 %v843
      %v3110 = vunpack.c.l.b16 %v844
      %v3111 = vunpack.c.h.b16 %v844
      %v3112 = vunpack.c.l.b16 %v845
      %v3113 = vunpack.c.h.b16 %v845
      %v3114 = vunpack.c.l.b16 %v846
      %v3115 = vunpack.c.h.b16 %v846
      %v3116 = vunpack.c.l.b16 %v847
      %v3117 = vunpack.c.h.b16 %v847
      %v3118 = vunpack.c.l.b16 %v848
      %v3119 = vunpack.c.h.b16 %v848
      %v3120 = vunpack.c.l.b16 %v849
      %v3121 = vunpack.c.h.b16 %v849
      %v3122 = vunpack.c.l.b16 %v850
      %v3123 = vunpack.c.h.b16 %v850
      %v3124 = vunpack.c.l.b16 %v851
      %v3125 = vunpack.c.h.b16 %v851
      %v3126 = vunpack.c.l.b16 %v852
      %v3127 = vunpack.c.h.b16 %v852
      %v3128 = vunpack.c.l.b16 %v853
      %v3129 = vunpack.c.h.b16 %v853
      %v3130 = vunpack.c.l.b16 %v854
      %v3131 = vunpack.c.h.b16 %v854
      %v3132 = vunpack.c.l.b16 %v855
      %v3133 = vunpack.c.h.b16 %v855
      %v3134 = vunpack.c.l.b16 %v856
      %v3135 = vunpack.c.h.b16 %v856
      %v3136 = vunpack.c.l.b16 %v857
      %v3137 = vunpack.c.h.b16 %v857
      %v3138 = vunpack.c.l.b16 %v858
      %v3139 = vunpack.c.h.b16 %v858
      %v3140 = vunpack.c.l.b16 %v859
      %v3141 = vunpack.c.h.b16 %v859
      %v3142 = vunpack.c.l.b16 %v860
      %v3143 = vunpack.c.h.b16 %v860
      %v3144 = vunpack.c.l.b16 %v861
      %v3145 = vunpack.c.h.b16 %v861
      %v3146 = vunpack.c.l.b16 %v862
      %v3147 = vunpack.c.h.b16 %v862
      %v3148 = vunpack.c.l.b16 %v863
      %v3149 = vunpack.c.h.b16 %v863
      %v3150 = vunpack.c.l.b16 %v864
      %v3151 = vunpack.c.h.b16 %v864
      %v3152 = vunpack.c.l.b16 %v865
      %v3153 = vunpack.c.h.b16 %v865
      %v3154 = vunpack.c.l.b16 %v866
      %v3155 = vunpack.c.h.b16 %v866
      %v3156 = vunpack.c.l.b16 %v867
      %v3157 = vunpack.c.h.b16 %v867
      %v3158 = vunpack.c.l.b16 %v868
      %v3159 = vunpack.c.h.b16 %v868
      %v3160 = vunpack.c.l.b16 %v869
      %v3161 = vunpack.c.h.b16 %v869
      %v3162 = vunpack.c.l.b16 %v870
      %v3163 = vunpack.c.h.b16 %v870
      %v3164 = vunpack.c.l.b16 %v871
      %v3165 = vunpack.c.h.b16 %v871
      %v3166 = vunpack.c.l.b16 %v872
      %v3167 = vunpack.c.h.b16 %v872
      %v3168 = vunpack.c.l.b16 %v873
      %v3169 = vunpack.c.h.b16 %v873
      %v3170 = vunpack.c.l.b16 %v874
      %v3171 = vunpack.c.h.b16 %v874
      %v3172 = vunpack.c.l.b16 %v875
      %v3173 = vunpack.c.h.b16 %v875
      %v3174 = vunpack.c.l.b16 %v876
      %v3175 = vunpack.c.h.b16 %v876
      %v3176 = vunpack.c.l.b16 %v877
      %v3177 = vunpack.c.h.b16 %v877
      %v3178 = vunpack.c.l.b16 %v878
      %v3179 = vunpack.c.h.b16 %v878
      %v3180 = vunpack.c.l.b16 %v879
      %v3181 = vunpack.c.h.b16 %v879
      %v3182 = vunpack.c.l.b16 %v880
      %v3183 = vunpack.c.h.b16 %v880
      %v3184 = vunpack.c.l.b16 %v881
      %v3185 = vunpack.c.h.b16 %v881
      %v3186 = vunpack.c.l.b16 %v882
      %v3187 = vunpack.c.h.b16 %v882
      %v3188 = vunpack.c.l.b16 %v883
      %v3189 = vunpack.c.h.b16 %v883
      %v3190 = vunpack.c.l.b16 %v884
      %v3191 = vunpack.c.h.b16 %v884
      %v3192 = vunpack.c.l.b16 %v885
      %v3193 = vunpack.c.h.b16 %v885
      %v3194 = vunpack.c.l.b16 %v886
      %v3195 = vunpack.c.h.b16 %v886
      %v3196 = vunpack.c.l.b16 %v887
      %v3197 = vunpack.c.h.b16 %v887
      %v3198 = vunpack.c.l.b16 %v888
      %v3199 = vunpack.c.h.b16 %v888
      %v3200 = vunpack.c.l.b16 %v889
      %v3201 = vunpack.c.h.b16 %v889
      %v3202 = vunpack.c.l.b16 %v890
      %v3203 = vunpack.c.h.b16 %v890
      %v3204 = vunpack.c.l.b16 %v891
      %v3205 = vunpack.c.h.b16 %v891
      %v3206 = vunpack.c.l.b16 %v892
      %v3207 = vunpack.c.h.b16 %v892
      %v3208 = vunpack.c.l.b16 %v893
      %v3209 = vunpack.c.h.b16 %v893
      %v3210 = vunpack.c.l.b16 %v894
      %v3211 = vunpack.c.h.b16 %v894
      %v3212 = vunpack.c.l.b16 %v895
      %v3213 = vunpack.c.h.b16 %v895
      %v3214 = vunpack.c.l.b16 %v896
      %v3215 = vunpack.c.h.b16 %v896
      %v3216 = vunpack.c.l.b16 %v897
      %v3217 = vunpack.c.h.b16 %v897
      %v3218 = vunpack.c.l.b16 %v898
      %v3219 = vunpack.c.h.b16 %v898
      %v3220 = vunpack.c.l.b16 %v899
      %v3221 = vunpack.c.h.b16 %v899
      %v3222 = vunpack.c.l.b16 %v900
      %v3223 = vunpack.c.h.b16 %v900
      %v3224 = vunpack.c.l.b16 %v901
      %v3225 = vunpack.c.h.b16 %v901
      %v3226 = vunpack.c.l.b16 %v902
      %v3227 = vunpack.c.h.b16 %v902
      %v3228 = vunpack.c.l.b16 %v903
      %v3229 = vunpack.c.h.b16 %v903
      %v3230 = vunpack.c.l.b16 %v904
      %v3231 = vunpack.c.h.b16 %v904
      %v3232 = vunpack.c.l.b16 %v905
      %v3233 = vunpack.c.h.b16 %v905
      %v3234 = vunpack.c.l.b16 %v906
      %v3235 = vunpack.c.h.b16 %v906
      %v3236 = vunpack.c.l.b16 %v907
      %v3237 = vunpack.c.h.b16 %v907
      %v3238 = vunpack.c.l.b16 %v908
      %v3239 = vunpack.c.h.b16 %v908
      %v3240 = vunpack.c.l.b16 %v909
      %v3241 = vunpack.c.h.b16 %v909
      %v3242 = vunpack.c.l.b16 %v910
      %v3243 = vunpack.c.h.b16 %v910
      %v3244 = vunpack.c.l.b16 %v911
      %v3245 = vunpack.c.h.b16 %v911
      %v3246 = vunpack.c.l.b16 %v912
      %v3247 = vunpack.c.h.b16 %v912
      %v3248 = vunpack.c.l.b16 %v913
      %v3249 = vunpack.c.h.b16 %v913
      %v3250 = vunpack.c.l.b16 %v914
      %v3251 = vunpack.c.h.b16 %v914
      %v3252 = vunpack.c.l.b16 %v915
      %v3253 = vunpack.c.h.b16 %v915
      %v3254 = vunpack.c.l.b16 %v916
      %v3255 = vunpack.c.h.b16 %v916
      %v3256 = vunpack.c.l.b16 %v917
      %v3257 = vunpack.c.h.b16 %v917
      %v3258 = vunpack.c.l.b16 %v918
      %v3259 = vunpack.c.h.b16 %v918
      %v3260 = vunpack.c.l.b16 %v919
      %v3261 = vunpack.c.h.b16 %v919
      %v3262 = vunpack.c.l.b16 %v920
      %v3263 = vunpack.c.h.b16 %v920
      %v3264 = vunpack.c.l.b16 %v921
      %v3265 = vunpack.c.h.b16 %v921
      %v3266 = vunpack.c.l.b16 %v922
      %v3267 = vunpack.c.h.b16 %v922
      %v3268 = vunpack.c.l.b16 %v923
      %v3269 = vunpack.c.h.b16 %v923
      %v3270 = vunpack.c.l.b16 %v924
      %v3271 = vunpack.c.h.b16 %v924
      %v3272 = vunpack.c.l.b16 %v925
      %v3273 = vunpack.c.h.b16 %v925
      %v3274 = vunpack.c.l.b16 %v926
      %v3275 = vunpack.c.h.b16 %v926
      %v3276 = vunpack.c.l.b16 %v927
      %v3277 = vunpack.c.h.b16 %v927
      %v3278 = vunpack.c.l.b16 %v928
      %v3279 = vunpack.c.h.b16 %v928
      %v3280 = vunpack.c.l.b16 %v929
      %v3281 = vunpack.c.h.b16 %v929
      %v3282 = vunpack.c.l.b16 %v930
      %v3283 = vunpack.c.h.b16 %v930
      %v3284 = vunpack.c.l.b16 %v931
      %v3285 = vunpack.c.h.b16 %v931
      %v3286 = vunpack.c.l.b16 %v932
      %v3287 = vunpack.c.h.b16 %v932
      %v3288 = vunpack.c.l.b16 %v933
      %v3289 = vunpack.c.h.b16 %v933
      %v3290 = vunpack.c.l.b16 %v934
      %v3291 = vunpack.c.h.b16 %v934
      %v3292 = vunpack.c.l.b16 %v935
      %v3293 = vunpack.c.h.b16 %v935
      %v3294 = vunpack.c.l.b16 %v936
      %v3295 = vunpack.c.h.b16 %v936
      %v3296 = vunpack.c.l.b16 %v937
      %v3297 = vunpack.c.h.b16 %v937
      %v3298 = vunpack.c.l.b16 %v938
      %v3299 = vunpack.c.h.b16 %v938
      %v3300 = vunpack.c.l.b16 %v939
      %v3301 = vunpack.c.h.b16 %v939
      %v3302 = vunpack.c.l.b16 %v940
      %v3303 = vunpack.c.h.b16 %v940
      %v3304 = vunpack.c.l.b16 %v941
      %v3305 = vunpack.c.h.b16 %v941
      %v3306 = vunpack.c.l.b16 %v942
      %v3307 = vunpack.c.h.b16 %v942
      %v3308 = vunpack.c.l.b16 %v943
      %v3309 = vunpack.c.h.b16 %v943
      %v3310 = vunpack.c.l.b16 %v944
      %v3311 = vunpack.c.h.b16 %v944
      %v3312 = vunpack.c.l.b16 %v945
      %v3313 = vunpack.c.h.b16 %v945
      %v3314 = vunpack.c.l.b16 %v946
      %v3315 = vunpack.c.h.b16 %v946
      %v3316 = vunpack.c.l.b16 %v947
      %v3317 = vunpack.c.h.b16 %v947
      %v3318 = vunpack.c.l.b16 %v948
      %v3319 = vunpack.c.h.b16 %v948
      %v3320 = vunpack.c.l.b16 %v949
      %v3321 = vunpack.c.h.b16 %v949
      %v3322 = vunpack.c.l.b16 %v950
      %v3323 = vunpack.c.h.b16 %v950
      %v3324 = vunpack.c.l.b16 %v951
      %v3325 = vunpack.c.h.b16 %v951
      %v3326 = vunpack.c.l.b16 %v952
      %v3327 = vunpack.c.h.b16 %v952
      %v3328 = vunpack.c.l.b16 %v953
      %v3329 = vunpack.c.h.b16 %v953
      %v3330 = vunpack.c.l.b16 %v954
      %v3331 = vunpack.c.h.b16 %v954
      %v3332 = vunpack.c.l.b16 %v955
      %v3333 = vunpack.c.h.b16 %v955
      %v3334 = vunpack.c.l.b16 %v956
      %v3335 = vunpack.c.h.b16 %v956
      %v3336 = vunpack.c.l.b16 %v957
      %v3337 = vunpack.c.h.b16 %v957
      %v3338 = vunpack.c.l.b16 %v958
      %v3339 = vunpack.c.h.b16 %v958
      %v3340 = vunpack.c.l.b16 %v959
      %v3341 = vunpack.c.h.b16 %v959
      %v3342 = vunpack.c.l.b16 %v960
      %v3343 = vunpack.c.h.b16 %v960
      %v3344 = vunpack.c.l.b16 %v961
      %v3345 = vunpack.c.h.b16 %v961
      %v3346 = vunpack.c.l.b16 %v962
      %v3347 = vunpack.c.h.b16 %v962
      %v3348 = vunpack.c.l.b16 %v963
      %v3349 = vunpack.c.h.b16 %v963
      %v3350 = vunpack.c.l.b16 %v964
      %v3351 = vunpack.c.h.b16 %v964
      %v3352 = vunpack.c.l.b16 %v965
      %v3353 = vunpack.c.h.b16 %v965
      %v3354 = vunpack.c.l.b16 %v966
      %v3355 = vunpack.c.h.b16 %v966
      %v3356 = vunpack.c.l.b16 %v967
      %v3357 = vunpack.c.h.b16 %v967
      %v3358 = vunpack.c.l.b16 %v968
      %v3359 = vunpack.c.h.b16 %v968
      %v3360 = vunpack.c.l.b16 %v969
      %v3361 = vunpack.c.h.b16 %v969
      %v3362 = vunpack.c.l.b16 %v970
      %v3363 = vunpack.c.h.b16 %v970
      %v3364 = vunpack.c.l.b16 %v971
      %v3365 = vunpack.c.h.b16 %v971
      %v3366 = vunpack.c.l.b16 %v972
      %v3367 = vunpack.c.h.b16 %v972
      %v3368 = vunpack.c.l.b16 %v973
      %v3369 = vunpack.c.h.b16 %v973
      %v3370 = vunpack.c.l.b16 %v974
      %v3371 = vunpack.c.h.b16 %v974
      %v3372 = vunpack.c.l.b16 %v975
      %v3373 = vunpack.c.h.b16 %v975
      %v3374 = vunpack.c.l.b16 %v976
      %v3375 = vunpack.c.h.b16 %v976
      %v3376 = vunpack.c.l.b16 %v977
      %v3377 = vunpack.c.h.b16 %v977
      %v3378 = vunpack.c.l.b16 %v978
      %v3379 = vunpack.c.h.b16 %v978
      %v3380 = vunpack.c.l.b16 %v979
      %v3381 = vunpack.c.h.b16 %v979
      %v3382 = vunpack.c.l.b16 %v980
      %v3383 = vunpack.c.h.b16 %v980
      %v3384 = vunpack.c.l.b16 %v981
      %v3385 = vunpack.c.h.b16 %v981
      %v3386 = vunpack.c.l.b16 %v982
      %v3387 = vunpack.c.h.b16 %v982
      %v3388 = vunpack.c.l.b16 %v983
      %v3389 = vunpack.c.h.b16 %v983
      %v3390 = vunpack.c.l.b16 %v984
      %v3391 = vunpack.c.h.b16 %v984
      %v3392 = vunpack.c.l.b16 %v985
      %v3393 = vunpack.c.h.b16 %v985
      %v3394 = vunpack.c.l.b16 %v986
      %v3395 = vunpack.c.h.b16 %v986
      %v3396 = vunpack.c.l.b16 %v987
      %v3397 = vunpack.c.h.b16 %v987
      %v3398 = vunpack.c.l.b16 %v988
      %v3399 = vunpack.c.h.b16 %v988
      %v3400 = vunpack.c.l.b16 %v989
      %v3401 = vunpack.c.h.b16 %v989
      %v3402 = vunpack.c.l.b16 %v990
      %v3403 = vunpack.c.h.b16 %v990
      %v3404 = vunpack.c.l.b16 %v991
      %v3405 = vunpack.c.h.b16 %v991
      %v3406 = vunpack.c.l.b16 %v992
      %v3407 = vunpack.c.h.b16 %v992
      %v3408 = vunpack.c.l.b16 %v993
      %v3409 = vunpack.c.h.b16 %v993
      %v3410 = vunpack.c.l.b16 %v994
      %v3411 = vunpack.c.h.b16 %v994
      %v3412 = vunpack.c.l.b16 %v995
      %v3413 = vunpack.c.h.b16 %v995
      %v3414 = vunpack.c.l.b16 %v996
      %v3415 = vunpack.c.h.b16 %v996
      %v3416 = vunpack.c.l.b16 %v997
      %v3417 = vunpack.c.h.b16 %v997
      %v3418 = vunpack.c.l.b16 %v998
      %v3419 = vunpack.c.h.b16 %v998
      %v3420 = vunpack.c.l.b16 %v999
      %v3421 = vunpack.c.h.b16 %v999
      %v3422 = vunpack.c.l.b16 %v1000
      %v3423 = vunpack.c.h.b16 %v1000
      %v3424 = vunpack.c.l.b16 %v1001
      %v3425 = vunpack.c.h.b16 %v1001
      %v3426 = vunpack.c.l.b16 %v1002
      %v3427 = vunpack.c.h.b16 %v1002
      %v3428 = vunpack.c.l.b16 %v1003
      %v3429 = vunpack.c.h.b16 %v1003
      %v3430 = vunpack.c.l.b16 %v1004
      %v3431 = vunpack.c.h.b16 %v1004
      %v3432 = vunpack.c.l.b16 %v1005
      %v3433 = vunpack.c.h.b16 %v1005
      %v3434 = vunpack.c.l.b16 %v1006
      %v3435 = vunpack.c.h.b16 %v1006
      %v3436 = vunpack.c.l.b16 %v1007
      %v3437 = vunpack.c.h.b16 %v1007
      %v3438 = vunpack.c.l.b16 %v1008
      %v3439 = vunpack.c.h.b16 %v1008
      %v3440 = vunpack.c.l.b16 %v1009
      %v3441 = vunpack.c.h.b16 %v1009
      %v3442 = vunpack.c.l.b16 %v1010
      %v3443 = vunpack.c.h.b16 %v1010
      %v3444 = vunpack.c.l.b16 %v1011
      %v3445 = vunpack.c.h.b16 %v1011
      %v3446 = vunpack.c.l.b16 %v1012
      %v3447 = vunpack.c.h.b16 %v1012
      %v3448 = vunpack.c.l.b16 %v1013
      %v3449 = vunpack.c.h.b16 %v1013
      %v3450 = vunpack.c.l.b16 %v1014
      %v3451 = vunpack.c.h.b16 %v1014
      %v3452 = vunpack.c.l.b16 %v1015
      %v3453 = vunpack.c.h.b16 %v1015
      %v3454 = vunpack.c.l.b16 %v1016
      %v3455 = vunpack.c.h.b16 %v1016
      %v3456 = vunpack.c.l.b16 %v1017
      %v3457 = vunpack.c.h.b16 %v1017
      %v3458 = vunpack.c.l.b16 %v1018
      %v3459 = vunpack.c.h.b16 %v1018
      %v3460 = vunpack.c.l.b16 %v1019
      %v3461 = vunpack.c.h.b16 %v1019
      %v3462 = vunpack.c.l.b16 %v1020
      %v3463 = vunpack.c.h.b16 %v1020
      %v3464 = vunpack.c.l.b16 %v1021
      %v3465 = vunpack.c.h.b16 %v1021
      %v3466 = vunpack.c.l.b16 %v1022
      %v3467 = vunpack.c.h.b16 %v1022
      %v3468 = vunpack.c.l.b16 %v1023
      %v3469 = vunpack.c.h.b16 %v1023
      %v3470 = vpack.c.b16 %v1938, %v1934
      %v3471 = vpack.c.b16 %v1939, %v1935
      %v3472 = vpack.c.b16 %v1940, %v1936
      %v3473 = vpack.c.b16 %v1941, %v1937
      %v3474 = vpack.c.b16 %v1946, %v1942
      %v3475 = vpack.c.b16 %v1947, %v1943
      %v3476 = vpack.c.b16 %v1948, %v1944
      %v3477 = vpack.c.b16 %v1949, %v1945
      %v3478 = vpack.c.b16 %v1954, %v1950
      %v3479 = vpack.c.b16 %v1955, %v1951
      %v3480 = vpack.c.b16 %v1956, %v1952
      %v3481 = vpack.c.b16 %v1957, %v1953
      %v3482 = vpack.c.b16 %v1962, %v1958
      %v3483 = vpack.c.b16 %v1963, %v1959
      %v3484 = vpack.c.b16 %v1964, %v1960
      %v3485 = vpack.c.b16 %v1965, %v1961
      %v3486 = vpack.c.b16 %v1970, %v1966
      %v3487 = vpack.c.b16 %v1971, %v1967
      %v3488 = vpack.c.b16 %v1972, %v1968
      %v3489 = vpack.c.b16 %v1973, %v1969
      %v3490 = vpack.c.b16 %v1978, %v1974
      %v3491 = vpack.c.b16 %v1979, %v1975
      %v3492 = vpack.c.b16 %v1980, %v1976
      %v3493 = vpack.c.b16 %v1981, %v1977
      %v3494 = vpack.c.b16 %v1986, %v1982
      %v3495 = vpack.c.b16 %v1987, %v1983
      %v3496 = vpack.c.b16 %v1988, %v1984
      %v3497 = vpack.c.b16 %v1989, %v1985
      %v3498 = vpack.c.b16 %v1994, %v1990
      %v3499 = vpack.c.b16 %v1995, %v1991
      %v3500 = vpack.c.b16 %v1996, %v1992
      %v3501 = vpack.c.b16 %v1997, %v1993
      %v3502 = vpack.c.b16 %v2002, %v1998
      %v3503 = vpack.c.b16 %v2003, %v1999
      %v3504 = vpack.c.b16 %v2004, %v2000
      %v3505 = vpack.c.b16 %v2005, %v2001
      %v3506 = vpack.c.b16 %v2010, %v2006
      %v3507 = vpack.c.b16 %v2011, %v2007
      %v3508 = vpack.c.b16 %v2012, %v2008
      %v3509 = vpack.c.b16 %v2013, %v2009
      %v3510 = vpack.c.b16 %v2018, %v2014
      %v3511 = vpack.c.b16 %v2019, %v2015
      %v3512 = vpack.c.b16 %v2020, %v2016
      %v3513 = vpack.c.b16 %v2021, %v2017
      %v3514 = vpack.c.b16 %v2026, %v2022
      %v3515 = vpack.c.b16 %v2027, %v2023
      %v3516 = vpack.c.b16 %v2028, %v2024
      %v3517 = vpack.c.b16 %v2029, %v2025
      %v3518 = vpack.c.b16 %v2034, %v2030
      %v3519 = vpack.c.b16 %v2035, %v2031
      %v3520 = vpack.c.b16 %v2036, %v2032
      %v3521 = vpack.c.b16 %v2037, %v2033
      %v3522 = vpack.c.b16 %v2042, %v2038
      %v3523 = vpack.c.b16 %v2043, %v2039
      %v3524 = vpack.c.b16 %v2044, %v2040
      %v3525 = vpack.c.b16 %v2045, %v2041
      %v3526 = vpack.c.b16 %v2050, %v2046
      %v3527 = vpack.c.b16 %v2051, %v2047
      %v3528 = vpack.c.b16 %v2052, %v2048
      %v3529 = vpack.c.b16 %v2053, %v2049
      %v3530 = vpack.c.b16 %v2058, %v2054
      %v3531 = vpack.c.b16 %v2059, %v2055
      %v3532 = vpack.c.b16 %v2060, %v2056
      %v3533 = vpack.c.b16 %v2061, %v2057
      %v3534 = vpack.c.b16 %v2066, %v2062
      %v3535 = vpack.c.b16 %v2067, %v2063
      %v3536 = vpack.c.b16 %v2068, %v2064
      %v3537 = vpack.c.b16 %v2069, %v2065
      %v3538 = vpack.c.b16 %v2074, %v2070
      %v3539 = vpack.c.b16 %v2075, %v2071
      %v3540 = vpack.c.b16 %v2076, %v2072
      %v3541 = vpack.c.b16 %v2077, %v2073
      %v3542 = vpack.c.b16 %v2082, %v2078
      %v3543 = vpack.c.b16 %v2083, %v2079
      %v3544 = vpack.c.b16 %v2084, %v2080
      %v3545 = vpack.c.b16 %v2085, %v2081
      %v3546 = vpack.c.b16 %v2090, %v2086
      %v3547 = vpack.c.b16 %v2091, %v2087
      %v3548 = vpack.c.b16 %v2092, %v2088
      %v3549 = vpack.c.b16 %v2093, %v2089
      %v3550 = vpack.c.b16 %v2098, %v2094
      %v3551 = vpack.c.b16 %v2099, %v2095
      %v3552 = vpack.c.b16 %v2100, %v2096
      %v3553 = vpack.c.b16 %v2101, %v2097
      %v3554 = vpack.c.b16 %v2106, %v2102
      %v3555 = vpack.c.b16 %v2107, %v2103
      %v3556 = vpack.c.b16 %v2108, %v2104
      %v3557 = vpack.c.b16 %v2109, %v2105
      %v3558 = vpack.c.b16 %v2114, %v2110
      %v3559 = vpack.c.b16 %v2115, %v2111
      %v3560 = vpack.c.b16 %v2116, %v2112
      %v3561 = vpack.c.b16 %v2117, %v2113
      %v3562 = vpack.c.b16 %v2122, %v2118
      %v3563 = vpack.c.b16 %v2123, %v2119
      %v3564 = vpack.c.b16 %v2124, %v2120
      %v3565 = vpack.c.b16 %v2125, %v2121
      %v3566 = vpack.c.b16 %v2130, %v2126
      %v3567 = vpack.c.b16 %v2131, %v2127
      %v3568 = vpack.c.b16 %v2132, %v2128
      %v3569 = vpack.c.b16 %v2133, %v2129
      %v3570 = vpack.c.b16 %v2138, %v2134
      %v3571 = vpack.c.b16 %v2139, %v2135
      %v3572 = vpack.c.b16 %v2140, %v2136
      %v3573 = vpack.c.b16 %v2141, %v2137
      %v3574 = vpack.c.b16 %v2146, %v2142
      %v3575 = vpack.c.b16 %v2147, %v2143
      %v3576 = vpack.c.b16 %v2148, %v2144
      %v3577 = vpack.c.b16 %v2149, %v2145
      %v3578 = vpack.c.b16 %v2154, %v2150
      %v3579 = vpack.c.b16 %v2155, %v2151
      %v3580 = vpack.c.b16 %v2156, %v2152
      %v3581 = vpack.c.b16 %v2157, %v2153
      %v3582 = vpack.c.b16 %v2162, %v2158
      %v3583 = vpack.c.b16 %v2163, %v2159
      %v3584 = vpack.c.b16 %v2164, %v2160
      %v3585 = vpack.c.b16 %v2165, %v2161
      %v3586 = vpack.c.b16 %v2170, %v2166
      %v3587 = vpack.c.b16 %v2171, %v2167
      %v3588 = vpack.c.b16 %v2172, %v2168
      %v3589 = vpack.c.b16 %v2173, %v2169
      %v3590 = vpack.c.b16 %v2178, %v2174
      %v3591 = vpack.c.b16 %v2179, %v2175
      %v3592 = vpack.c.b16 %v2180, %v2176
      %v3593 = vpack.c.b16 %v2181, %v2177
      %v3594 = vpack.c.b16 %v2186, %v2182
      %v3595 = vpack.c.b16 %v2187, %v2183
      %v3596 = vpack.c.b16 %v2188, %v2184
      %v3597 = vpack.c.b16 %v2189, %v2185
      %v3598 = vpack.c.b16 %v2194, %v2190
      %v3599 = vpack.c.b16 %v2195, %v2191
      %v3600 = vpack.c.b16 %v2196, %v2192
      %v3601 = vpack.c.b16 %v2197, %v2193
      %v3602 = vpack.c.b16 %v2202, %v2198
      %v3603 = vpack.c.b16 %v2203, %v2199
      %v3604 = vpack.c.b16 %v2204, %v2200
      %v3605 = vpack.c.b16 %v2205, %v2201
      %v3606 = vpack.c.b16 %v2210, %v2206
      %v3607 = vpack.c.b16 %v2211, %v2207
      %v3608 = vpack.c.b16 %v2212, %v2208
      %v3609 = vpack.c.b16 %v2213, %v2209
      %v3610 = vpack.c.b16 %v2218, %v2214
      %v3611 = vpack.c.b16 %v2219, %v2215
      %v3612 = vpack.c.b16 %v2220, %v2216
      %v3613 = vpack.c.b16 %v2221, %v2217
      %v3614 = vpack.c.b16 %v2226, %v2222
      %v3615 = vpack.c.b16 %v2227, %v2223
      %v3616 = vpack.c.b16 %v2228, %v2224
      %v3617 = vpack.c.b16 %v2229, %v2225
      %v3618 = vpack.c.b16 %v2234, %v2230
      %v3619 = vpack.c.b16 %v2235, %v2231
      %v3620 = vpack.c.b16 %v2236, %v2232
      %v3621 = vpack.c.b16 %v2237, %v2233
      %v3622 = vpack.c.b16 %v2242, %v2238
      %v3623 = vpack.c.b16 %v2243, %v2239
      %v3624 = vpack.c.b16 %v2244, %v2240
      %v3625 = vpack.c.b16 %v2245, %v2241
      %v3626 = vpack.c.b16 %v2250, %v2246
      %v3627 = vpack.c.b16 %v2251, %v2247
      %v3628 = vpack.c.b16 %v2252, %v2248
      %v3629 = vpack.c.b16 %v2253, %v2249
      %v3630 = vpack.c.b16 %v2258, %v2254
      %v3631 = vpack.c.b16 %v2259, %v2255
      %v3632 = vpack.c.b16 %v2260, %v2256
      %v3633 = vpack.c.b16 %v2261, %v2257
      %v3634 = vpack.c.b16 %v2266, %v2262
      %v3635 = vpack.c.b16 %v2267, %v2263
      %v3636 = vpack.c.b16 %v2268, %v2264
      %v3637 = vpack.c.b16 %v2269, %v2265
      %v3638 = vpack.c.b16 %v2274, %v2270
      %v3639 = vpack.c.b16 %v2275, %v2271
      %v3640 = vpack.c.b16 %v2276, %v2272
      %v3641 = vpack.c.b16 %v2277, %v2273
      %v3642 = vpack.c.b16 %v2282, %v2278
      %v3643 = vpack.c.b16 %v2283, %v2279
      %v3644 = vpack.c.b16 %v2284, %v2280
      %v3645 = vpack.c.b16 %v2285, %v2281
      %v3646 = vpack.c.b16 %v2290, %v2286
      %v3647 = vpack.c.b16 %v2291, %v2287
      %v3648 = vpack.c.b16 %v2292, %v2288
      %v3649 = vpack.c.b16 %v2293, %v2289
      %v3650 = vpack.c.b16 %v2298, %v2294
      %v3651 = vpack.c.b16 %v2299, %v2295
      %v3652 = vpack.c.b16 %v2300, %v2296
      %v3653 = vpack.c.b16 %v2301, %v2297
      %v3654 = vpack.c.b16 %v2306, %v2302
      %v3655 = vpack.c.b16 %v2307, %v2303
      %v3656 = vpack.c.b16 %v2308, %v2304
      %v3657 = vpack.c.b16 %v2309, %v2305
      %v3658 = vpack.c.b16 %v2314, %v2310
      %v3659 = vpack.c.b16 %v2315, %v2311
      %v3660 = vpack.c.b16 %v2316, %v2312
      %v3661 = vpack.c.b16 %v2317, %v2313
      %v3662 = vpack.c.b16 %v2322, %v2318
      %v3663 = vpack.c.b16 %v2323, %v2319
      %v3664 = vpack.c.b16 %v2324, %v2320
      %v3665 = vpack.c.b16 %v2325, %v2321
      %v3666 = vpack.c.b16 %v2330, %v2326
      %v3667 = vpack.c.b16 %v2331, %v2327
      %v3668 = vpack.c.b16 %v2332, %v2328
      %v3669 = vpack.c.b16 %v2333, %v2329
      %v3670 = vpack.c.b16 %v2338, %v2334
      %v3671 = vpack.c.b16 %v2339, %v2335
      %v3672 = vpack.c.b16 %v2340, %v2336
      %v3673 = vpack.c.b16 %v2341, %v2337
      %v3674 = vpack.c.b16 %v2346, %v2342
      %v3675 = vpack.c.b16 %v2347, %v2343
      %v3676 = vpack.c.b16 %v2348, %v2344
      %v3677 = vpack.c.b16 %v2349, %v2345
      %v3678 = vpack.c.b16 %v2354, %v2350
      %v3679 = vpack.c.b16 %v2355, %v2351
      %v3680 = vpack.c.b16 %v2356, %v2352
      %v3681 = vpack.c.b16 %v2357, %v2353
      %v3682 = vpack.c.b16 %v2362, %v2358
      %v3683 = vpack.c.b16 %v2363, %v2359
      %v3684 = vpack.c.b16 %v2364, %v2360
      %v3685 = vpack.c.b16 %v2365, %v2361
      %v3686 = vpack.c.b16 %v2370, %v2366
      %v3687 = vpack.c.b16 %v2371, %v2367
      %v3688 = vpack.c.b16 %v2372, %v2368
      %v3689 = vpack.c.b16 %v2373, %v2369
      %v3690 = vpack.c.b16 %v2378, %v2374
      %v3691 = vpack.c.b16 %v2379, %v2375
      %v3692 = vpack.c.b16 %v2380, %v2376
      %v3693 = vpack.c.b16 %v2381, %v2377
      %v3694 = vpack.c.b16 %v2386, %v2382
      %v3695 = vpack.c.b16 %v2387, %v2383
      %v3696 = vpack.c.b16 %v2388, %v2384
      %v3697 = vpack.c.b16 %v2389, %v2385
      %v3698 = vpack.c.b16 %v2394, %v2390
      %v3699 = vpack.c.b16 %v2395, %v2391
      %v3700 = vpack.c.b16 %v2396, %v2392
      %v3701 = vpack.c.b16 %v2397, %v2393
      %v3702 = vpack.c.b16 %v2402, %v2398
      %v3703 = vpack.c.b16 %v2403, %v2399
      %v3704 = vpack.c.b16 %v2404, %v2400
      %v3705 = vpack.c.b16 %v2405, %v2401
      %v3706 = vpack.c.b16 %v2410, %v2406
      %v3707 = vpack.c.b16 %v2411, %v2407
      %v3708 = vpack.c.b16 %v2412, %v2408
      %v3709 = vpack.c.b16 %v2413, %v2409
      %v3710 = vpack.c.b16 %v2418, %v2414
      %v3711 = vpack.c.b16 %v2419, %v2415
      %v3712 = vpack.c.b16 %v2420, %v2416
      %v3713 = vpack.c.b16 %v2421, %v2417
      %v3714 = vpack.c.b16 %v2426, %v2422
      %v3715 = vpack.c.b16 %v2427, %v2423
      %v3716 = vpack.c.b16 %v2428, %v2424
      %v3717 = vpack.c.b16 %v2429, %v2425
      %v3718 = vpack.c.b16 %v2434, %v2430
      %v3719 = vpack.c.b16 %v2435, %v2431
      %v3720 = vpack.c.b16 %v2436, %v2432
      %v3721 = vpack.c.b16 %v2437, %v2433
      %v3722 = vpack.c.b16 %v2442, %v2438
      %v3723 = vpack.c.b16 %v2443, %v2439
      %v3724 = vpack.c.b16 %v2444, %v2440
      %v3725 = vpack.c.b16 %v2445, %v2441
      %v3726 = vpack.c.b16 %v2450, %v2446
      %v3727 = vpack.c.b16 %v2451, %v2447
      %v3728 = vpack.c.b16 %v2452, %v2448
      %v3729 = vpack.c.b16 %v2453, %v2449
      %v3730 = vpack.c.b16 %v2458, %v2454
      %v3731 = vpack.c.b16 %v2459, %v2455
      %v3732 = vpack.c.b16 %v2460, %v2456
      %v3733 = vpack.c.b16 %v2461, %v2457
      %v3734 = vpack.c.b16 %v2466, %v2462
      %v3735 = vpack.c.b16 %v2467, %v2463
      %v3736 = vpack.c.b16 %v2468, %v2464
      %v3737 = vpack.c.b16 %v2469, %v2465
      %v3738 = vpack.c.b16 %v2474, %v2470
      %v3739 = vpack.c.b16 %v2475, %v2471
      %v3740 = vpack.c.b16 %v2476, %v2472
      %v3741 = vpack.c.b16 %v2477, %v2473
      %v3742 = vpack.c.b16 %v2482, %v2478
      %v3743 = vpack.c.b16 %v2483, %v2479
      %v3744 = vpack.c.b16 %v2484, %v2480
      %v3745 = vpack.c.b16 %v2485, %v2481
      %v3746 = vpack.c.b16 %v2490, %v2486
      %v3747 = vpack.c.b16 %v2491, %v2487
      %v3748 = vpack.c.b16 %v2492, %v2488
      %v3749 = vpack.c.b16 %v2493, %v2489
      %v3750 = vpack.c.b16 %v2498, %v2494
      %v3751 = vpack.c.b16 %v2499, %v2495
      %v3752 = vpack.c.b16 %v2500, %v2496
      %v3753 = vpack.c.b16 %v2501, %v2497
      %v3754 = vpack.c.b16 %v2506, %v2502
      %v3755 = vpack.c.b16 %v2507, %v2503
      %v3756 = vpack.c.b16 %v2508, %v2504
      %v3757 = vpack.c.b16 %v2509, %v2505
      %v3758 = vpack.c.b16 %v2514, %v2510
      %v3759 = vpack.c.b16 %v2515, %v2511
      %v3760 = vpack.c.b16 %v2516, %v2512
      %v3761 = vpack.c.b16 %v2517, %v2513
      %v3762 = vpack.c.b16 %v2522, %v2518
      %v3763 = vpack.c.b16 %v2523, %v2519
      %v3764 = vpack.c.b16 %v2524, %v2520
      %v3765 = vpack.c.b16 %v2525, %v2521
      %v3766 = vpack.c.b16 %v2530, %v2526
      %v3767 = vpack.c.b16 %v2531, %v2527
      %v3768 = vpack.c.b16 %v2532, %v2528
      %v3769 = vpack.c.b16 %v2533, %v2529
      %v3770 = vpack.c.b16 %v2538, %v2534
      %v3771 = vpack.c.b16 %v2539, %v2535
      %v3772 = vpack.c.b16 %v2540, %v2536
      %v3773 = vpack.c.b16 %v2541, %v2537
      %v3774 = vpack.c.b16 %v2546, %v2542
      %v3775 = vpack.c.b16 %v2547, %v2543
      %v3776 = vpack.c.b16 %v2548, %v2544
      %v3777 = vpack.c.b16 %v2549, %v2545
      %v3778 = vpack.c.b16 %v2554, %v2550
      %v3779 = vpack.c.b16 %v2555, %v2551
      %v3780 = vpack.c.b16 %v2556, %v2552
      %v3781 = vpack.c.b16 %v2557, %v2553
      %v3782 = vpack.c.b16 %v2562, %v2558
      %v3783 = vpack.c.b16 %v2563, %v2559
      %v3784 = vpack.c.b16 %v2564, %v2560
      %v3785 = vpack.c.b16 %v2565, %v2561
      %v3786 = vpack.c.b16 %v2570, %v2566
      %v3787 = vpack.c.b16 %v2571, %v2567
      %v3788 = vpack.c.b16 %v2572, %v2568
      %v3789 = vpack.c.b16 %v2573, %v2569
      %v3790 = vpack.c.b16 %v2578, %v2574
      %v3791 = vpack.c.b16 %v2579, %v2575
      %v3792 = vpack.c.b16 %v2580, %v2576
      %v3793 = vpack.c.b16 %v2581, %v2577
      %v3794 = vpack.c.b16 %v2586, %v2582
      %v3795 = vpack.c.b16 %v2587, %v2583
      %v3796 = vpack.c.b16 %v2588, %v2584
      %v3797 = vpack.c.b16 %v2589, %v2585
      %v3798 = vpack.c.b16 %v2594, %v2590
      %v3799 = vpack.c.b16 %v2595, %v2591
      %v3800 = vpack.c.b16 %v2596, %v2592
      %v3801 = vpack.c.b16 %v2597, %v2593
      %v3802 = vpack.c.b16 %v2602, %v2598
      %v3803 = vpack.c.b16 %v2603, %v2599
      %v3804 = vpack.c.b16 %v2604, %v2600
      %v3805 = vpack.c.b16 %v2605, %v2601
      %v3806 = vpack.c.b16 %v2610, %v2606
      %v3807 = vpack.c.b16 %v2611, %v2607
      %v3808 = vpack.c.b16 %v2612, %v2608
      %v3809 = vpack.c.b16 %v2613, %v2609
      %v3810 = vpack.c.b16 %v2618, %v2614
      %v3811 = vpack.c.b16 %v2619, %v2615
      %v3812 = vpack.c.b16 %v2620, %v2616
      %v3813 = vpack.c.b16 %v2621, %v2617
      %v3814 = vpack.c.b16 %v2626, %v2622
      %v3815 = vpack.c.b16 %v2627, %v2623
      %v3816 = vpack.c.b16 %v2628, %v2624
      %v3817 = vpack.c.b16 %v2629, %v2625
      %v3818 = vpack.c.b16 %v2634, %v2630
      %v3819 = vpack.c.b16 %v2635, %v2631
      %v3820 = vpack.c.b16 %v2636, %v2632
      %v3821 = vpack.c.b16 %v2637, %v2633
      %v3822 = vpack.c.b16 %v2642, %v2638
      %v3823 = vpack.c.b16 %v2643, %v2639
      %v3824 = vpack.c.b16 %v2644, %v2640
      %v3825 = vpack.c.b16 %v2645, %v2641
      %v3826 = vpack.c.b16 %v2650, %v2646
      %v3827 = vpack.c.b16 %v2651, %v2647
      %v3828 = vpack.c.b16 %v2652, %v2648
      %v3829 = vpack.c.b16 %v2653, %v2649
      %v3830 = vpack.c.b16 %v2658, %v2654
      %v3831 = vpack.c.b16 %v2659, %v2655
      %v3832 = vpack.c.b16 %v2660, %v2656
      %v3833 = vpack.c.b16 %v2661, %v2657
      %v3834 = vpack.c.b16 %v2666, %v2662
      %v3835 = vpack.c.b16 %v2667, %v2663
      %v3836 = vpack.c.b16 %v2668, %v2664
      %v3837 = vpack.c.b16 %v2669, %v2665
      %v3838 = vpack.c.b16 %v2674, %v2670
      %v3839 = vpack.c.b16 %v2675, %v2671
      %v3840 = vpack.c.b16 %v2676, %v2672
      %v3841 = vpack.c.b16 %v2677, %v2673
      %v3842 = vpack.c.b16 %v2682, %v2678
      %v3843 = vpack.c.b16 %v2683, %v2679
      %v3844 = vpack.c.b16 %v2684, %v2680
      %v3845 = vpack.c.b16 %v2685, %v2681
      %v3846 = vpack.c.b16 %v2690, %v2686
      %v3847 = vpack.c.b16 %v2691, %v2687
      %v3848 = vpack.c.b16 %v2692, %v2688
      %v3849 = vpack.c.b16 %v2693, %v2689
      %v3850 = vpack.c.b16 %v2698, %v2694
      %v3851 = vpack.c.b16 %v2699, %v2695
      %v3852 = vpack.c.b16 %v2700, %v2696
      %v3853 = vpack.c.b16 %v2701, %v2697
      %v3854 = vpack.c.b16 %v2706, %v2702
      %v3855 = vpack.c.b16 %v2707, %v2703
      %v3856 = vpack.c.b16 %v2708, %v2704
      %v3857 = vpack.c.b16 %v2709, %v2705
      %v3858 = vpack.c.b16 %v2714, %v2710
      %v3859 = vpack.c.b16 %v2715, %v2711
      %v3860 = vpack.c.b16 %v2716, %v2712
      %v3861 = vpack.c.b16 %v2717, %v2713
      %v3862 = vpack.c.b16 %v2722, %v2718
      %v3863 = vpack.c.b16 %v2723, %v2719
      %v3864 = vpack.c.b16 %v2724, %v2720
      %v3865 = vpack.c.b16 %v2725, %v2721
      %v3866 = vpack.c.b16 %v2730, %v2726
      %v3867 = vpack.c.b16 %v2731, %v2727
      %v3868 = vpack.c.b16 %v2732, %v2728
      %v3869 = vpack.c.b16 %v2733, %v2729
      %v3870 = vpack.c.b16 %v2738, %v2734
      %v3871 = vpack.c.b16 %v2739, %v2735
      %v3872 = vpack.c.b16 %v2740, %v2736
      %v3873 = vpack.c.b16 %v2741, %v2737
      %v3874 = vpack.c.b16 %v2746, %v2742
      %v3875 = vpack.c.b16 %v2747, %v2743
      %v3876 = vpack.c.b16 %v2748, %v2744
      %v3877 = vpack.c.b16 %v2749, %v2745
      %v3878 = vpack.c.b16 %v2754, %v2750
      %v3879 = vpack.c.b16 %v2755, %v2751
      %v3880 = vpack.c.b16 %v2756, %v2752
      %v3881 = vpack.c.b16 %v2757, %v2753
      %v3882 = vpack.c.b16 %v2762, %v2758
      %v3883 = vpack.c.b16 %v2763, %v2759
      %v3884 = vpack.c.b16 %v2764, %v2760
      %v3885 = vpack.c.b16 %v2765, %v2761
      %v3886 = vpack.c.b16 %v2770, %v2766
      %v3887 = vpack.c.b16 %v2771, %v2767
      %v3888 = vpack.c.b16 %v2772, %v2768
      %v3889 = vpack.c.b16 %v2773, %v2769
      %v3890 = vpack.c.b16 %v2778, %v2774
      %v3891 = vpack.c.b16 %v2779, %v2775
      %v3892 = vpack.c.b16 %v2780, %v2776
      %v3893 = vpack.c.b16 %v2781, %v2777
      %v3894 = vpack.c.b16 %v2786, %v2782
      %v3895 = vpack.c.b16 %v2787, %v2783
      %v3896 = vpack.c.b16 %v2788, %v2784
      %v3897 = vpack.c.b16 %v2789, %v2785
      %v3898 = vpack.c.b16 %v2794, %v2790
      %v3899 = vpack.c.b16 %v2795, %v2791
      %v3900 = vpack.c.b16 %v2796, %v2792
      %v3901 = vpack.c.b16 %v2797, %v2793
      %v3902 = vpack.c.b16 %v2802, %v2798
      %v3903 = vpack.c.b16 %v2803, %v2799
      %v3904 = vpack.c.b16 %v2804, %v2800
      %v3905 = vpack.c.b16 %v2805, %v2801
      %v3906 = vpack.c.b16 %v2810, %v2806
      %v3907 = vpack.c.b16 %v2811, %v2807
      %v3908 = vpack.c.b16 %v2812, %v2808
      %v3909 = vpack.c.b16 %v2813, %v2809
      %v3910 = vpack.c.b16 %v2818, %v2814
      %v3911 = vpack.c.b16 %v2819, %v2815
      %v3912 = vpack.c.b16 %v2820, %v2816
      %v3913 = vpack.c.b16 %v2821, %v2817
      %v3914 = vpack.c.b16 %v2826, %v2822
      %v3915 = vpack.c.b16 %v2827, %v2823
      %v3916 = vpack.c.b16 %v2828, %v2824
      %v3917 = vpack.c.b16 %v2829, %v2825
      %v3918 = vpack.c.b16 %v2834, %v2830
      %v3919 = vpack.c.b16 %v2835, %v2831
      %v3920 = vpack.c.b16 %v2836, %v2832
      %v3921 = vpack.c.b16 %v2837, %v2833
      %v3922 = vpack.c.b16 %v2842, %v2838
      %v3923 = vpack.c.b16 %v2843, %v2839
      %v3924 = vpack.c.b16 %v2844, %v2840
      %v3925 = vpack.c.b16 %v2845, %v2841
      %v3926 = vpack.c.b16 %v2850, %v2846
      %v3927 = vpack.c.b16 %v2851, %v2847
      %v3928 = vpack.c.b16 %v2852, %v2848
      %v3929 = vpack.c.b16 %v2853, %v2849
      %v3930 = vpack.c.b16 %v2858, %v2854
      %v3931 = vpack.c.b16 %v2859, %v2855
      %v3932 = vpack.c.b16 %v2860, %v2856
      %v3933 = vpack.c.b16 %v2861, %v2857
      %v3934 = vpack.c.b16 %v2866, %v2862
      %v3935 = vpack.c.b16 %v2867, %v2863
      %v3936 = vpack.c.b16 %v2868, %v2864
      %v3937 = vpack.c.b16 %v2869, %v2865
      %v3938 = vpack.c.b16 %v2874, %v2870
      %v3939 = vpack.c.b16 %v2875, %v2871
      %v3940 = vpack.c.b16 %v2876, %v2872
      %v3941 = vpack.c.b16 %v2877, %v2873
      %v3942 = vpack.c.b16 %v2882, %v2878
      %v3943 = vpack.c.b16 %v2883, %v2879
      %v3944 = vpack.c.b16 %v2884, %v2880
      %v3945 = vpack.c.b16 %v2885, %v2881
      %v3946 = vpack.c.b16 %v2890, %v2886
      %v3947 = vpack.c.b16 %v2891, %v2887
      %v3948 = vpack.c.b16 %v2892, %v2888
      %v3949 = vpack.c.b16 %v2893, %v2889
      %v3950 = vpack.c.b16 %v2898, %v2894
      %v3951 = vpack.c.b16 %v2899, %v2895
      %v3952 = vpack.c.b16 %v2900, %v2896
      %v3953 = vpack.c.b16 %v2901, %v2897
      %v3954 = vpack.c.b16 %v2906, %v2902
      %v3955 = vpack.c.b16 %v2907, %v2903
      %v3956 = vpack.c.b16 %v2908, %v2904
      %v3957 = vpack.c.b16 %v2909, %v2905
      %v3958 = vpack.c.b16 %v2914, %v2910
      %v3959 = vpack.c.b16 %v2915, %v2911
      %v3960 = vpack.c.b16 %v2916, %v2912
      %v3961 = vpack.c.b16 %v2917, %v2913
      %v3962 = vpack.c.b16 %v2922, %v2918
      %v3963 = vpack.c.b16 %v2923, %v2919
      %v3964 = vpack.c.b16 %v2924, %v2920
      %v3965 = vpack.c.b16 %v2925, %v2921
      %v3966 = vpack.c.b16 %v2930, %v2926
      %v3967 = vpack.c.b16 %v2931, %v2927
      %v3968 = vpack.c.b16 %v2932, %v2928
      %v3969 = vpack.c.b16 %v2933, %v2929
      %v3970 = vpack.c.b16 %v2938, %v2934
      %v3971 = vpack.c.b16 %v2939, %v2935
      %v3972 = vpack.c.b16 %v2940, %v2936
      %v3973 = vpack.c.b16 %v2941, %v2937
      %v3974 = vpack.c.b16 %v2946, %v2942
      %v3975 = vpack.c.b16 %v2947, %v2943
      %v3976 = vpack.c.b16 %v2948, %v2944
      %v3977 = vpack.c.b16 %v2949, %v2945
      %v3978 = vpack.c.b16 %v2954, %v2950
      %v3979 = vpack.c.b16 %v2955, %v2951
      %v3980 = vpack.c.b16 %v2956, %v2952
      %v3981 = vpack.c.b16 %v2957, %v2953
      %v3982 = vpack.c.b16 %v2962, %v2958
      %v3983 = vpack.c.b16 %v2963, %v2959
      %v3984 = vpack.c.b16 %v2964, %v2960
      %v3985 = vpack.c.b16 %v2965, %v2961
      %v3986 = vpack.c.b16 %v2970, %v2966
      %v3987 = vpack.c.b16 %v2971, %v2967
      %v3988 = vpack.c.b16 %v2972, %v2968
      %v3989 = vpack.c.b16 %v2973, %v2969
      %v3990 = vpack.c.b16 %v2978, %v2974
      %v3991 = vpack.c.b16 %v2979, %v2975
      %v3992 = vpack.c.b16 %v2980, %v2976
      %v3993 = vpack.c.b16 %v2981, %v2977
      %v3994 = vpack.c.b16 %v2986, %v2982
      %v3995 = vpack.c.b16 %v2987, %v2983
      %v3996 = vpack.c.b16 %v2988, %v2984
      %v3997 = vpack.c.b16 %v2989, %v2985
      %v3998 = vpack.c.b16 %v2994, %v2990
      %v3999 = vpack.c.b16 %v2995, %v2991
      %v4000 = vpack.c.b16 %v2996, %v2992
      %v4001 = vpack.c.b16 %v2997, %v2993
      %v4002 = vpack.c.b16 %v3002, %v2998
      %v4003 = vpack.c.b16 %v3003, %v2999
      %v4004 = vpack.c.b16 %v3004, %v3000
      %v4005 = vpack.c.b16 %v3005, %v3001
      %v4006 = vpack.c.b16 %v3010, %v3006
      %v4007 = vpack.c.b16 %v3011, %v3007
      %v4008 = vpack.c.b16 %v3012, %v3008
      %v4009 = vpack.c.b16 %v3013, %v3009
      %v4010 = vpack.c.b16 %v3018, %v3014
      %v4011 = vpack.c.b16 %v3019, %v3015
      %v4012 = vpack.c.b16 %v3020, %v3016
      %v4013 = vpack.c.b16 %v3021, %v3017
      %v4014 = vpack.c.b16 %v3026, %v3022
      %v4015 = vpack.c.b16 %v3027, %v3023
      %v4016 = vpack.c.b16 %v3028, %v3024
      %v4017 = vpack.c.b16 %v3029, %v3025
      %v4018 = vpack.c.b16 %v3034, %v3030
      %v4019 = vpack.c.b16 %v3035, %v3031
      %v4020 = vpack.c.b16 %v3036, %v3032
      %v4021 = vpack.c.b16 %v3037, %v3033
      %v4022 = vpack.c.b16 %v3042, %v3038
      %v4023 = vpack.c.b16 %v3043, %v3039
      %v4024 = vpack.c.b16 %v3044, %v3040
      %v4025 = vpack.c.b16 %v3045, %v3041
      %v4026 = vpack.c.b16 %v3050, %v3046
      %v4027 = vpack.c.b16 %v3051, %v3047
      %v4028 = vpack.c.b16 %v3052, %v3048
      %v4029 = vpack.c.b16 %v3053, %v3049
      %v4030 = vpack.c.b16 %v3058, %v3054
      %v4031 = vpack.c.b16 %v3059, %v3055
      %v4032 = vpack.c.b16 %v3060, %v3056
      %v4033 = vpack.c.b16 %v3061, %v3057
      %v4034 = vpack.c.b16 %v3066, %v3062
      %v4035 = vpack.c.b16 %v3067, %v3063
      %v4036 = vpack.c.b16 %v3068, %v3064
      %v4037 = vpack.c.b16 %v3069, %v3065
      %v4038 = vpack.c.b16 %v3074, %v3070
      %v4039 = vpack.c.b16 %v3075, %v3071
      %v4040 = vpack.c.b16 %v3076, %v3072
      %v4041 = vpack.c.b16 %v3077, %v3073
      %v4042 = vpack.c.b16 %v3082, %v3078
      %v4043 = vpack.c.b16 %v3083, %v3079
      %v4044 = vpack.c.b16 %v3084, %v3080
      %v4045 = vpack.c.b16 %v3085, %v3081
      %v4046 = vpack.c.b16 %v3090, %v3086
      %v4047 = vpack.c.b16 %v3091, %v3087
      %v4048 = vpack.c.b16 %v3092, %v3088
      %v4049 = vpack.c.b16 %v3093, %v3089
      %v4050 = vpack.c.b16 %v3098, %v3094
      %v4051 = vpack.c.b16 %v3099, %v3095
      %v4052 = vpack.c.b16 %v3100, %v3096
      %v4053 = vpack.c.b16 %v3101, %v3097
      %v4054 = vpack.c.b16 %v3106, %v3102
      %v4055 = vpack.c.b16 %v3107, %v3103
      %v4056 = vpack.c.b16 %v3108, %v3104
      %v4057 = vpack.c.b16 %v3109, %v3105
      %v4058 = vpack.c.b16 %v3114, %v3110
      %v4059 = vpack.c.b16 %v3115, %v3111
      %v4060 = vpack.c.b16 %v3116, %v3112
      %v4061 = vpack.c.b16 %v3117, %v3113
      %v4062 = vpack.c.b16 %v3122, %v3118
      %v4063 = vpack.c.b16 %v3123, %v3119
      %v4064 = vpack.c.b16 %v3124, %v3120
      %v4065 = vpack.c.b16 %v3125, %v3121
      %v4066 = vpack.c.b16 %v3130, %v3126
      %v4067 = vpack.c.b16 %v3131, %v3127
      %v4068 = vpack.c.b16 %v3132, %v3128
      %v4069 = vpack.c.b16 %v3133, %v3129
      %v4070 = vpack.c.b16 %v3138, %v3134
      %v4071 = vpack.c.b16 %v3139, %v3135
      %v4072 = vpack.c.b16 %v3140, %v3136
      %v4073 = vpack.c.b16 %v3141, %v3137
      %v4074 = vpack.c.b16 %v3146, %v3142
      %v4075 = vpack.c.b16 %v3147, %v3143
      %v4076 = vpack.c.b16 %v3148, %v3144
      %v4077 = vpack.c.b16 %v3149, %v3145
      %v4078 = vpack.c.b16 %v3154, %v3150
      %v4079 = vpack.c.b16 %v3155, %v3151
      %v4080 = vpack.c.b16 %v3156, %v3152
      %v4081 = vpack.c.b16 %v3157, %v3153
      %v4082 = vpack.c.b16 %v3162, %v3158
      %v4083 = vpack.c.b16 %v3163, %v3159
      %v4084 = vpack.c.b16 %v3164, %v3160
      %v4085 = vpack.c.b16 %v3165, %v3161
      %v4086 = vpack.c.b16 %v3170, %v3166
      %v4087 = vpack.c.b16 %v3171, %v3167
      %v4088 = vpack.c.b16 %v3172, %v3168
      %v4089 = vpack.c.b16 %v3173, %v3169
      %v4090 = vpack.c.b16 %v3178, %v3174
      %v4091 = vpack.c.b16 %v3179, %v3175
      %v4092 = vpack.c.b16 %v3180, %v3176
      %v4093 = vpack.c.b16 %v3181, %v3177
      %v4094 = vpack.c.b16 %v3186, %v3182
      %v4095 = vpack.c.b16 %v3187, %v3183
      %v4096 = vpack.c.b16 %v3188, %v3184
      %v4097 = vpack.c.b16 %v3189, %v3185
      %v4098 = vpack.c.b16 %v3194, %v3190
      %v4099 = vpack.c.b16 %v3195, %v3191
      %v4100 = vpack.c.b16 %v3196, %v3192
      %v4101 = vpack.c.b16 %v3197, %v3193
      %v4102 = vpack.c.b16 %v3202, %v3198
      %v4103 = vpack.c.b16 %v3203, %v3199
      %v4104 = vpack.c.b16 %v3204, %v3200
      %v4105 = vpack.c.b16 %v3205, %v3201
      %v4106 = vpack.c.b16 %v3210, %v3206
      %v4107 = vpack.c.b16 %v3211, %v3207
      %v4108 = vpack.c.b16 %v3212, %v3208
      %v4109 = vpack.c.b16 %v3213, %v3209
      %v4110 = vpack.c.b16 %v3218, %v3214
      %v4111 = vpack.c.b16 %v3219, %v3215
      %v4112 = vpack.c.b16 %v3220, %v3216
      %v4113 = vpack.c.b16 %v3221, %v3217
      %v4114 = vpack.c.b16 %v3226, %v3222
      %v4115 = vpack.c.b16 %v3227, %v3223
      %v4116 = vpack.c.b16 %v3228, %v3224
      %v4117 = vpack.c.b16 %v3229, %v3225
      %v4118 = vpack.c.b16 %v3234, %v3230
      %v4119 = vpack.c.b16 %v3235, %v3231
      %v4120 = vpack.c.b16 %v3236, %v3232
      %v4121 = vpack.c.b16 %v3237, %v3233
      %v4122 = vpack.c.b16 %v3242, %v3238
      %v4123 = vpack.c.b16 %v3243, %v3239
      %v4124 = vpack.c.b16 %v3244, %v3240
      %v4125 = vpack.c.b16 %v3245, %v3241
      %v4126 = vpack.c.b16 %v3250, %v3246
      %v4127 = vpack.c.b16 %v3251, %v3247
      %v4128 = vpack.c.b16 %v3252, %v3248
      %v4129 = vpack.c.b16 %v3253, %v3249
      %v4130 = vpack.c.b16 %v3258, %v3254
      %v4131 = vpack.c.b16 %v3259, %v3255
      %v4132 = vpack.c.b16 %v3260, %v3256
      %v4133 = vpack.c.b16 %v3261, %v3257
      %v4134 = vpack.c.b16 %v3266, %v3262
      %v4135 = vpack.c.b16 %v3267, %v3263
      %v4136 = vpack.c.b16 %v3268, %v3264
      %v4137 = vpack.c.b16 %v3269, %v3265
      %v4138 = vpack.c.b16 %v3274, %v3270
      %v4139 = vpack.c.b16 %v3275, %v3271
      %v4140 = vpack.c.b16 %v3276, %v3272
      %v4141 = vpack.c.b16 %v3277, %v3273
      %v4142 = vpack.c.b16 %v3282, %v3278
      %v4143 = vpack.c.b16 %v3283, %v3279
      %v4144 = vpack.c.b16 %v3284, %v3280
      %v4145 = vpack.c.b16 %v3285, %v3281
      %v4146 = vpack.c.b16 %v3290, %v3286
      %v4147 = vpack.c.b16 %v3291, %v3287
      %v4148 = vpack.c.b16 %v3292, %v3288
      %v4149 = vpack.c.b16 %v3293, %v3289
      %v4150 = vpack.c.b16 %v3298, %v3294
      %v4151 = vpack.c.b16 %v3299, %v3295
      %v4152 = vpack.c.b16 %v3300, %v3296
      %v4153 = vpack.c.b16 %v3301, %v3297
      %v4154 = vpack.c.b16 %v3306, %v3302
      %v4155 = vpack.c.b16 %v3307, %v3303
      %v4156 = vpack.c.b16 %v3308, %v3304
      %v4157 = vpack.c.b16 %v3309, %v3305
      %v4158 = vpack.c.b16 %v3314, %v3310
      %v4159 = vpack.c.b16 %v3315, %v3311
      %v4160 = vpack.c.b16 %v3316, %v3312
      %v4161 = vpack.c.b16 %v3317, %v3313
      %v4162 = vpack.c.b16 %v3322, %v3318
      %v4163 = vpack.c.b16 %v3323, %v3319
      %v4164 = vpack.c.b16 %v3324, %v3320
      %v4165 = vpack.c.b16 %v3325, %v3321
      %v4166 = vpack.c.b16 %v3330, %v3326
      %v4167 = vpack.c.b16 %v3331, %v3327
      %v4168 = vpack.c.b16 %v3332, %v3328
      %v4169 = vpack.c.b16 %v3333, %v3329
      %v4170 = vpack.c.b16 %v3338, %v3334
      %v4171 = vpack.c.b16 %v3339, %v3335
      %v4172 = vpack.c.b16 %v3340, %v3336
      %v4173 = vpack.c.b16 %v3341, %v3337
      %v4174 = vpack.c.b16 %v3346, %v3342
      %v4175 = vpack.c.b16 %v3347, %v3343
      %v4176 = vpack.c.b16 %v3348, %v3344
      %v4177 = vpack.c.b16 %v3349, %v3345
      %v4178 = vpack.c.b16 %v3354, %v3350
      %v4179 = vpack.c.b16 %v3355, %v3351
      %v4180 = vpack.c.b16 %v3356, %v3352
      %v4181 = vpack.c.b16 %v3357, %v3353
      %v4182 = vpack.c.b16 %v3362, %v3358
      %v4183 = vpack.c.b16 %v3363, %v3359
      %v4184 = vpack.c.b16 %v3364, %v3360
      %v4185 = vpack.c.b16 %v3365, %v3361
      %v4186 = vpack.c.b16 %v3370, %v3366
      %v4187 = vpack.c.b16 %v3371, %v3367
      %v4188 = vpack.c.b16 %v3372, %v3368
      %v4189 = vpack.c.b16 %v3373, %v3369
      %v4190 = vpack.c.b16 %v3378, %v3374
      %v4191 = vpack.c.b16 %v3379, %v3375
      %v4192 = vpack.c.b16 %v3380, %v3376
      %v4193 = vpack.c.b16 %v3381, %v3377
      %v4194 = vpack.c.b16 %v3386, %v3382
      %v4195 = vpack.c.b16 %v3387, %v3383
      %v4196 = vpack.c.b16 %v3388, %v3384
      %v4197 = vpack.c.b16 %v3389, %v3385
      %v4198 = vpack.c.b16 %v3394, %v3390
      %v4199 = vpack.c.b16 %v3395, %v3391
      %v4200 = vpack.c.b16 %v3396, %v3392
      %v4201 = vpack.c.b16 %v3397, %v3393
      %v4202 = vpack.c.b16 %v3402, %v3398
      %v4203 = vpack.c.b16 %v3403, %v3399
      %v4204 = vpack.c.b16 %v3404, %v3400
      %v4205 = vpack.c.b16 %v3405, %v3401
      %v4206 = vpack.c.b16 %v3410, %v3406
      %v4207 = vpack.c.b16 %v3411, %v3407
      %v4208 = vpack.c.b16 %v3412, %v3408
      %v4209 = vpack.c.b16 %v3413, %v3409
      %v4210 = vpack.c.b16 %v3418, %v3414
      %v4211 = vpack.c.b16 %v3419, %v3415
      %v4212 = vpack.c.b16 %v3420, %v3416
      %v4213 = vpack.c.b16 %v3421, %v3417
      %v4214 = vpack.c.b16 %v3426, %v3422
      %v4215 = vpack.c.b16 %v3427, %v3423
      %v4216 = vpack.c.b16 %v3428, %v3424
      %v4217 = vpack.c.b16 %v3429, %v3425
      %v4218 = vpack.c.b16 %v3434, %v3430
      %v4219 = vpack.c.b16 %v3435, %v3431
      %v4220 = vpack.c.b16 %v3436, %v3432
      %v4221 = vpack.c.b16 %v3437, %v3433
      %v4222 = vpack.c.b16 %v3442, %v3438
      %v4223 = vpack.c.b16 %v3443, %v3439
      %v4224 = vpack.c.b16 %v3444, %v3440
      %v4225 = vpack.c.b16 %v3445, %v3441
      %v4226 = vpack.c.b16 %v3450, %v3446
      %v4227 = vpack.c.b16 %v3451, %v3447
      %v4228 = vpack.c.b16 %v3452, %v3448
      %v4229 = vpack.c.b16 %v3453, %v3449
      %v4230 = vpack.c.b16 %v3458, %v3454
      %v4231 = vpack.c.b16 %v3459, %v3455
      %v4232 = vpack.c.b16 %v3460, %v3456
      %v4233 = vpack.c.b16 %v3461, %v3457
      %v4234 = vpack.c.b16 %v3466, %v3462
      %v4235 = vpack.c.b16 %v3467, %v3463
      %v4236 = vpack.c.b16 %v3468, %v3464
      %v4237 = vpack.c.b16 %v3469, %v3465
      %5006 = vmatprep.subr.bf16.mxu0 %v3471
      %5007 = vmatpush1.bf16.msra.mxu0 %v3470
      %5008 = vmatprep.subr.bf16.mxu0 %v3475
      %5009 = vmatpush1.bf16.msra.mxu0 %v3474
      %5010 = vmatprep.subr.bf16.mxu0 %v3479
      %5011 = vmatpush1.bf16.msra.mxu0 %v3478
      %5012 = vmatprep.subr.bf16.mxu0 %v3483
      %5013 = vmatpush1.bf16.msra.mxu0 %v3482
      %5014 = vmatprep.subr.bf16.mxu0 %v3487
      %5015 = vmatpush1.bf16.msra.mxu0 %v3486
      %5016 = vmatprep.subr.bf16.mxu0 %v3491
      %5017 = vmatpush1.bf16.msra.mxu0 %v3490
      %5018 = vmatprep.subr.bf16.mxu0 %v3495
      %5019 = vmatpush1.bf16.msra.mxu0 %v3494
      %5020 = vmatprep.subr.bf16.mxu0 %v3499
      %5021 = vmatpush1.bf16.msra.mxu0 %v3498
      %5022 = vmatprep.subr.bf16.mxu0 %v3503
      %5023 = vmatpush1.bf16.msra.mxu0 %v3502
      %5024 = vmatprep.subr.bf16.mxu0 %v3507
      %5025 = vmatpush1.bf16.msra.mxu0 %v3506
      %5026 = vmatprep.subr.bf16.mxu0 %v3511
      %5027 = vmatpush1.bf16.msra.mxu0 %v3510
      %5028 = vmatprep.subr.bf16.mxu0 %v3515
      %5029 = vmatpush1.bf16.msra.mxu0 %v3514
      %5030 = vmatprep.subr.bf16.mxu0 %v3519
      %5031 = vmatpush1.bf16.msra.mxu0 %v3518
      %5032 = vmatprep.subr.bf16.mxu0 %v3523
      %5033 = vmatpush1.bf16.msra.mxu0 %v3522
      %5034 = vmatprep.subr.bf16.mxu0 %v3527
      %5035 = vmatpush1.bf16.msra.mxu0 %v3526
      %5036 = vmatprep.subr.bf16.mxu0 %v3531
      %5037 = vmatpush1.bf16.msra.mxu0 %v3530
      %5038 = vmatprep.mubr.bf16.mxu0 %v1119
      %5039 = vmatmul.mubr.bf16.gmra.mrb[0].mxu0 %v1118
      %v5040 = vpop.f32.mrb[0].mxu0
      %v5041 = vadd.f32 %v1029, %v5040
      %v5042 = vpop.f32.mrb[0].mxu0
      %v5043 = vadd.f32 %v1033, %v5042
      %v5044 = vpop.f32.mrb[0].mxu0
      %v5045 = vadd.f32 %v1029, %v5044
      %v5046 = vpop.f32.mrb[0].mxu0
      %v5047 = vadd.f32 %v1033, %v5046
      %5048 = vdwg.mxu0
      %5049 = vmatprep.subr.bf16.mxu0 %v3535
      %5050 = vmatpush1.bf16.msra.mxu0 %v3534
      %5051 = vmatprep.subr.bf16.mxu0 %v3539
      %5052 = vmatpush1.bf16.msra.mxu0 %v3538
      %5053 = vmatprep.subr.bf16.mxu0 %v3543
      %5054 = vmatpush1.bf16.msra.mxu0 %v3542
      %5055 = vmatprep.subr.bf16.mxu0 %v3547
      %5056 = vmatpush1.bf16.msra.mxu0 %v3546
      %5057 = vmatprep.subr.bf16.mxu0 %v3551
      %5058 = vmatpush1.bf16.msra.mxu0 %v3550
      %5059 = vmatprep.subr.bf16.mxu0 %v3555
      %5060 = vmatpush1.bf16.msra.mxu0 %v3554
      %5061 = vmatprep.subr.bf16.mxu0 %v3559
      %5062 = vmatpush1.bf16.msra.mxu0 %v3558
      %5063 = vmatprep.subr.bf16.mxu0 %v3563
      %5064 = vmatpush1.bf16.msra.mxu0 %v3562
      %5065 = vmatprep.subr.bf16.mxu0 %v3567
      %5066 = vmatpush1.bf16.msra.mxu0 %v3566
      %5067 = vmatprep.subr.bf16.mxu0 %v3571
      %5068 = vmatpush1.bf16.msra.mxu0 %v3570
      %5069 = vmatprep.subr.bf16.mxu0 %v3575
      %5070 = vmatpush1.bf16.msra.mxu0 %v3574
      %5071 = vmatprep.subr.bf16.mxu0 %v3579
      %5072 = vmatpush1.bf16.msra.mxu0 %v3578
      %5073 = vmatprep.subr.bf16.mxu0 %v3583
      %5074 = vmatpush1.bf16.msra.mxu0 %v3582
      %5075 = vmatprep.subr.bf16.mxu0 %v3587
      %5076 = vmatpush1.bf16.msra.mxu0 %v3586
      %5077 = vmatprep.subr.bf16.mxu0 %v3591
      %5078 = vmatpush1.bf16.msra.mxu0 %v3590
      %5079 = vmatprep.subr.bf16.mxu0 %v3595
      %5080 = vmatpush1.bf16.msra.mxu0 %v3594
      %5081 = vmatprep.mubr.bf16.mxu0 %v1121
      %5082 = vmatmul.mubr.bf16.gmra.mrb[0].mxu0 %v1120
      %v5083 = vpop.f32.mrb[0].mxu0
      %v5084 = vadd.f32 %v5041, %v5083
      %v5085 = vpop.f32.mrb[0].mxu0
      %v5086 = vadd.f32 %v5043, %v5085
      %v5087 = vpop.f32.mrb[0].mxu0
      %v5088 = vadd.f32 %v5045, %v5087
      %v5089 = vpop.f32.mrb[0].mxu0
      %v5090 = vadd.f32 %v5047, %v5089
      %5091 = vdwg.mxu0
      %5092 = vmatprep.subr.bf16.mxu0 %v3599
      %5093 = vmatpush1.bf16.msra.mxu0 %v3598
      %5094 = vmatprep.subr.bf16.mxu0 %v3603
      %5095 = vmatpush1.bf16.msra.mxu0 %v3602
      %5096 = vmatprep.subr.bf16.mxu0 %v3607
      %5097 = vmatpush1.bf16.msra.mxu0 %v3606
      %5098 = vmatprep.subr.bf16.mxu0 %v3611
      %5099 = vmatpush1.bf16.msra.mxu0 %v3610
      %5100 = vmatprep.subr.bf16.mxu0 %v3615
      %5101 = vmatpush1.bf16.msra.mxu0 %v3614
      %5102 = vmatprep.subr.bf16.mxu0 %v3619
      %5103 = vmatpush1.bf16.msra.mxu0 %v3618
      %5104 = vmatprep.subr.bf16.mxu0 %v3623
      %5105 = vmatpush1.bf16.msra.mxu0 %v3622
      %5106 = vmatprep.subr.bf16.mxu0 %v3627
      %5107 = vmatpush1.bf16.msra.mxu0 %v3626
      %5108 = vmatprep.subr.bf16.mxu0 %v3631
      %5109 = vmatpush1.bf16.msra.mxu0 %v3630
      %5110 = vmatprep.subr.bf16.mxu0 %v3635
      %5111 = vmatpush1.bf16.msra.mxu0 %v3634
      %5112 = vmatprep.subr.bf16.mxu0 %v3639
      %5113 = vmatpush1.bf16.msra.mxu0 %v3638
      %5114 = vmatprep.subr.bf16.mxu0 %v3643
      %5115 = vmatpush1.bf16.msra.mxu0 %v3642
      %5116 = vmatprep.subr.bf16.mxu0 %v3647
      %5117 = vmatpush1.bf16.msra.mxu0 %v3646
      %5118 = vmatprep.subr.bf16.mxu0 %v3651
      %5119 = vmatpush1.bf16.msra.mxu0 %v3650
      %5120 = vmatprep.subr.bf16.mxu0 %v3655
      %5121 = vmatpush1.bf16.msra.mxu0 %v3654
      %5122 = vmatprep.subr.bf16.mxu0 %v3659
      %5123 = vmatpush1.bf16.msra.mxu0 %v3658
      %5124 = vmatprep.mubr.bf16.mxu0 %v1123
      %5125 = vmatmul.mubr.bf16.gmra.mrb[0].mxu0 %v1122
      %v5126 = vpop.f32.mrb[0].mxu0
      %v5127 = vadd.f32 %v5084, %v5126
      %v5128 = vpop.f32.mrb[0].mxu0
      %v5129 = vadd.f32 %v5086, %v5128
      %v5130 = vpop.f32.mrb[0].mxu0
      %v5131 = vadd.f32 %v5088, %v5130
      %v5132 = vpop.f32.mrb[0].mxu0
      %v5133 = vadd.f32 %v5090, %v5132
      %5134 = vdwg.mxu0
      %5135 = vmatprep.subr.bf16.mxu0 %v3663
      %5136 = vmatpush1.bf16.msra.mxu0 %v3662
      %5137 = vmatprep.subr.bf16.mxu0 %v3667
      %5138 = vmatpush1.bf16.msra.mxu0 %v3666
      %5139 = vmatprep.subr.bf16.mxu0 %v3671
      %5140 = vmatpush1.bf16.msra.mxu0 %v3670
      %5141 = vmatprep.subr.bf16.mxu0 %v3675
      %5142 = vmatpush1.bf16.msra.mxu0 %v3674
      %5143 = vmatprep.subr.bf16.mxu0 %v3679
      %5144 = vmatpush1.bf16.msra.mxu0 %v3678
      %5145 = vmatprep.subr.bf16.mxu0 %v3683
      %5146 = vmatpush1.bf16.msra.mxu0 %v3682
      %5147 = vmatprep.subr.bf16.mxu0 %v3687
      %5148 = vmatpush1.bf16.msra.mxu0 %v3686
      %5149 = vmatprep.subr.bf16.mxu0 %v3691
      %5150 = vmatpush1.bf16.msra.mxu0 %v3690
      %5151 = vmatprep.subr.bf16.mxu0 %v3695
      %5152 = vmatpush1.bf16.msra.mxu0 %v3694
      %5153 = vmatprep.subr.bf16.mxu0 %v3699
      %5154 = vmatpush1.bf16.msra.mxu0 %v3698
      %5155 = vmatprep.subr.bf16.mxu0 %v3703
      %5156 = vmatpush1.bf16.msra.mxu0 %v3702
      %5157 = vmatprep.subr.bf16.mxu0 %v3707
      %5158 = vmatpush1.bf16.msra.mxu0 %v3706
      %5159 = vmatprep.subr.bf16.mxu0 %v3711
      %5160 = vmatpush1.bf16.msra.mxu0 %v3710
      %5161 = vmatprep.subr.bf16.mxu0 %v3715
      %5162 = vmatpush1.bf16.msra.mxu0 %v3714
      %5163 = vmatprep.subr.bf16.mxu0 %v3719
      %5164 = vmatpush1.bf16.msra.mxu0 %v3718
      %5165 = vmatprep.subr.bf16.mxu0 %v3723
      %5166 = vmatpush1.bf16.msra.mxu0 %v3722
      %5167 = vmatprep.mubr.bf16.mxu0 %v1125
      %5168 = vmatmul.mubr.bf16.gmra.mrb[0].mxu0 %v1124
      %v5169 = vpop.f32.mrb[0].mxu0
      %v5170 = vadd.f32 %v5127, %v5169
      %v5171 = vpop.f32.mrb[0].mxu0
      %v5172 = vadd.f32 %v5129, %v5171
      %v5173 = vpop.f32.mrb[0].mxu0
      %v5174 = vadd.f32 %v5131, %v5173
      %v5175 = vpop.f32.mrb[0].mxu0
      %v5176 = vadd.f32 %v5133, %v5175
      %5177 = vdwg.mxu0
      %5178 = vmatprep.subr.bf16.mxu0 %v3727
      %5179 = vmatpush1.bf16.msra.mxu0 %v3726
      %5180 = vmatprep.subr.bf16.mxu0 %v3731
      %5181 = vmatpush1.bf16.msra.mxu0 %v3730
      %5182 = vmatprep.subr.bf16.mxu0 %v3735
      %5183 = vmatpush1.bf16.msra.mxu0 %v3734
      %5184 = vmatprep.subr.bf16.mxu0 %v3739
      %5185 = vmatpush1.bf16.msra.mxu0 %v3738
      %5186 = vmatprep.subr.bf16.mxu0 %v3743
      %5187 = vmatpush1.bf16.msra.mxu0 %v3742
      %5188 = vmatprep.subr.bf16.mxu0 %v3747
      %5189 = vmatpush1.bf16.msra.mxu0 %v3746
      %5190 = vmatprep.subr.bf16.mxu0 %v3751
      %5191 = vmatpush1.bf16.msra.mxu0 %v3750
      %5192 = vmatprep.subr.bf16.mxu0 %v3755
      %5193 = vmatpush1.bf16.msra.mxu0 %v3754
      %5194 = vmatprep.subr.bf16.mxu0 %v3759
      %5195 = vmatpush1.bf16.msra.mxu0 %v3758
      %5196 = vmatprep.subr.bf16.mxu0 %v3763
      %5197 = vmatpush1.bf16.msra.mxu0 %v3762
      %5198 = vmatprep.subr.bf16.mxu0 %v3767
      %5199 = vmatpush1.bf16.msra.mxu0 %v3766
      %5200 = vmatprep.subr.bf16.mxu0 %v3771
      %5201 = vmatpush1.bf16.msra.mxu0 %v3770
      %5202 = vmatprep.subr.bf16.mxu0 %v3775
      %5203 = vmatpush1.bf16.msra.mxu0 %v3774
      %5204 = vmatprep.subr.bf16.mxu0 %v3779
      %5205 = vmatpush1.bf16.msra.mxu0 %v3778
      %5206 = vmatprep.subr.bf16.mxu0 %v3783
      %5207 = vmatpush1.bf16.msra.mxu0 %v3782
      %5208 = vmatprep.subr.bf16.mxu0 %v3787
      %5209 = vmatpush1.bf16.msra.mxu0 %v3786
      %5210 = vmatprep.mubr.bf16.mxu0 %v1127
      %5211 = vmatmul.mubr.bf16.gmra.mrb[0].mxu0 %v1126
      %v5212 = vpop.f32.mrb[0].mxu0
      %v5213 = vadd.f32 %v5170, %v5212
      %v5214 = vpop.f32.mrb[0].mxu0
      %v5215 = vadd.f32 %v5172, %v5214
      %v5216 = vpop.f32.mrb[0].mxu0
      %v5217 = vadd.f32 %v5174, %v5216
      %v5218 = vpop.f32.mrb[0].mxu0
      %v5219 = vadd.f32 %v5176, %v5218
      %5220 = vdwg.mxu0
      %5221 = vmatprep.subr.bf16.mxu0 %v3791
      %5222 = vmatpush1.bf16.msra.mxu0 %v3790
      %5223 = vmatprep.subr.bf16.mxu0 %v3795
      %5224 = vmatpush1.bf16.msra.mxu0 %v3794
      %5225 = vmatprep.subr.bf16.mxu0 %v3799
      %5226 = vmatpush1.bf16.msra.mxu0 %v3798
      %5227 = vmatprep.subr.bf16.mxu0 %v3803
      %5228 = vmatpush1.bf16.msra.mxu0 %v3802
      %5229 = vmatprep.subr.bf16.mxu0 %v3807
      %5230 = vmatpush1.bf16.msra.mxu0 %v3806
      %5231 = vmatprep.subr.bf16.mxu0 %v3811
      %5232 = vmatpush1.bf16.msra.mxu0 %v3810
      %5233 = vmatprep.subr.bf16.mxu0 %v3815
      %5234 = vmatpush1.bf16.msra.mxu0 %v3814
      %5235 = vmatprep.subr.bf16.mxu0 %v3819
      %5236 = vmatpush1.bf16.msra.mxu0 %v3818
      %5237 = vmatprep.subr.bf16.mxu0 %v3823
      %5238 = vmatpush1.bf16.msra.mxu0 %v3822
      %5239 = vmatprep.subr.bf16.mxu0 %v3827
      %5240 = vmatpush1.bf16.msra.mxu0 %v3826
      %5241 = vmatprep.subr.bf16.mxu0 %v3831
      %5242 = vmatpush1.bf16.msra.mxu0 %v3830
      %5243 = vmatprep.subr.bf16.mxu0 %v3835
      %5244 = vmatpush1.bf16.msra.mxu0 %v3834
      %5245 = vmatprep.subr.bf16.mxu0 %v3839
      %5246 = vmatpush1.bf16.msra.mxu0 %v3838
      %5247 = vmatprep.subr.bf16.mxu0 %v3843
      %5248 = vmatpush1.bf16.msra.mxu0 %v3842
      %5249 = vmatprep.subr.bf16.mxu0 %v3847
      %5250 = vmatpush1.bf16.msra.mxu0 %v3846
      %5251 = vmatprep.subr.bf16.mxu0 %v3851
      %5252 = vmatpush1.bf16.msra.mxu0 %v3850
      %5253 = vmatprep.mubr.bf16.mxu0 %v1129
      %5254 = vmatmul.mubr.bf16.gmra.mrb[0].mxu0 %v1128
      %v5255 = vpop.f32.mrb[0].mxu0
      %v5256 = vadd.f32 %v5213, %v5255
      %v5257 = vpop.f32.mrb[0].mxu0
      %v5258 = vadd.f32 %v5215, %v5257
      %v5259 = vpop.f32.mrb[0].mxu0
      %v5260 = vadd.f32 %v5217, %v5259
      %v5261 = vpop.f32.mrb[0].mxu0
      %v5262 = vadd.f32 %v5219, %v5261
      %5263 = vdwg.mxu0
      %5264 = vmatprep.subr.bf16.mxu0 %v3855
      %5265 = vmatpush1.bf16.msra.mxu0 %v3854
      %5266 = vmatprep.subr.bf16.mxu0 %v3859
      %5267 = vmatpush1.bf16.msra.mxu0 %v3858
      %5268 = vmatprep.subr.bf16.mxu0 %v3863
      %5269 = vmatpush1.bf16.msra.mxu0 %v3862
      %5270 = vmatprep.subr.bf16.mxu0 %v3867
      %5271 = vmatpush1.bf16.msra.mxu0 %v3866
      %5272 = vmatprep.subr.bf16.mxu0 %v3871
      %5273 = vmatpush1.bf16.msra.mxu0 %v3870
      %5274 = vmatprep.subr.bf16.mxu0 %v3875
      %5275 = vmatpush1.bf16.msra.mxu0 %v3874
      %5276 = vmatprep.subr.bf16.mxu0 %v3879
      %5277 = vmatpush1.bf16.msra.mxu0 %v3878
      %5278 = vmatprep.subr.bf16.mxu0 %v3883
      %5279 = vmatpush1.bf16.msra.mxu0 %v3882
      %5280 = vmatprep.subr.bf16.mxu0 %v3887
      %5281 = vmatpush1.bf16.msra.mxu0 %v3886
      %5282 = vmatprep.subr.bf16.mxu0 %v3891
      %5283 = vmatpush1.bf16.msra.mxu0 %v3890
      %5284 = vmatprep.subr.bf16.mxu0 %v3895
      %5285 = vmatpush1.bf16.msra.mxu0 %v3894
      %5286 = vmatprep.subr.bf16.mxu0 %v3899
      %5287 = vmatpush1.bf16.msra.mxu0 %v3898
      %5288 = vmatprep.subr.bf16.mxu0 %v3903
      %5289 = vmatpush1.bf16.msra.mxu0 %v3902
      %5290 = vmatprep.subr.bf16.mxu0 %v3907
      %5291 = vmatpush1.bf16.msra.mxu0 %v3906
      %5292 = vmatprep.subr.bf16.mxu0 %v3911
      %5293 = vmatpush1.bf16.msra.mxu0 %v3910
      %5294 = vmatprep.subr.bf16.mxu0 %v3915
      %5295 = vmatpush1.bf16.msra.mxu0 %v3914
      %5296 = vmatprep.mubr.bf16.mxu0 %v1131
      %5297 = vmatmul.mubr.bf16.gmra.mrb[0].mxu0 %v1130
      %v5298 = vpop.f32.mrb[0].mxu0
      %v5299 = vadd.f32 %v5256, %v5298
      %v5300 = vpop.f32.mrb[0].mxu0
      %v5301 = vadd.f32 %v5258, %v5300
      %v5302 = vpop.f32.mrb[0].mxu0
      %v5303 = vadd.f32 %v5260, %v5302
      %v5304 = vpop.f32.mrb[0].mxu0
      %v5305 = vadd.f32 %v5262, %v5304
      %5306 = vdwg.mxu0
      %5307 = vmatprep.subr.bf16.mxu0 %v3919
      %5308 = vmatpush1.bf16.msra.mxu0 %v3918
      %5309 = vmatprep.subr.bf16.mxu0 %v3923
      %5310 = vmatpush1.bf16.msra.mxu0 %v3922
      %5311 = vmatprep.subr.bf16.mxu0 %v3927
      %5312 = vmatpush1.bf16.msra.mxu0 %v3926
      %5313 = vmatprep.subr.bf16.mxu0 %v3931
      %5314 = vmatpush1.bf16.msra.mxu0 %v3930
      %5315 = vmatprep.subr.bf16.mxu0 %v3935
      %5316 = vmatpush1.bf16.msra.mxu0 %v3934
      %5317 = vmatprep.subr.bf16.mxu0 %v3939
      %5318 = vmatpush1.bf16.msra.mxu0 %v3938
      %5319 = vmatprep.subr.bf16.mxu0 %v3943
      %5320 = vmatpush1.bf16.msra.mxu0 %v3942
      %5321 = vmatprep.subr.bf16.mxu0 %v3947
      %5322 = vmatpush1.bf16.msra.mxu0 %v3946
      %5323 = vmatprep.subr.bf16.mxu0 %v3951
      %5324 = vmatpush1.bf16.msra.mxu0 %v3950
      %5325 = vmatprep.subr.bf16.mxu0 %v3955
      %5326 = vmatpush1.bf16.msra.mxu0 %v3954
      %5327 = vmatprep.subr.bf16.mxu0 %v3959
      %5328 = vmatpush1.bf16.msra.mxu0 %v3958
      %5329 = vmatprep.subr.bf16.mxu0 %v3963
      %5330 = vmatpush1.bf16.msra.mxu0 %v3962
      %5331 = vmatprep.subr.bf16.mxu0 %v3967
      %5332 = vmatpush1.bf16.msra.mxu0 %v3966
      %5333 = vmatprep.subr.bf16.mxu0 %v3971
      %5334 = vmatpush1.bf16.msra.mxu0 %v3970
      %5335 = vmatprep.subr.bf16.mxu0 %v3975
      %5336 = vmatpush1.bf16.msra.mxu0 %v3974
      %5337 = vmatprep.subr.bf16.mxu0 %v3979
      %5338 = vmatpush1.bf16.msra.mxu0 %v3978
      %5339 = vmatprep.mubr.bf16.mxu0 %v1133
      %5340 = vmatmul.mubr.bf16.gmra.mrb[0].mxu0 %v1132
      %v5341 = vpop.f32.mrb[0].mxu0
      %v5342 = vadd.f32 %v5299, %v5341
      %v5343 = vpop.f32.mrb[0].mxu0
      %v5344 = vadd.f32 %v5301, %v5343
      %v5345 = vpop.f32.mrb[0].mxu0
      %v5346 = vadd.f32 %v5303, %v5345
      %v5347 = vpop.f32.mrb[0].mxu0
      %v5348 = vadd.f32 %v5305, %v5347
      %5349 = vdwg.mxu0
      %5350 = vmatprep.subr.bf16.mxu0 %v3983
      %5351 = vmatpush1.bf16.msra.mxu0 %v3982
      %5352 = vmatprep.subr.bf16.mxu0 %v3987
      %5353 = vmatpush1.bf16.msra.mxu0 %v3986
      %5354 = vmatprep.subr.bf16.mxu0 %v3991
      %5355 = vmatpush1.bf16.msra.mxu0 %v3990
      %5356 = vmatprep.subr.bf16.mxu0 %v3995
      %5357 = vmatpush1.bf16.msra.mxu0 %v3994
      %5358 = vmatprep.subr.bf16.mxu0 %v3999
      %5359 = vmatpush1.bf16.msra.mxu0 %v3998
      %5360 = vmatprep.subr.bf16.mxu0 %v4003
      %5361 = vmatpush1.bf16.msra.mxu0 %v4002
      %5362 = vmatprep.subr.bf16.mxu0 %v4007
      %5363 = vmatpush1.bf16.msra.mxu0 %v4006
      %5364 = vmatprep.subr.bf16.mxu0 %v4011
      %5365 = vmatpush1.bf16.msra.mxu0 %v4010
      %5366 = vmatprep.subr.bf16.mxu0 %v4015
      %5367 = vmatpush1.bf16.msra.mxu0 %v4014
      %5368 = vmatprep.subr.bf16.mxu0 %v4019
      %5369 = vmatpush1.bf16.msra.mxu0 %v4018
      %5370 = vmatprep.subr.bf16.mxu0 %v4023
      %5371 = vmatpush1.bf16.msra.mxu0 %v4022
      %5372 = vmatprep.subr.bf16.mxu0 %v4027
      %5373 = vmatpush1.bf16.msra.mxu0 %v4026
      %5374 = vmatprep.subr.bf16.mxu0 %v4031
      %5375 = vmatpush1.bf16.msra.mxu0 %v4030
      %5376 = vmatprep.subr.bf16.mxu0 %v4035
      %5377 = vmatpush1.bf16.msra.mxu0 %v4034
      %5378 = vmatprep.subr.bf16.mxu0 %v4039
      %5379 = vmatpush1.bf16.msra.mxu0 %v4038
      %5380 = vmatprep.subr.bf16.mxu0 %v4043
      %5381 = vmatpush1.bf16.msra.mxu0 %v4042
      %5382 = vmatprep.mubr.bf16.mxu0 %v1135
      %5383 = vmatmul.mubr.bf16.gmra.mrb[0].mxu0 %v1134
      %v5384 = vpop.f32.mrb[0].mxu0
      %v5385 = vadd.f32 %v5342, %v5384
      %v5386 = vpop.f32.mrb[0].mxu0
      %v5387 = vadd.f32 %v5344, %v5386
      %v5388 = vpop.f32.mrb[0].mxu0
      %v5389 = vadd.f32 %v5346, %v5388
      %v5390 = vpop.f32.mrb[0].mxu0
      %v5391 = vadd.f32 %v5348, %v5390
      %5392 = vdwg.mxu0
      %5393 = vmatprep.subr.bf16.mxu0 %v4047
      %5394 = vmatpush1.bf16.msra.mxu0 %v4046
      %5395 = vmatprep.subr.bf16.mxu0 %v4051
      %5396 = vmatpush1.bf16.msra.mxu0 %v4050
      %5397 = vmatprep.subr.bf16.mxu0 %v4055
      %5398 = vmatpush1.bf16.msra.mxu0 %v4054
      %5399 = vmatprep.subr.bf16.mxu0 %v4059
      %5400 = vmatpush1.bf16.msra.mxu0 %v4058
      %5401 = vmatprep.subr.bf16.mxu0 %v4063
      %5402 = vmatpush1.bf16.msra.mxu0 %v4062
      %5403 = vmatprep.subr.bf16.mxu0 %v4067
      %5404 = vmatpush1.bf16.msra.mxu0 %v4066
      %5405 = vmatprep.subr.bf16.mxu0 %v4071
      %5406 = vmatpush1.bf16.msra.mxu0 %v4070
      %5407 = vmatprep.subr.bf16.mxu0 %v4075
      %5408 = vmatpush1.bf16.msra.mxu0 %v4074
      %5409 = vmatprep.subr.bf16.mxu0 %v4079
      %5410 = vmatpush1.bf16.msra.mxu0 %v4078
      %5411 = vmatprep.subr.bf16.mxu0 %v4083
      %5412 = vmatpush1.bf16.msra.mxu0 %v4082
      %5413 = vmatprep.subr.bf16.mxu0 %v4087
      %5414 = vmatpush1.bf16.msra.mxu0 %v4086
      %5415 = vmatprep.subr.bf16.mxu0 %v4091
      %5416 = vmatpush1.bf16.msra.mxu0 %v4090
      %5417 = vmatprep.subr.bf16.mxu0 %v4095
      %5418 = vmatpush1.bf16.msra.mxu0 %v4094
      %5419 = vmatprep.subr.bf16.mxu0 %v4099
      %5420 = vmatpush1.bf16.msra.mxu0 %v4098
      %5421 = vmatprep.subr.bf16.mxu0 %v4103
      %5422 = vmatpush1.bf16.msra.mxu0 %v4102
      %5423 = vmatprep.subr.bf16.mxu0 %v4107
      %5424 = vmatpush1.bf16.msra.mxu0 %v4106
      %5425 = vmatprep.mubr.bf16.mxu0 %v1137
      %5426 = vmatmul.mubr.bf16.gmra.mrb[0].mxu0 %v1136
      %v5427 = vpop.f32.mrb[0].mxu0
      %v5428 = vadd.f32 %v5385, %v5427
      %v5429 = vpop.f32.mrb[0].mxu0
      %v5430 = vadd.f32 %v5387, %v5429
      %v5431 = vpop.f32.mrb[0].mxu0
      %v5432 = vadd.f32 %v5389, %v5431
      %v5433 = vpop.f32.mrb[0].mxu0
      %v5434 = vadd.f32 %v5391, %v5433
      %5435 = vdwg.mxu0
      %5436 = vmatprep.subr.bf16.mxu0 %v4111
      %5437 = vmatpush1.bf16.msra.mxu0 %v4110
      %5438 = vmatprep.subr.bf16.mxu0 %v4115
      %5439 = vmatpush1.bf16.msra.mxu0 %v4114
      %5440 = vmatprep.subr.bf16.mxu0 %v4119
      %5441 = vmatpush1.bf16.msra.mxu0 %v4118
      %5442 = vmatprep.subr.bf16.mxu0 %v4123
      %5443 = vmatpush1.bf16.msra.mxu0 %v4122
      %5444 = vmatprep.subr.bf16.mxu0 %v4127
      %5445 = vmatpush1.bf16.msra.mxu0 %v4126
      %5446 = vmatprep.subr.bf16.mxu0 %v4131
      %5447 = vmatpush1.bf16.msra.mxu0 %v4130
      %5448 = vmatprep.subr.bf16.mxu0 %v4135
      %5449 = vmatpush1.bf16.msra.mxu0 %v4134
      %5450 = vmatprep.subr.bf16.mxu0 %v4139
      %5451 = vmatpush1.bf16.msra.mxu0 %v4138
      %5452 = vmatprep.subr.bf16.mxu0 %v4143
      %5453 = vmatpush1.bf16.msra.mxu0 %v4142
      %5454 = vmatprep.subr.bf16.mxu0 %v4147
      %5455 = vmatpush1.bf16.msra.mxu0 %v4146
      %5456 = vmatprep.subr.bf16.mxu0 %v4151
      %5457 = vmatpush1.bf16.msra.mxu0 %v4150
      %5458 = vmatprep.subr.bf16.mxu0 %v4155
      %5459 = vmatpush1.bf16.msra.mxu0 %v4154
      %5460 = vmatprep.subr.bf16.mxu0 %v4159
      %5461 = vmatpush1.bf16.msra.mxu0 %v4158
      %5462 = vmatprep.subr.bf16.mxu0 %v4163
      %5463 = vmatpush1.bf16.msra.mxu0 %v4162
      %5464 = vmatprep.subr.bf16.mxu0 %v4167
      %5465 = vmatpush1.bf16.msra.mxu0 %v4166
      %5466 = vmatprep.subr.bf16.mxu0 %v4171
      %5467 = vmatpush1.bf16.msra.mxu0 %v4170
      %5468 = vmatprep.mubr.bf16.mxu0 %v1139
      %5469 = vmatmul.mubr.bf16.gmra.mrb[0].mxu0 %v1138
      %v5470 = vpop.f32.mrb[0].mxu0
      %v5471 = vadd.f32 %v5428, %v5470
      %v5472 = vpop.f32.mrb[0].mxu0
      %v5473 = vadd.f32 %v5430, %v5472
      %v5474 = vpop.f32.mrb[0].mxu0
      %v5475 = vadd.f32 %v5432, %v5474
      %v5476 = vpop.f32.mrb[0].mxu0
      %v5477 = vadd.f32 %v5434, %v5476
      %5478 = vdwg.mxu0
      %5479 = vmatprep.subr.bf16.mxu0 %v4175
      %5480 = vmatpush1.bf16.msra.mxu0 %v4174
      %5481 = vmatprep.subr.bf16.mxu0 %v4179
      %5482 = vmatpush1.bf16.msra.mxu0 %v4178
      %5483 = vmatprep.subr.bf16.mxu0 %v4183
      %5484 = vmatpush1.bf16.msra.mxu0 %v4182
      %5485 = vmatprep.subr.bf16.mxu0 %v4187
      %5486 = vmatpush1.bf16.msra.mxu0 %v4186
      %5487 = vmatprep.subr.bf16.mxu0 %v4191
      %5488 = vmatpush1.bf16.msra.mxu0 %v4190
      %5489 = vmatprep.subr.bf16.mxu0 %v4195
      %5490 = vmatpush1.bf16.msra.mxu0 %v4194
      %5491 = vmatprep.subr.bf16.mxu0 %v4199
      %5492 = vmatpush1.bf16.msra.mxu0 %v4198
      %5493 = vmatprep.subr.bf16.mxu0 %v4203
      %5494 = vmatpush1.bf16.msra.mxu0 %v4202
      %5495 = vmatprep.subr.bf16.mxu0 %v4207
      %5496 = vmatpush1.bf16.msra.mxu0 %v4206
      %5497 = vmatprep.subr.bf16.mxu0 %v4211
      %5498 = vmatpush1.bf16.msra.mxu0 %v4210
      %5499 = vmatprep.subr.bf16.mxu0 %v4215
      %5500 = vmatpush1.bf16.msra.mxu0 %v4214
      %5501 = vmatprep.subr.bf16.mxu0 %v4219
      %5502 = vmatpush1.bf16.msra.mxu0 %v4218
      %5503 = vmatprep.subr.bf16.mxu0 %v4223
      %5504 = vmatpush1.bf16.msra.mxu0 %v4222
      %5505 = vmatprep.subr.bf16.mxu0 %v4227
      %5506 = vmatpush1.bf16.msra.mxu0 %v4226
      %5507 = vmatprep.subr.bf16.mxu0 %v4231
      %5508 = vmatpush1.bf16.msra.mxu0 %v4230
      %5509 = vmatprep.subr.bf16.mxu0 %v4235
      %5510 = vmatpush1.bf16.msra.mxu0 %v4234
      %5511 = vmatprep.mubr.bf16.mxu0 %v1141
      %5512 = vmatmul.mubr.bf16.gmra.mrb[0].mxu0 %v1140
      %v5513 = vpop.f32.mrb[0].mxu0
      %v5514 = vadd.f32 %v5471, %v5513
      %v5515 = vpop.f32.mrb[0].mxu0
      %v5516 = vadd.f32 %v5473, %v5515
      %v5517 = vpop.f32.mrb[0].mxu0
      %v5518 = vadd.f32 %v5475, %v5517
      %v5519 = vpop.f32.mrb[0].mxu0
      %v5520 = vadd.f32 %v5477, %v5519
      %5521 = vdwg.mxu0
      %5522 = vmatprep.subr.bf16.mxu0 %v3473
      %5523 = vmatpush1.bf16.msra.mxu0 %v3472
      %5524 = vmatprep.subr.bf16.mxu0 %v3477
      %5525 = vmatpush1.bf16.msra.mxu0 %v3476
      %5526 = vmatprep.subr.bf16.mxu0 %v3481
      %5527 = vmatpush1.bf16.msra.mxu0 %v3480
      %5528 = vmatprep.subr.bf16.mxu0 %v3485
      %5529 = vmatpush1.bf16.msra.mxu0 %v3484
      %5530 = vmatprep.subr.bf16.mxu0 %v3489
      %5531 = vmatpush1.bf16.msra.mxu0 %v3488
      %5532 = vmatprep.subr.bf16.mxu0 %v3493
      %5533 = vmatpush1.bf16.msra.mxu0 %v3492
      %5534 = vmatprep.subr.bf16.mxu0 %v3497
      %5535 = vmatpush1.bf16.msra.mxu0 %v3496
      %5536 = vmatprep.subr.bf16.mxu0 %v3501
      %5537 = vmatpush1.bf16.msra.mxu0 %v3500
      %5538 = vmatprep.subr.bf16.mxu0 %v3505
      %5539 = vmatpush1.bf16.msra.mxu0 %v3504
      %5540 = vmatprep.subr.bf16.mxu0 %v3509
      %5541 = vmatpush1.bf16.msra.mxu0 %v3508
      %5542 = vmatprep.subr.bf16.mxu0 %v3513
      %5543 = vmatpush1.bf16.msra.mxu0 %v3512
      %5544 = vmatprep.subr.bf16.mxu0 %v3517
      %5545 = vmatpush1.bf16.msra.mxu0 %v3516
      %5546 = vmatprep.subr.bf16.mxu0 %v3521
      %5547 = vmatpush1.bf16.msra.mxu0 %v3520
      %5548 = vmatprep.subr.bf16.mxu0 %v3525
      %5549 = vmatpush1.bf16.msra.mxu0 %v3524
      %5550 = vmatprep.subr.bf16.mxu0 %v3529
      %5551 = vmatpush1.bf16.msra.mxu0 %v3528
      %5552 = vmatprep.subr.bf16.mxu0 %v3533
      %5553 = vmatpush1.bf16.msra.mxu0 %v3532
      %5554 = vmatprep.mubr.bf16.mxu0 %v1119
      %5555 = vmatmul.mubr.bf16.gmra.mrb[0].mxu0 %v1118
      %v5556 = vpop.f32.mrb[0].mxu0
      %v5557 = vadd.f32 %v1037, %v5556
      %v5558 = vpop.f32.mrb[0].mxu0
      %v5559 = vadd.f32 %v1041, %v5558
      %v5560 = vpop.f32.mrb[0].mxu0
      %v5561 = vadd.f32 %v1037, %v5560
      %v5562 = vpop.f32.mrb[0].mxu0
      %v5563 = vadd.f32 %v1041, %v5562
      %5564 = vdwg.mxu0
      %5565 = vmatprep.subr.bf16.mxu0 %v3537
      %5566 = vmatpush1.bf16.msra.mxu0 %v3536
      %5567 = vmatprep.subr.bf16.mxu0 %v3541
      %5568 = vmatpush1.bf16.msra.mxu0 %v3540
      %5569 = vmatprep.subr.bf16.mxu0 %v3545
      %5570 = vmatpush1.bf16.msra.mxu0 %v3544
      %5571 = vmatprep.subr.bf16.mxu0 %v3549
      %5572 = vmatpush1.bf16.msra.mxu0 %v3548
      %5573 = vmatprep.subr.bf16.mxu0 %v3553
      %5574 = vmatpush1.bf16.msra.mxu0 %v3552
      %5575 = vmatprep.subr.bf16.mxu0 %v3557
      %5576 = vmatpush1.bf16.msra.mxu0 %v3556
      %5577 = vmatprep.subr.bf16.mxu0 %v3561
      %5578 = vmatpush1.bf16.msra.mxu0 %v3560
      %5579 = vmatprep.subr.bf16.mxu0 %v3565
      %5580 = vmatpush1.bf16.msra.mxu0 %v3564
      %5581 = vmatprep.subr.bf16.mxu0 %v3569
      %5582 = vmatpush1.bf16.msra.mxu0 %v3568
      %5583 = vmatprep.subr.bf16.mxu0 %v3573
      %5584 = vmatpush1.bf16.msra.mxu0 %v3572
      %5585 = vmatprep.subr.bf16.mxu0 %v3577
      %5586 = vmatpush1.bf16.msra.mxu0 %v3576
      %5587 = vmatprep.subr.bf16.mxu0 %v3581
      %5588 = vmatpush1.bf16.msra.mxu0 %v3580
      %5589 = vmatprep.subr.bf16.mxu0 %v3585
      %5590 = vmatpush1.bf16.msra.mxu0 %v3584
      %5591 = vmatprep.subr.bf16.mxu0 %v3589
      %5592 = vmatpush1.bf16.msra.mxu0 %v3588
      %5593 = vmatprep.subr.bf16.mxu0 %v3593
      %5594 = vmatpush1.bf16.msra.mxu0 %v3592
      %5595 = vmatprep.subr.bf16.mxu0 %v3597
      %5596 = vmatpush1.bf16.msra.mxu0 %v3596
      %5597 = vmatprep.mubr.bf16.mxu0 %v1121
      %5598 = vmatmul.mubr.bf16.gmra.mrb[0].mxu0 %v1120
      %v5599 = vpop.f32.mrb[0].mxu0
      %v5600 = vadd.f32 %v5557, %v5599
      %v5601 = vpop.f32.mrb[0].mxu0
      %v5602 = vadd.f32 %v5559, %v5601
      %v5603 = vpop.f32.mrb[0].mxu0
      %v5604 = vadd.f32 %v5561, %v5603
      %v5605 = vpop.f32.mrb[0].mxu0
      %v5606 = vadd.f32 %v5563, %v5605
      %5607 = vdwg.mxu0
      %5608 = vmatprep.subr.bf16.mxu0 %v3601
      %5609 = vmatpush1.bf16.msra.mxu0 %v3600
      %5610 = vmatprep.subr.bf16.mxu0 %v3605
      %5611 = vmatpush1.bf16.msra.mxu0 %v3604
      %5612 = vmatprep.subr.bf16.mxu0 %v3609
      %5613 = vmatpush1.bf16.msra.mxu0 %v3608
      %5614 = vmatprep.subr.bf16.mxu0 %v3613
      %5615 = vmatpush1.bf16.msra.mxu0 %v3612
      %5616 = vmatprep.subr.bf16.mxu0 %v3617
      %5617 = vmatpush1.bf16.msra.mxu0 %v3616
      %5618 = vmatprep.subr.bf16.mxu0 %v3621
      %5619 = vmatpush1.bf16.msra.mxu0 %v3620
      %5620 = vmatprep.subr.bf16.mxu0 %v3625
      %5621 = vmatpush1.bf16.msra.mxu0 %v3624
      %5622 = vmatprep.subr.bf16.mxu0 %v3629
      %5623 = vmatpush1.bf16.msra.mxu0 %v3628
      %5624 = vmatprep.subr.bf16.mxu0 %v3633
      %5625 = vmatpush1.bf16.msra.mxu0 %v3632
      %5626 = vmatprep.subr.bf16.mxu0 %v3637
      %5627 = vmatpush1.bf16.msra.mxu0 %v3636
      %5628 = vmatprep.subr.bf16.mxu0 %v3641
      %5629 = vmatpush1.bf16.msra.mxu0 %v3640
      %5630 = vmatprep.subr.bf16.mxu0 %v3645
      %5631 = vmatpush1.bf16.msra.mxu0 %v3644
      %5632 = vmatprep.subr.bf16.mxu0 %v3649
      %5633 = vmatpush1.bf16.msra.mxu0 %v3648
      %5634 = vmatprep.subr.bf16.mxu0 %v3653
      %5635 = vmatpush1.bf16.msra.mxu0 %v3652
      %5636 = vmatprep.subr.bf16.mxu0 %v3657
      %5637 = vmatpush1.bf16.msra.mxu0 %v3656
      %5638 = vmatprep.subr.bf16.mxu0 %v3661
      %5639 = vmatpush1.bf16.msra.mxu0 %v3660
      %5640 = vmatprep.mubr.bf16.mxu0 %v1123
      %5641 = vmatmul.mubr.bf16.gmra.mrb[0].mxu0 %v1122
      %v5642 = vpop.f32.mrb[0].mxu0
      %v5643 = vadd.f32 %v5600, %v5642
      %v5644 = vpop.f32.mrb[0].mxu0
      %v5645 = vadd.f32 %v5602, %v5644
      %v5646 = vpop.f32.mrb[0].mxu0
      %v5647 = vadd.f32 %v5604, %v5646
      %v5648 = vpop.f32.mrb[0].mxu0
      %v5649 = vadd.f32 %v5606, %v5648
      %5650 = vdwg.mxu0
      %5651 = vmatprep.subr.bf16.mxu0 %v3665
      %5652 = vmatpush1.bf16.msra.mxu0 %v3664
      %5653 = vmatprep.subr.bf16.mxu0 %v3669
      %5654 = vmatpush1.bf16.msra.mxu0 %v3668
      %5655 = vmatprep.subr.bf16.mxu0 %v3673
      %5656 = vmatpush1.bf16.msra.mxu0 %v3672
      %5657 = vmatprep.subr.bf16.mxu0 %v3677
      %5658 = vmatpush1.bf16.msra.mxu0 %v3676
      %5659 = vmatprep.subr.bf16.mxu0 %v3681
      %5660 = vmatpush1.bf16.msra.mxu0 %v3680
      %5661 = vmatprep.subr.bf16.mxu0 %v3685
      %5662 = vmatpush1.bf16.msra.mxu0 %v3684
      %5663 = vmatprep.subr.bf16.mxu0 %v3689
      %5664 = vmatpush1.bf16.msra.mxu0 %v3688
      %5665 = vmatprep.subr.bf16.mxu0 %v3693
      %5666 = vmatpush1.bf16.msra.mxu0 %v3692
      %5667 = vmatprep.subr.bf16.mxu0 %v3697
      %5668 = vmatpush1.bf16.msra.mxu0 %v3696
      %5669 = vmatprep.subr.bf16.mxu0 %v3701
      %5670 = vmatpush1.bf16.msra.mxu0 %v3700
      %5671 = vmatprep.subr.bf16.mxu0 %v3705
      %5672 = vmatpush1.bf16.msra.mxu0 %v3704
      %5673 = vmatprep.subr.bf16.mxu0 %v3709
      %5674 = vmatpush1.bf16.msra.mxu0 %v3708
      %5675 = vmatprep.subr.bf16.mxu0 %v3713
      %5676 = vmatpush1.bf16.msra.mxu0 %v3712
      %5677 = vmatprep.subr.bf16.mxu0 %v3717
      %5678 = vmatpush1.bf16.msra.mxu0 %v3716
      %5679 = vmatprep.subr.bf16.mxu0 %v3721
      %5680 = vmatpush1.bf16.msra.mxu0 %v3720
      %5681 = vmatprep.subr.bf16.mxu0 %v3725
      %5682 = vmatpush1.bf16.msra.mxu0 %v3724
      %5683 = vmatprep.mubr.bf16.mxu0 %v1125
      %5684 = vmatmul.mubr.bf16.gmra.mrb[0].mxu0 %v1124
      %v5685 = vpop.f32.mrb[0].mxu0
      %v5686 = vadd.f32 %v5643, %v5685
      %v5687 = vpop.f32.mrb[0].mxu0
      %v5688 = vadd.f32 %v5645, %v5687
      %v5689 = vpop.f32.mrb[0].mxu0
      %v5690 = vadd.f32 %v5647, %v5689
      %v5691 = vpop.f32.mrb[0].mxu0
      %v5692 = vadd.f32 %v5649, %v5691
      %5693 = vdwg.mxu0
      %5694 = vmatprep.subr.bf16.mxu0 %v3729
      %5695 = vmatpush1.bf16.msra.mxu0 %v3728
      %5696 = vmatprep.subr.bf16.mxu0 %v3733
      %5697 = vmatpush1.bf16.msra.mxu0 %v3732
      %5698 = vmatprep.subr.bf16.mxu0 %v3737
      %5699 = vmatpush1.bf16.msra.mxu0 %v3736
      %5700 = vmatprep.subr.bf16.mxu0 %v3741
      %5701 = vmatpush1.bf16.msra.mxu0 %v3740
      %5702 = vmatprep.subr.bf16.mxu0 %v3745
      %5703 = vmatpush1.bf16.msra.mxu0 %v3744
      %5704 = vmatprep.subr.bf16.mxu0 %v3749
      %5705 = vmatpush1.bf16.msra.mxu0 %v3748
      %5706 = vmatprep.subr.bf16.mxu0 %v3753
      %5707 = vmatpush1.bf16.msra.mxu0 %v3752
      %5708 = vmatprep.subr.bf16.mxu0 %v3757
      %5709 = vmatpush1.bf16.msra.mxu0 %v3756
      %5710 = vmatprep.subr.bf16.mxu0 %v3761
      %5711 = vmatpush1.bf16.msra.mxu0 %v3760
      %5712 = vmatprep.subr.bf16.mxu0 %v3765
      %5713 = vmatpush1.bf16.msra.mxu0 %v3764
      %5714 = vmatprep.subr.bf16.mxu0 %v3769
      %5715 = vmatpush1.bf16.msra.mxu0 %v3768
      %5716 = vmatprep.subr.bf16.mxu0 %v3773
      %5717 = vmatpush1.bf16.msra.mxu0 %v3772
      %5718 = vmatprep.subr.bf16.mxu0 %v3777
      %5719 = vmatpush1.bf16.msra.mxu0 %v3776
      %5720 = vmatprep.subr.bf16.mxu0 %v3781
      %5721 = vmatpush1.bf16.msra.mxu0 %v3780
      %5722 = vmatprep.subr.bf16.mxu0 %v3785
      %5723 = vmatpush1.bf16.msra.mxu0 %v3784
      %5724 = vmatprep.subr.bf16.mxu0 %v3789
      %5725 = vmatpush1.bf16.msra.mxu0 %v3788
      %5726 = vmatprep.mubr.bf16.mxu0 %v1127
      %5727 = vmatmul.mubr.bf16.gmra.mrb[0].mxu0 %v1126
      %v5728 = vpop.f32.mrb[0].mxu0
      %v5729 = vadd.f32 %v5686, %v5728
      %v5730 = vpop.f32.mrb[0].mxu0
      %v5731 = vadd.f32 %v5688, %v5730
      %v5732 = vpop.f32.mrb[0].mxu0
      %v5733 = vadd.f32 %v5690, %v5732
      %v5734 = vpop.f32.mrb[0].mxu0
      %v5735 = vadd.f32 %v5692, %v5734
      %5736 = vdwg.mxu0
      %5737 = vmatprep.subr.bf16.mxu0 %v3793
      %5738 = vmatpush1.bf16.msra.mxu0 %v3792
      %5739 = vmatprep.subr.bf16.mxu0 %v3797
      %5740 = vmatpush1.bf16.msra.mxu0 %v3796
      %5741 = vmatprep.subr.bf16.mxu0 %v3801
      %5742 = vmatpush1.bf16.msra.mxu0 %v3800
      %5743 = vmatprep.subr.bf16.mxu0 %v3805
      %5744 = vmatpush1.bf16.msra.mxu0 %v3804
      %5745 = vmatprep.subr.bf16.mxu0 %v3809
      %5746 = vmatpush1.bf16.msra.mxu0 %v3808
      %5747 = vmatprep.subr.bf16.mxu0 %v3813
      %5748 = vmatpush1.bf16.msra.mxu0 %v3812
      %5749 = vmatprep.subr.bf16.mxu0 %v3817
      %5750 = vmatpush1.bf16.msra.mxu0 %v3816
      %5751 = vmatprep.subr.bf16.mxu0 %v3821
      %5752 = vmatpush1.bf16.msra.mxu0 %v3820
      %5753 = vmatprep.subr.bf16.mxu0 %v3825
      %5754 = vmatpush1.bf16.msra.mxu0 %v3824
      %5755 = vmatprep.subr.bf16.mxu0 %v3829
      %5756 = vmatpush1.bf16.msra.mxu0 %v3828
      %5757 = vmatprep.subr.bf16.mxu0 %v3833
      %5758 = vmatpush1.bf16.msra.mxu0 %v3832
      %5759 = vmatprep.subr.bf16.mxu0 %v3837
      %5760 = vmatpush1.bf16.msra.mxu0 %v3836
      %5761 = vmatprep.subr.bf16.mxu0 %v3841
      %5762 = vmatpush1.bf16.msra.mxu0 %v3840
      %5763 = vmatprep.subr.bf16.mxu0 %v3845
      %5764 = vmatpush1.bf16.msra.mxu0 %v3844
      %5765 = vmatprep.subr.bf16.mxu0 %v3849
      %5766 = vmatpush1.bf16.msra.mxu0 %v3848
      %5767 = vmatprep.subr.bf16.mxu0 %v3853
      %5768 = vmatpush1.bf16.msra.mxu0 %v3852
      %5769 = vmatprep.mubr.bf16.mxu0 %v1129
      %5770 = vmatmul.mubr.bf16.gmra.mrb[0].mxu0 %v1128
      %v5771 = vpop.f32.mrb[0].mxu0
      %v5772 = vadd.f32 %v5729, %v5771
      %v5773 = vpop.f32.mrb[0].mxu0
      %v5774 = vadd.f32 %v5731, %v5773
      %v5775 = vpop.f32.mrb[0].mxu0
      %v5776 = vadd.f32 %v5733, %v5775
      %v5777 = vpop.f32.mrb[0].mxu0
      %v5778 = vadd.f32 %v5735, %v5777
      %5779 = vdwg.mxu0
      %5780 = vmatprep.subr.bf16.mxu0 %v3857
      %5781 = vmatpush1.bf16.msra.mxu0 %v3856
      %5782 = vmatprep.subr.bf16.mxu0 %v3861
      %5783 = vmatpush1.bf16.msra.mxu0 %v3860
      %5784 = vmatprep.subr.bf16.mxu0 %v3865
      %5785 = vmatpush1.bf16.msra.mxu0 %v3864
      %5786 = vmatprep.subr.bf16.mxu0 %v3869
      %5787 = vmatpush1.bf16.msra.mxu0 %v3868
      %5788 = vmatprep.subr.bf16.mxu0 %v3873
      %5789 = vmatpush1.bf16.msra.mxu0 %v3872
      %5790 = vmatprep.subr.bf16.mxu0 %v3877
      %5791 = vmatpush1.bf16.msra.mxu0 %v3876
      %5792 = vmatprep.subr.bf16.mxu0 %v3881
      %5793 = vmatpush1.bf16.msra.mxu0 %v3880
      %5794 = vmatprep.subr.bf16.mxu0 %v3885
      %5795 = vmatpush1.bf16.msra.mxu0 %v3884
      %5796 = vmatprep.subr.bf16.mxu0 %v3889
      %5797 = vmatpush1.bf16.msra.mxu0 %v3888
      %5798 = vmatprep.subr.bf16.mxu0 %v3893
      %5799 = vmatpush1.bf16.msra.mxu0 %v3892
      %5800 = vmatprep.subr.bf16.mxu0 %v3897
      %5801 = vmatpush1.bf16.msra.mxu0 %v3896
      %5802 = vmatprep.subr.bf16.mxu0 %v3901
      %5803 = vmatpush1.bf16.msra.mxu0 %v3900
      %5804 = vmatprep.subr.bf16.mxu0 %v3905
      %5805 = vmatpush1.bf16.msra.mxu0 %v3904
      %5806 = vmatprep.subr.bf16.mxu0 %v3909
      %5807 = vmatpush1.bf16.msra.mxu0 %v3908
      %5808 = vmatprep.subr.bf16.mxu0 %v3913
      %5809 = vmatpush1.bf16.msra.mxu0 %v3912
      %5810 = vmatprep.subr.bf16.mxu0 %v3917
      %5811 = vmatpush1.bf16.msra.mxu0 %v3916
      %5812 = vmatprep.mubr.bf16.mxu0 %v1131
      %5813 = vmatmul.mubr.bf16.gmra.mrb[0].mxu0 %v1130
      %v5814 = vpop.f32.mrb[0].mxu0
      %v5815 = vadd.f32 %v5772, %v5814
      %v5816 = vpop.f32.mrb[0].mxu0
      %v5817 = vadd.f32 %v5774, %v5816
      %v5818 = vpop.f32.mrb[0].mxu0
      %v5819 = vadd.f32 %v5776, %v5818
      %v5820 = vpop.f32.mrb[0].mxu0
      %v5821 = vadd.f32 %v5778, %v5820
      %5822 = vdwg.mxu0
      %5823 = vmatprep.subr.bf16.mxu0 %v3921
      %5824 = vmatpush1.bf16.msra.mxu0 %v3920
      %5825 = vmatprep.subr.bf16.mxu0 %v3925
      %5826 = vmatpush1.bf16.msra.mxu0 %v3924
      %5827 = vmatprep.subr.bf16.mxu0 %v3929
      %5828 = vmatpush1.bf16.msra.mxu0 %v3928
      %5829 = vmatprep.subr.bf16.mxu0 %v3933
      %5830 = vmatpush1.bf16.msra.mxu0 %v3932
      %5831 = vmatprep.subr.bf16.mxu0 %v3937
      %5832 = vmatpush1.bf16.msra.mxu0 %v3936
      %5833 = vmatprep.subr.bf16.mxu0 %v3941
      %5834 = vmatpush1.bf16.msra.mxu0 %v3940
      %5835 = vmatprep.subr.bf16.mxu0 %v3945
      %5836 = vmatpush1.bf16.msra.mxu0 %v3944
      %5837 = vmatprep.subr.bf16.mxu0 %v3949
      %5838 = vmatpush1.bf16.msra.mxu0 %v3948
      %5839 = vmatprep.subr.bf16.mxu0 %v3953
      %5840 = vmatpush1.bf16.msra.mxu0 %v3952
      %5841 = vmatprep.subr.bf16.mxu0 %v3957
      %5842 = vmatpush1.bf16.msra.mxu0 %v3956
      %5843 = vmatprep.subr.bf16.mxu0 %v3961
      %5844 = vmatpush1.bf16.msra.mxu0 %v3960
      %5845 = vmatprep.subr.bf16.mxu0 %v3965
      %5846 = vmatpush1.bf16.msra.mxu0 %v3964
      %5847 = vmatprep.subr.bf16.mxu0 %v3969
      %5848 = vmatpush1.bf16.msra.mxu0 %v3968
      %5849 = vmatprep.subr.bf16.mxu0 %v3973
      %5850 = vmatpush1.bf16.msra.mxu0 %v3972
      %5851 = vmatprep.subr.bf16.mxu0 %v3977
      %5852 = vmatpush1.bf16.msra.mxu0 %v3976
      %5853 = vmatprep.subr.bf16.mxu0 %v3981
      %5854 = vmatpush1.bf16.msra.mxu0 %v3980
      %5855 = vmatprep.mubr.bf16.mxu0 %v1133
      %5856 = vmatmul.mubr.bf16.gmra.mrb[0].mxu0 %v1132
      %v5857 = vpop.f32.mrb[0].mxu0
      %v5858 = vadd.f32 %v5815, %v5857
      %v5859 = vpop.f32.mrb[0].mxu0
      %v5860 = vadd.f32 %v5817, %v5859
      %v5861 = vpop.f32.mrb[0].mxu0
      %v5862 = vadd.f32 %v5819, %v5861
      %v5863 = vpop.f32.mrb[0].mxu0
      %v5864 = vadd.f32 %v5821, %v5863
      %5865 = vdwg.mxu0
      %5866 = vmatprep.subr.bf16.mxu0 %v3985
      %5867 = vmatpush1.bf16.msra.mxu0 %v3984
      %5868 = vmatprep.subr.bf16.mxu0 %v3989
      %5869 = vmatpush1.bf16.msra.mxu0 %v3988
      %5870 = vmatprep.subr.bf16.mxu0 %v3993
      %5871 = vmatpush1.bf16.msra.mxu0 %v3992
      %5872 = vmatprep.subr.bf16.mxu0 %v3997
      %5873 = vmatpush1.bf16.msra.mxu0 %v3996
      %5874 = vmatprep.subr.bf16.mxu0 %v4001
      %5875 = vmatpush1.bf16.msra.mxu0 %v4000
      %5876 = vmatprep.subr.bf16.mxu0 %v4005
      %5877 = vmatpush1.bf16.msra.mxu0 %v4004
      %5878 = vmatprep.subr.bf16.mxu0 %v4009
      %5879 = vmatpush1.bf16.msra.mxu0 %v4008
      %5880 = vmatprep.subr.bf16.mxu0 %v4013
      %5881 = vmatpush1.bf16.msra.mxu0 %v4012
      %5882 = vmatprep.subr.bf16.mxu0 %v4017
      %5883 = vmatpush1.bf16.msra.mxu0 %v4016
      %5884 = vmatprep.subr.bf16.mxu0 %v4021
      %5885 = vmatpush1.bf16.msra.mxu0 %v4020
      %5886 = vmatprep.subr.bf16.mxu0 %v4025
      %5887 = vmatpush1.bf16.msra.mxu0 %v4024
      %5888 = vmatprep.subr.bf16.mxu0 %v4029
      %5889 = vmatpush1.bf16.msra.mxu0 %v4028
      %5890 = vmatprep.subr.bf16.mxu0 %v4033
      %5891 = vmatpush1.bf16.msra.mxu0 %v4032
      %5892 = vmatprep.subr.bf16.mxu0 %v4037
      %5893 = vmatpush1.bf16.msra.mxu0 %v4036
      %5894 = vmatprep.subr.bf16.mxu0 %v4041
      %5895 = vmatpush1.bf16.msra.mxu0 %v4040
      %5896 = vmatprep.subr.bf16.mxu0 %v4045
      %5897 = vmatpush1.bf16.msra.mxu0 %v4044
      %5898 = vmatprep.mubr.bf16.mxu0 %v1135
      %5899 = vmatmul.mubr.bf16.gmra.mrb[0].mxu0 %v1134
      %v5900 = vpop.f32.mrb[0].mxu0
      %v5901 = vadd.f32 %v5858, %v5900
      %v5902 = vpop.f32.mrb[0].mxu0
      %v5903 = vadd.f32 %v5860, %v5902
      %v5904 = vpop.f32.mrb[0].mxu0
      %v5905 = vadd.f32 %v5862, %v5904
      %v5906 = vpop.f32.mrb[0].mxu0
      %v5907 = vadd.f32 %v5864, %v5906
      %5908 = vdwg.mxu0
      %5909 = vmatprep.subr.bf16.mxu0 %v4049
      %5910 = vmatpush1.bf16.msra.mxu0 %v4048
      %5911 = vmatprep.subr.bf16.mxu0 %v4053
      %5912 = vmatpush1.bf16.msra.mxu0 %v4052
      %5913 = vmatprep.subr.bf16.mxu0 %v4057
      %5914 = vmatpush1.bf16.msra.mxu0 %v4056
      %5915 = vmatprep.subr.bf16.mxu0 %v4061
      %5916 = vmatpush1.bf16.msra.mxu0 %v4060
      %5917 = vmatprep.subr.bf16.mxu0 %v4065
      %5918 = vmatpush1.bf16.msra.mxu0 %v4064
      %5919 = vmatprep.subr.bf16.mxu0 %v4069
      %5920 = vmatpush1.bf16.msra.mxu0 %v4068
      %5921 = vmatprep.subr.bf16.mxu0 %v4073
      %5922 = vmatpush1.bf16.msra.mxu0 %v4072
      %5923 = vmatprep.subr.bf16.mxu0 %v4077
      %5924 = vmatpush1.bf16.msra.mxu0 %v4076
      %5925 = vmatprep.subr.bf16.mxu0 %v4081
      %5926 = vmatpush1.bf16.msra.mxu0 %v4080
      %5927 = vmatprep.subr.bf16.mxu0 %v4085
      %5928 = vmatpush1.bf16.msra.mxu0 %v4084
      %5929 = vmatprep.subr.bf16.mxu0 %v4089
      %5930 = vmatpush1.bf16.msra.mxu0 %v4088
      %5931 = vmatprep.subr.bf16.mxu0 %v4093
      %5932 = vmatpush1.bf16.msra.mxu0 %v4092
      %5933 = vmatprep.subr.bf16.mxu0 %v4097
      %5934 = vmatpush1.bf16.msra.mxu0 %v4096
      %5935 = vmatprep.subr.bf16.mxu0 %v4101
      %5936 = vmatpush1.bf16.msra.mxu0 %v4100
      %5937 = vmatprep.subr.bf16.mxu0 %v4105
      %5938 = vmatpush1.bf16.msra.mxu0 %v4104
      %5939 = vmatprep.subr.bf16.mxu0 %v4109
      %5940 = vmatpush1.bf16.msra.mxu0 %v4108
      %5941 = vmatprep.mubr.bf16.mxu0 %v1137
      %5942 = vmatmul.mubr.bf16.gmra.mrb[0].mxu0 %v1136
      %v5943 = vpop.f32.mrb[0].mxu0
      %v5944 = vadd.f32 %v5901, %v5943
      %v5945 = vpop.f32.mrb[0].mxu0
      %v5946 = vadd.f32 %v5903, %v5945
      %v5947 = vpop.f32.mrb[0].mxu0
      %v5948 = vadd.f32 %v5905, %v5947
      %v5949 = vpop.f32.mrb[0].mxu0
      %v5950 = vadd.f32 %v5907, %v5949
      %5951 = vdwg.mxu0
      %5952 = vmatprep.subr.bf16.mxu0 %v4113
      %5953 = vmatpush1.bf16.msra.mxu0 %v4112
      %5954 = vmatprep.subr.bf16.mxu0 %v4117
      %5955 = vmatpush1.bf16.msra.mxu0 %v4116
      %5956 = vmatprep.subr.bf16.mxu0 %v4121
      %5957 = vmatpush1.bf16.msra.mxu0 %v4120
      %5958 = vmatprep.subr.bf16.mxu0 %v4125
      %5959 = vmatpush1.bf16.msra.mxu0 %v4124
      %5960 = vmatprep.subr.bf16.mxu0 %v4129
      %5961 = vmatpush1.bf16.msra.mxu0 %v4128
      %5962 = vmatprep.subr.bf16.mxu0 %v4133
      %5963 = vmatpush1.bf16.msra.mxu0 %v4132
      %5964 = vmatprep.subr.bf16.mxu0 %v4137
      %5965 = vmatpush1.bf16.msra.mxu0 %v4136
      %5966 = vmatprep.subr.bf16.mxu0 %v4141
      %5967 = vmatpush1.bf16.msra.mxu0 %v4140
      %5968 = vmatprep.subr.bf16.mxu0 %v4145
      %5969 = vmatpush1.bf16.msra.mxu0 %v4144
      %5970 = vmatprep.subr.bf16.mxu0 %v4149
      %5971 = vmatpush1.bf16.msra.mxu0 %v4148
      %5972 = vmatprep.subr.bf16.mxu0 %v4153
      %5973 = vmatpush1.bf16.msra.mxu0 %v4152
      %5974 = vmatprep.subr.bf16.mxu0 %v4157
      %5975 = vmatpush1.bf16.msra.mxu0 %v4156
      %5976 = vmatprep.subr.bf16.mxu0 %v4161
      %5977 = vmatpush1.bf16.msra.mxu0 %v4160
      %5978 = vmatprep.subr.bf16.mxu0 %v4165
      %5979 = vmatpush1.bf16.msra.mxu0 %v4164
      %5980 = vmatprep.subr.bf16.mxu0 %v4169
      %5981 = vmatpush1.bf16.msra.mxu0 %v4168
      %5982 = vmatprep.subr.bf16.mxu0 %v4173
      %5983 = vmatpush1.bf16.msra.mxu0 %v4172
      %5984 = vmatprep.mubr.bf16.mxu0 %v1139
      %5985 = vmatmul.mubr.bf16.gmra.mrb[0].mxu0 %v1138
      %v5986 = vpop.f32.mrb[0].mxu0
      %v5987 = vadd.f32 %v5944, %v5986
      %v5988 = vpop.f32.mrb[0].mxu0
      %v5989 = vadd.f32 %v5946, %v5988
      %v5990 = vpop.f32.mrb[0].mxu0
      %v5991 = vadd.f32 %v5948, %v5990
      %v5992 = vpop.f32.mrb[0].mxu0
      %v5993 = vadd.f32 %v5950, %v5992
      %5994 = vdwg.mxu0
      %5995 = vmatprep.subr.bf16.mxu0 %v4177
      %5996 = vmatpush1.bf16.msra.mxu0 %v4176
      %5997 = vmatprep.subr.bf16.mxu0 %v4181
      %5998 = vmatpush1.bf16.msra.mxu0 %v4180
      %5999 = vmatprep.subr.bf16.mxu0 %v4185
      %6000 = vmatpush1.bf16.msra.mxu0 %v4184
      %6001 = vmatprep.subr.bf16.mxu0 %v4189
      %6002 = vmatpush1.bf16.msra.mxu0 %v4188
      %6003 = vmatprep.subr.bf16.mxu0 %v4193
      %6004 = vmatpush1.bf16.msra.mxu0 %v4192
      %6005 = vmatprep.subr.bf16.mxu0 %v4197
      %6006 = vmatpush1.bf16.msra.mxu0 %v4196
      %6007 = vmatprep.subr.bf16.mxu0 %v4201
      %6008 = vmatpush1.bf16.msra.mxu0 %v4200
      %6009 = vmatprep.subr.bf16.mxu0 %v4205
      %6010 = vmatpush1.bf16.msra.mxu0 %v4204
      %6011 = vmatprep.subr.bf16.mxu0 %v4209
      %6012 = vmatpush1.bf16.msra.mxu0 %v4208
      %6013 = vmatprep.subr.bf16.mxu0 %v4213
      %6014 = vmatpush1.bf16.msra.mxu0 %v4212
      %6015 = vmatprep.subr.bf16.mxu0 %v4217
      %6016 = vmatpush1.bf16.msra.mxu0 %v4216
      %6017 = vmatprep.subr.bf16.mxu0 %v4221
      %6018 = vmatpush1.bf16.msra.mxu0 %v4220
      %6019 = vmatprep.subr.bf16.mxu0 %v4225
      %6020 = vmatpush1.bf16.msra.mxu0 %v4224
      %6021 = vmatprep.subr.bf16.mxu0 %v4229
      %6022 = vmatpush1.bf16.msra.mxu0 %v4228
      %6023 = vmatprep.subr.bf16.mxu0 %v4233
      %6024 = vmatpush1.bf16.msra.mxu0 %v4232
      %6025 = vmatprep.subr.bf16.mxu0 %v4237
      %6026 = vmatpush1.bf16.msra.mxu0 %v4236
      %6027 = vmatprep.mubr.bf16.mxu0 %v1141
      %6028 = vmatmul.mubr.bf16.gmra.mrb[0].mxu0 %v1140
      %v6029 = vpop.f32.mrb[0].mxu0
      %v6030 = vadd.f32 %v5987, %v6029
      %v6031 = vpop.f32.mrb[0].mxu0
      %v6032 = vadd.f32 %v5989, %v6031
      %v6033 = vpop.f32.mrb[0].mxu0
      %v6034 = vadd.f32 %v5991, %v6033
      %v6035 = vpop.f32.mrb[0].mxu0
      %v6036 = vadd.f32 %v5993, %v6035
      %6037 = vdwg.mxu0
      %v6038 = vpack.c.bf16 %v5518, %v5514
      %v6039 = vpack.c.bf16 %v5520, %v5516
      %v6040 = vpack.c.bf16 %v6034, %v6030
      %v6041 = vpack.c.bf16 %v6036, %v6032
      %v6042 = vld [vmem:[%s3] sm:$0xf]
      %v6043 = vld [vmem:[%s3 + $0x4] sm:$0xf]
      %v6044 = vld [vmem:[%s3 + $0x8] sm:$0xf]
      %v6045 = vld [vmem:[%s3 + $0xc] sm:$0xf]
      %v6046 = vld [vmem:[%s3 + $0x10] sm:$0xf]
      %v6047 = vld [vmem:[%s3 + $0x14] sm:$0xf]
      %v6048 = vld [vmem:[%s3 + $0x18] sm:$0xf]
      %v6049 = vld [vmem:[%s3 + $0x1c] sm:$0xf]
      %v6050 = vld [vmem:[%s3 + $0x20] sm:$0xf]
      %v6051 = vld [vmem:[%s3 + $0x24] sm:$0xf]
      %v6052 = vld [vmem:[%s3 + $0x28] sm:$0xf]
      %v6053 = vld [vmem:[%s3 + $0x2c] sm:$0xf]
      %v6054 = vld [vmem:[%s3 + $0x30] sm:$0xf]
      %v6055 = vld [vmem:[%s3 + $0x34] sm:$0xf]
      %v6056 = vld [vmem:[%s3 + $0x38] sm:$0xf]
      %v6057 = vld [vmem:[%s3 + $0x3c] sm:$0xf]
      %v6058 = vld [vmem:[%s3 + $0x40] sm:$0xf]
      %v6059 = vld [vmem:[%s3 + $0x44] sm:$0xf]
      %v6060 = vld [vmem:[%s3 + $0x48] sm:$0xf]
      %v6061 = vld [vmem:[%s3 + $0x4c] sm:$0xf]
      %v6062 = vld [vmem:[%s3 + $0x50] sm:$0xf]
      %v6063 = vld [vmem:[%s3 + $0x54] sm:$0xf]
      %v6064 = vld [vmem:[%s3 + $0x58] sm:$0xf]
      %v6065 = vld [vmem:[%s3 + $0x5c] sm:$0xf]
      %v6066 = vld [vmem:[%s3 + $0x60] sm:$0xf]
      %v6067 = vld [vmem:[%s3 + $0x64] sm:$0xf]
      %v6068 = vld [vmem:[%s3 + $0x68] sm:$0xf]
      %v6069 = vld [vmem:[%s3 + $0x6c] sm:$0xf]
      %v6070 = vld [vmem:[%s3 + $0x70] sm:$0xf]
      %v6071 = vld [vmem:[%s3 + $0x74] sm:$0xf]
      %v6072 = vld [vmem:[%s3 + $0x78] sm:$0xf]
      %v6073 = vld [vmem:[%s3 + $0x7c] sm:$0xf]
      %v6074 = vld [vmem:[%s3 + $0x80] sm:$0xf]
      %v6075 = vld [vmem:[%s3 + $0x84] sm:$0xf]
      %v6076 = vld [vmem:[%s3 + $0x88] sm:$0xf]
      %v6077 = vld [vmem:[%s3 + $0x8c] sm:$0xf]
      %v6078 = vld [vmem:[%s3 + $0x90] sm:$0xf]
      %v6079 = vld [vmem:[%s3 + $0x94] sm:$0xf]
      %v6080 = vld [vmem:[%s3 + $0x98] sm:$0xf]
      %v6081 = vld [vmem:[%s3 + $0x9c] sm:$0xf]
      %v6082 = vld [vmem:[%s3 + $0xa0] sm:$0xf]
      %v6083 = vld [vmem:[%s3 + $0xa4] sm:$0xf]
      %v6084 = vld [vmem:[%s3 + $0xa8] sm:$0xf]
      %v6085 = vld [vmem:[%s3 + $0xac] sm:$0xf]
      %v6086 = vld [vmem:[%s3 + $0xb0] sm:$0xf]
      %v6087 = vld [vmem:[%s3 + $0xb4] sm:$0xf]
      %v6088 = vld [vmem:[%s3 + $0xb8] sm:$0xf]
      %v6089 = vld [vmem:[%s3 + $0xbc] sm:$0xf]
      %v6090 = vld [vmem:[%s3 + $0xc0] sm:$0xf]
      %v6091 = vld [vmem:[%s3 + $0xc4] sm:$0xf]
      %v6092 = vld [vmem:[%s3 + $0xc8] sm:$0xf]
      %v6093 = vld [vmem:[%s3 + $0xcc] sm:$0xf]
      %v6094 = vld [vmem:[%s3 + $0xd0] sm:$0xf]
      %v6095 = vld [vmem:[%s3 + $0xd4] sm:$0xf]
      %v6096 = vld [vmem:[%s3 + $0xd8] sm:$0xf]
      %v6097 = vld [vmem:[%s3 + $0xdc] sm:$0xf]
      %v6098 = vld [vmem:[%s3 + $0xe0] sm:$0xf]
      %v6099 = vld [vmem:[%s3 + $0xe4] sm:$0xf]
      %v6100 = vld [vmem:[%s3 + $0xe8] sm:$0xf]
      %v6101 = vld [vmem:[%s3 + $0xec] sm:$0xf]
      %v6102 = vld [vmem:[%s3 + $0xf0] sm:$0xf]
      %v6103 = vld [vmem:[%s3 + $0xf4] sm:$0xf]
      %v6104 = vld [vmem:[%s3 + $0xf8] sm:$0xf]
      %v6105 = vld [vmem:[%s3 + $0xfc] sm:$0xf]
      %v6106 = vld [vmem:[%s4] sm:$0x1]
      %v6108 = vlaneseq
      %v6109 = vshrl.u32 %v6108, 7
      %v6110 = vsub.s32 0, %v6109
      %v6111 = vrot.slane %v6106, %v6110
      %v6177 = vunpack.c.l.b16 %v6042
      %v6178 = vunpack.c.l.b16 %v6043
      %v6179 = vunpack.c.l.b16 %v6044
      %v6180 = vunpack.c.l.b16 %v6045
      %v6181 = vunpack.c.l.b16 %v6046
      %v6182 = vunpack.c.l.b16 %v6047
      %v6183 = vunpack.c.l.b16 %v6048
      %v6184 = vunpack.c.l.b16 %v6049
      %v6185 = vunpack.c.l.b16 %v6050
      %v6186 = vunpack.c.l.b16 %v6051
      %v6187 = vunpack.c.l.b16 %v6052
      %v6188 = vunpack.c.l.b16 %v6053
      %v6189 = vunpack.c.l.b16 %v6054
      %v6190 = vunpack.c.l.b16 %v6055
      %v6191 = vunpack.c.l.b16 %v6056
      %v6192 = vunpack.c.l.b16 %v6057
      %v6193 = vunpack.c.l.b16 %v6058
      %v6194 = vunpack.c.l.b16 %v6059
      %v6195 = vunpack.c.l.b16 %v6060
      %v6196 = vunpack.c.l.b16 %v6061
      %v6197 = vunpack.c.l.b16 %v6062
      %v6198 = vunpack.c.l.b16 %v6063
      %v6199 = vunpack.c.l.b16 %v6064
      %v6200 = vunpack.c.l.b16 %v6065
      %v6201 = vunpack.c.l.b16 %v6066
      %v6202 = vunpack.c.l.b16 %v6067
      %v6203 = vunpack.c.l.b16 %v6068
      %v6204 = vunpack.c.l.b16 %v6069
      %v6205 = vunpack.c.l.b16 %v6070
      %v6206 = vunpack.c.l.b16 %v6071
      %v6207 = vunpack.c.l.b16 %v6072
      %v6208 = vunpack.c.l.b16 %v6073
      %v6209 = vunpack.c.l.b16 %v6074
      %v6210 = vunpack.c.l.b16 %v6075
      %v6211 = vunpack.c.l.b16 %v6076
      %v6212 = vunpack.c.l.b16 %v6077
      %v6213 = vunpack.c.l.b16 %v6078
      %v6214 = vunpack.c.l.b16 %v6079
      %v6215 = vunpack.c.l.b16 %v6080
      %v6216 = vunpack.c.l.b16 %v6081
      %v6217 = vunpack.c.l.b16 %v6082
      %v6218 = vunpack.c.l.b16 %v6083
      %v6219 = vunpack.c.l.b16 %v6084
      %v6220 = vunpack.c.l.b16 %v6085
      %v6221 = vunpack.c.l.b16 %v6086
      %v6222 = vunpack.c.l.b16 %v6087
      %v6223 = vunpack.c.l.b16 %v6088
      %v6224 = vunpack.c.l.b16 %v6089
      %v6225 = vunpack.c.l.b16 %v6090
      %v6226 = vunpack.c.l.b16 %v6091
      %v6227 = vunpack.c.l.b16 %v6092
      %v6228 = vunpack.c.l.b16 %v6093
      %v6229 = vunpack.c.l.b16 %v6094
      %v6230 = vunpack.c.l.b16 %v6095
      %v6231 = vunpack.c.l.b16 %v6096
      %v6232 = vunpack.c.l.b16 %v6097
      %v6233 = vunpack.c.l.b16 %v6098
      %v6234 = vunpack.c.l.b16 %v6099
      %v6235 = vunpack.c.l.b16 %v6100
      %v6236 = vunpack.c.l.b16 %v6101
      %v6237 = vunpack.c.l.b16 %v6102
      %v6238 = vunpack.c.l.b16 %v6103
      %v6239 = vunpack.c.l.b16 %v6104
      %v6240 = vunpack.c.l.b16 %v6105
      %v6241 = vpack.c.b16 %v6178, %v6177
      %v6242 = vpack.c.b16 %v6180, %v6179
      %v6243 = vpack.c.b16 %v6182, %v6181
      %v6244 = vpack.c.b16 %v6184, %v6183
      %v6245 = vpack.c.b16 %v6186, %v6185
      %v6246 = vpack.c.b16 %v6188, %v6187
      %v6247 = vpack.c.b16 %v6190, %v6189
      %v6248 = vpack.c.b16 %v6192, %v6191
      %v6249 = vpack.c.b16 %v6194, %v6193
      %v6250 = vpack.c.b16 %v6196, %v6195
      %v6251 = vpack.c.b16 %v6198, %v6197
      %v6252 = vpack.c.b16 %v6200, %v6199
      %v6253 = vpack.c.b16 %v6202, %v6201
      %v6254 = vpack.c.b16 %v6204, %v6203
      %v6255 = vpack.c.b16 %v6206, %v6205
      %v6256 = vpack.c.b16 %v6208, %v6207
      %v6257 = vpack.c.b16 %v6210, %v6209
      %v6258 = vpack.c.b16 %v6212, %v6211
      %v6259 = vpack.c.b16 %v6214, %v6213
      %v6260 = vpack.c.b16 %v6216, %v6215
      %v6261 = vpack.c.b16 %v6218, %v6217
      %v6262 = vpack.c.b16 %v6220, %v6219
      %v6263 = vpack.c.b16 %v6222, %v6221
      %v6264 = vpack.c.b16 %v6224, %v6223
      %v6265 = vpack.c.b16 %v6226, %v6225
      %v6266 = vpack.c.b16 %v6228, %v6227
      %v6267 = vpack.c.b16 %v6230, %v6229
      %v6268 = vpack.c.b16 %v6232, %v6231
      %v6269 = vpack.c.b16 %v6234, %v6233
      %v6270 = vpack.c.b16 %v6236, %v6235
      %v6271 = vpack.c.b16 %v6238, %v6237
      %v6272 = vpack.c.b16 %v6240, %v6239
      %6305 = vmatprep.subr.bf16.mxu0 0
      %6306 = vmatpush1.bf16.msra.mxu0 %v6241
      %6307 = vmatprep.subr.bf16.mxu0 0
      %6308 = vmatpush1.bf16.msra.mxu0 %v6242
      %6309 = vmatprep.subr.bf16.mxu0 0
      %6310 = vmatpush1.bf16.msra.mxu0 %v6243
      %6311 = vmatprep.subr.bf16.mxu0 0
      %6312 = vmatpush1.bf16.msra.mxu0 %v6244
      %6313 = vmatprep.subr.bf16.mxu0 0
      %6314 = vmatpush1.bf16.msra.mxu0 %v6245
      %6315 = vmatprep.subr.bf16.mxu0 0
      %6316 = vmatpush1.bf16.msra.mxu0 %v6246
      %6317 = vmatprep.subr.bf16.mxu0 0
      %6318 = vmatpush1.bf16.msra.mxu0 %v6247
      %6319 = vmatprep.subr.bf16.mxu0 0
      %6320 = vmatpush1.bf16.msra.mxu0 %v6248
      %6321 = vmatprep.subr.bf16.mxu0 0
      %6322 = vmatpush1.bf16.msra.mxu0 %v6249
      %6323 = vmatprep.subr.bf16.mxu0 0
      %6324 = vmatpush1.bf16.msra.mxu0 %v6250
      %6325 = vmatprep.subr.bf16.mxu0 0
      %6326 = vmatpush1.bf16.msra.mxu0 %v6251
      %6327 = vmatprep.subr.bf16.mxu0 0
      %6328 = vmatpush1.bf16.msra.mxu0 %v6252
      %6329 = vmatprep.subr.bf16.mxu0 0
      %6330 = vmatpush1.bf16.msra.mxu0 %v6253
      %6331 = vmatprep.subr.bf16.mxu0 0
      %6332 = vmatpush1.bf16.msra.mxu0 %v6254
      %6333 = vmatprep.subr.bf16.mxu0 0
      %6334 = vmatpush1.bf16.msra.mxu0 %v6255
      %6335 = vmatprep.subr.bf16.mxu0 0
      %6336 = vmatpush1.bf16.msra.mxu0 %v6256
      %6337 = vmatprep.mubr.bf16.mxu0 %v6039
      %6338 = vmatmul.mubr.bf16.gmra.mrb[0].mxu0 %v6038
      %v6339 = vpop.f32.mrb[0].mxu0
      %v6340 = vadd.f32 %v6111, %v6339
      %v6341 = vpop.f32.mrb[0].mxu0
      %v6342 = vpop.f32.mrb[0].mxu0
      %v6343 = vadd.f32 %v6111, %v6342
      %v6344 = vpop.f32.mrb[0].mxu0
      %6345 = vdwg.mxu0
      %6346 = vmatprep.subr.bf16.mxu0 0
      %6347 = vmatpush1.bf16.msra.mxu0 %v6257
      %6348 = vmatprep.subr.bf16.mxu0 0
      %6349 = vmatpush1.bf16.msra.mxu0 %v6258
      %6350 = vmatprep.subr.bf16.mxu0 0
      %6351 = vmatpush1.bf16.msra.mxu0 %v6259
      %6352 = vmatprep.subr.bf16.mxu0 0
      %6353 = vmatpush1.bf16.msra.mxu0 %v6260
      %6354 = vmatprep.subr.bf16.mxu0 0
      %6355 = vmatpush1.bf16.msra.mxu0 %v6261
      %6356 = vmatprep.subr.bf16.mxu0 0
      %6357 = vmatpush1.bf16.msra.mxu0 %v6262
      %6358 = vmatprep.subr.bf16.mxu0 0
      %6359 = vmatpush1.bf16.msra.mxu0 %v6263
      %6360 = vmatprep.subr.bf16.mxu0 0
      %6361 = vmatpush1.bf16.msra.mxu0 %v6264
      %6362 = vmatprep.subr.bf16.mxu0 0
      %6363 = vmatpush1.bf16.msra.mxu0 %v6265
      %6364 = vmatprep.subr.bf16.mxu0 0
      %6365 = vmatpush1.bf16.msra.mxu0 %v6266
      %6366 = vmatprep.subr.bf16.mxu0 0
      %6367 = vmatpush1.bf16.msra.mxu0 %v6267
      %6368 = vmatprep.subr.bf16.mxu0 0
      %6369 = vmatpush1.bf16.msra.mxu0 %v6268
      %6370 = vmatprep.subr.bf16.mxu0 0
      %6371 = vmatpush1.bf16.msra.mxu0 %v6269
      %6372 = vmatprep.subr.bf16.mxu0 0
      %6373 = vmatpush1.bf16.msra.mxu0 %v6270
      %6374 = vmatprep.subr.bf16.mxu0 0
      %6375 = vmatpush1.bf16.msra.mxu0 %v6271
      %6376 = vmatprep.subr.bf16.mxu0 0
      %6377 = vmatpush1.bf16.msra.mxu0 %v6272
      %6378 = vmatprep.mubr.bf16.mxu0 %v6041
      %6379 = vmatmul.mubr.bf16.gmra.mrb[0].mxu0 %v6040
      %v6380 = vpop.f32.mrb[0].mxu0
      %v6381 = vadd.f32 %v6340, %v6380
      %v6382 = vpop.f32.mrb[0].mxu0
      %v6383 = vpop.f32.mrb[0].mxu0
      %v6384 = vadd.f32 %v6343, %v6383
      %v6385 = vpop.f32.mrb[0].mxu0
      %6386 = vdwg.mxu0
      %v6387 = vpack.c.bf16 %v6384, %v6381
      %v6389 = vunpack.c.l.b16 %v6387
      %v6390 = vunpack.c.h.b16 %v6387
      %v6391 = vpack.c.b16 %v6389, %v6389
      %v6392 = vpack.c.b16 %v6390, %v6390
      %6395 = vst [vmem:[%s229] sm:$0xf] %v6391
      %6396 = vst [vmem:[%s229 + $0x4] sm:$0xf] %v6392
      %s6397 = smul.u32 2, %s16
      %p6398 = scmp.lt.s32.totalorder %s6397, 3
      %s6399 = scalar_select %p6398, %s6397, 3
      %s6400 = smul.addr %s6399, 4
      %s6401 = scalar_lea.vmem %s5, %s6400
      // Predicated region
      $region41: #{fomo_forward.1} parent=39 // pred_check
        %p6402 = pneg %p144
      $region42: #{fomo_forward.1} parent=39 // pred_check_branch
        %6404 = sbr.rel (%p6402) target = $region44
      $region43: #{fomo_forward.1} parent=39 // pred_region
        %s6405 = smul.u32 2, %s16
      $region44: #{fomo_forward.1} parent=39 // pred_fallthru
        _
    $region40: #{fomo_forward.1} parent=5 // pred_fallthru
      _
    %p6406 = scmp.le.s32.totalorder 2, %s11
    // Predicated region
    $region45: #{fomo_forward.1} parent=5 // pred_check
      %p6407 = pneg %p6406
    $region46: #{fomo_forward.1} parent=5 // pred_check_branch
      %6409 = sbr.rel (%p6407) target = $region48
    $region47: #{fomo_forward.1} parent=5 // pred_region
      %s6410 = ssub.s32 %s11, 2
      // Predicated region
      $region49: #{fomo_forward.1} parent=47 // pred_check
        %p6411 = pneg %p150
      $region50: #{fomo_forward.1} parent=47 // pred_check_branch
        %6413 = sbr.rel (%p6411) target = $region52
      $region51: #{fomo_forward.1} parent=47 // pred_region
        %s6414 = smul.u32 2, %s17
        %p6415 = scmp.lt.s32.totalorder %s6414, 3
        %s6416 = scalar_select %p6415, %s6414, 3
        %s6417 = smul.addr %s6416, 4
        %s6418 = scalar_lea.vmem %s5, %s6417
      $region52: #{fomo_forward.1} parent=47 // pred_fallthru
        _
    $region48: #{fomo_forward.1} parent=5 // pred_fallthru
      _
  $region6: #{fomo_forward.1} parent=0 // loop_footer
    %s15 = sadd.s32 1, %s11
  $region7: #{fomo_forward.1} parent=0 // loop_footer_branch
    %10 = sbr.rel target = $region3
  $region8: #{fomo_forward.1} parent=0 // loop_exit
    _

</llo_original>
